<compile_context>
chip_gen: v5e
topology: v5e:2x2
jax: 0.10.0
libtpu: 0.0.40
codegen_flags: <defaults>
</compile_context>

<pallas_src>
import functools

import jax
import jax.numpy as jnp
from jax import lax
from jax.experimental import pallas as pl
from jax.experimental.pallas import tpu as pltpu


# -----------------------------------------------------------------------------
# Fused kernel: grid = (phase, image-block).
#   phase 0 : conv(+bias) per image block, stats accumulation, scale/shift.
#   phase 1 : BN apply + ReLU, the only HBM write.
# -----------------------------------------------------------------------------
def _cbr_fused_kernel(x_ref, w_ref, par_ref, o_ref, y_ref, st_ref, *,
                      NB, N, H, W, C_in, C_out, K, HW, eps, negative_slope):
    phase = pl.program_id(0)
    g = pl.program_id(1)
    num_g = pl.num_programs(1)

    # ------------------------- phase 0: conv + stats -------------------------
    @pl.when(phase == 0)
    def _conv_phase():
        @pl.when(g == 0)
        def _init():
            st_ref[...] = jnp.zeros_like(st_ref)

        bias = par_ref[:, 2:3]                               # (C_out, 1) f32
        s_acc = jnp.zeros((C_out, 1), jnp.float32)
        q_acc = jnp.zeros((C_out, 1), jnp.float32)

        for i in range(NB):                                  # static unroll
            x = x_ref[i].astype(jnp.float32)                 # (C_in, H, W)

            # ReflectionPad2d(1): reflect excluding the edge row/col.
            xw = jnp.concatenate([x[:, :, 1:2], x, x[:, :, W - 2:W - 1]], axis=2)
            xp = jnp.concatenate([xw[:, 1:2, :], xw, xw[:, H - 2:H - 1, :]], axis=1)

            # im2col; row order (kh, kw, c_in) matches w_ref.
            taps = [xp[:, kh:kh + H, kw:kw + W].reshape(C_in, HW)
                    for kh in range(K) for kw in range(K)]
            patch = jnp.concatenate(taps, axis=0)            # (K*K*C_in, HW)

            # Single lane-dense MXU matmul, bf16 operands, f32 accumulate.
            y = jnp.dot(w_ref[...], patch.astype(jnp.bfloat16),
                        preferred_element_type=jnp.float32) + bias   # (C_out, HW)

            # Keep the conv activation resident in VMEM for phase 1.
            y_ref[pl.ds(g * NB + i, 1)] = y[None]
            s_acc = s_acc + jnp.sum(y, axis=1, keepdims=True)
            q_acc = q_acc + jnp.sum(y * y, axis=1, keepdims=True)

        st_ref[...] += jnp.concatenate([s_acc, q_acc], axis=1)

        # Phase boundary: fold the batch statistics into (scale, shift) in place.
        @pl.when(g == num_g - 1)
        def _finalize():
            cnt = jnp.float32(N * HW)
            mean = st_ref[:, 0:1] / cnt
            # TODO(synk): E[x^2]-E[x]^2 is cancellation-prone for large-mean
            # activations; a two-pass variance would need a third phase.
            var = jnp.maximum(st_ref[:, 1:2] / cnt - mean * mean, 0.0)
            inv_std = lax.rsqrt(var + eps)
            scale = par_ref[:, 0:1] * inv_std                # gamma * inv_std
            shift = par_ref[:, 1:2] - mean * scale           # beta - mean*scale
            st_ref[...] = jnp.concatenate([scale, shift], axis=1)

    # ------------------------- phase 1: BN + ReLU -----------------------------
    @pl.when(phase == 1)
    def _bn_relu_phase():
        scale = st_ref[:, 0:1]
        shift = st_ref[:, 1:2]
        for i in range(NB):                                  # static unroll
            y = y_ref[pl.ds(g * NB + i, 1)][0]               # (C_out, HW) f32
            z = y * scale + shift
            if negative_slope == 0.0:                        # nn.ReLU()
                o_ref[i] = jnp.maximum(z, 0.0)
            else:                                            # nn.LeakyReLU(relu)
                o_ref[i] = jnp.where(z > 0, z, negative_slope * z)


def _pick_images_per_step(N, C_in, C_out, HW):
    """Largest divisor of N (<= 8) whose per-step x+out block footprint is small."""
    budget = 2 * 1024 * 1024
    best = 1
    for nb in range(1, min(N, 8) + 1):
        if N % nb == 0 and nb * HW * (2 * C_in + 4 * C_out) <= budget:
            best = nb
    return best


def cbr2d_forward(x_nchw, weight, bias, gamma, beta, *,
                  kernel_size=3, padding=1, eps=1e-5, negative_slope=0.0):
    """CBR2d forward.  x: (N, C_in, H, W)  ->  float32 (N, C_out, H, W)."""
    assert kernel_size == 3 and padding == 1, "kernel specialized to 3x3 / pad=1"
    N, C_in, H, W = x_nchw.shape
    C_out = weight.shape[0]
    K = kernel_size
    HW = H * W

    # bf16 operands for the MXU; halves x / w HBM traffic.  Accumulate in f32.
    x_bf = x_nchw.astype(jnp.bfloat16)
    # (C_out, C_in, K, K) -> (C_out, K*K*C_in), row order (kh, kw, c_in).
    w_mat = jnp.transpose(weight, (0, 2, 3, 1)).reshape(C_out, K * K * C_in)
    w_mat = w_mat.astype(jnp.bfloat16)
    # gamma / beta / conv bias packed into one tiny f32 operand.
    params = jnp.stack([gamma, beta, bias], axis=1).astype(jnp.float32)  # (C_out, 3)

    NB = _pick_images_per_step(N, C_in, C_out, HW)
    G = N // NB

    # Conv activations stay resident in VMEM between the two phases.
    assert N * C_out * HW * 4 <= 16 * 1024 * 1024, "resident y exceeds VMEM budget"

    kern = functools.partial(
        _cbr_fused_kernel, NB=NB, N=N, H=H, W=W, C_in=C_in, C_out=C_out,
        K=K, HW=HW, eps=eps, negative_slope=negative_slope)

    out = pl.pallas_call(
        kern,
        out_shape=jax.ShapeDtypeStruct((N, C_out, HW), jnp.float32),
        grid=(2, G),                                 # (phase, image-block)
        in_specs=[
            # x is consumed only in phase 0; pin the index during phase 1 so it
            # is not re-fetched.
            pl.BlockSpec((NB, C_in, H, W), lambda p, g: (g * (1 - p), 0, 0, 0)),
            pl.BlockSpec((C_out, K * K * C_in), lambda p, g: (0, 0)),
            pl.BlockSpec((C_out, 3), lambda p, g: (0, 0)),
        ],
        # Written only in phase 1; pin the index during phase 0 so no garbage
        # write-backs are issued.
        out_specs=pl.BlockSpec((NB, C_out, HW), lambda p, g: (g * p, 0, 0)),
        scratch_shapes=[
            pltpu.VMEM((N, C_out, HW), jnp.float32),   # resident conv(+bias) output
            pltpu.VMEM((C_out, 2), jnp.float32),       # sum/sumsq -> scale/shift
        ],
        compiler_params=pltpu.CompilerParams(
            # Both axes carry cross-step state (resident y + stats) => sequential.
            dimension_semantics=("arbitrary", "arbitrary")),
    )(x_bf, w_mat, params)

    # (N, C_out, H*W) -> (N, C_out, H, W): contiguous reshape, no transpose.
    return out.reshape(N, C_out, H, W)


def _reference(x_nchw, weight, bias, gamma, beta, padding=1, eps=1e-5):
    """Pure-JAX f32 reference matching the PyTorch module semantics."""
    x = x_nchw.astype(jnp.float32)
    xp = jnp.pad(x, ((0, 0), (0, 0), (padding, padding), (padding, padding)),
                 mode='reflect')
    y = lax.conv_general_dilated(xp, weight.astype(jnp.float32), (1, 1), 'VALID',
                                 dimension_numbers=('NCHW', 'OIHW', 'NCHW'),
                                 precision=lax.Precision.HIGHEST)
    y = y + bias.reshape(1, -1, 1, 1)
    mean = jnp.mean(y, axis=(0, 2, 3), keepdims=True)
    var = jnp.mean((y - mean) ** 2, axis=(0, 2, 3), keepdims=True)   # biased
    yn = ((y - mean) * lax.rsqrt(var + eps) * gamma.reshape(1, -1, 1, 1)
          + beta.reshape(1, -1, 1, 1))
    return jnp.maximum(yn, 0.0)


if __name__ == "__main__":
    key = jax.random.PRNGKey(0)
    k_x, k_w, k_b = jax.random.split(key, 3)

    N, C_in, C_out, H, W, K = 2, 4, 8, 16, 16, 3

    x = jax.random.normal(k_x, (N, C_in, H, W), jnp.float32)
    # Deterministic synthetic parameters (shapes match nn.Conv2d / nn.BatchNorm2d).
    weight = jax.random.normal(k_w, (C_out, C_in, K, K), jnp.float32) * 0.1
    bias = jax.random.normal(k_b, (C_out,), jnp.float32) * 0.1
    gamma = jnp.ones((C_out,), jnp.float32)   # BatchNorm2d default affine init
    beta = jnp.zeros((C_out,), jnp.float32)

    fwd = jax.jit(cbr2d_forward)
    out = jax.block_until_ready(fwd(x, weight, bias, gamma, beta))

    ref = jax.block_until_ready(_reference(x, weight, bias, gamma, beta))
    assert out.shape == (N, C_out, H, W)
    max_err = float(jnp.max(jnp.abs(out - ref)))
    # bf16 MXU operands vs the f32 reference => loosened tolerance.
    assert jnp.allclose(out, ref, atol=5e-2, rtol=5e-2), max_err

    print("KERNEL_OK")
</pallas_src>

<mosaic_0001>
module attributes {stable_mosaic.version = 11 : i64} {
  func.func @_cbr_fused_kernel(%arg0: i32, %arg1: i32, %arg2: memref<2x4x16x16xbf16, #tpu.memory_space<vmem>>, %arg3: memref<8x36xbf16, #tpu.memory_space<vmem>>, %arg4: memref<8x3xf32, #tpu.memory_space<vmem>>, %arg5: memref<2x8x256xf32, #tpu.memory_space<vmem>>, %arg6: memref<2x8x256xf32, #tpu.memory_space<vmem>>, %arg7: memref<8x2xf32, #tpu.memory_space<vmem>>) attributes {dimension_semantics = [#tpu.dimension_semantics<arbitrary>, #tpu.dimension_semantics<arbitrary>], iteration_bounds = array<i64: 2, 1>, scalar_prefetch = 0 : i64, scratch_operands = 2 : i64, tpu.core_type = #tpu.core_type<tc>, window_params = [{transform_indices = @transform_0, window_bounds = array<i64: 2, 4, 16, 16>}, {pipeline_mode = #tpu.pipeline_mode<synchronous>, transform_indices = @transform_1, window_bounds = array<i64: 8, 36>}, {pipeline_mode = #tpu.pipeline_mode<synchronous>, transform_indices = @transform_2, window_bounds = array<i64: 8, 3>}, {transform_indices = @transform_3, window_bounds = array<i64: 2, 8, 256>}]} {
    %c0_i32 = arith.constant 0 : i32
    %0 = arith.cmpi eq, %arg0, %c0_i32 : i32
    %1 = arith.extui %0 : i1 to i32
    %c0_i32_0 = arith.constant 0 : i32
    %2 = arith.cmpi ne, %1, %c0_i32_0 : i32
    scf.if %2 {
      %c0_i32_2 = arith.constant 0 : i32
      %6 = arith.cmpi eq, %arg1, %c0_i32_2 : i32
      %7 = arith.extui %6 : i1 to i32
      %c0_i32_3 = arith.constant 0 : i32
      %8 = arith.cmpi ne, %7, %c0_i32_3 : i32
      scf.if %8 {
        %cst_35 = arith.constant 0.000000e+00 : f32
        %109 = vector.broadcast %cst_35 : f32 to vector<8x2xf32>
        %c0_36 = arith.constant 0 : index
        %c0_37 = arith.constant 0 : index
        %110 = vector.load %arg7[%c0_36, %c0_37] : memref<8x2xf32, #tpu.memory_space<vmem>>, vector<8x2xf32>
        tpu.vector_store %arg7[%c0_36, %c0_37], %109 {strides = array<i32>} : memref<8x2xf32, #tpu.memory_space<vmem>>, vector<8x2xf32>,
      } else {
      }
      %c0 = arith.constant 0 : index
      %c2 = arith.constant 2 : index
      %9 = vector.load %arg4[%c0, %c2] : memref<8x3xf32, #tpu.memory_space<vmem>>, vector<8x1xf32>
      %cst = arith.constant 0.000000e+00 : f32
      %10 = vector.broadcast %cst : f32 to vector<8x1xf32>
      %cst_4 = arith.constant 0.000000e+00 : f32
      %11 = vector.broadcast %cst_4 : f32 to vector<8x1xf32>
      %c0_5 = arith.constant 0 : index
      %c0_6 = arith.constant 0 : index
      %c0_7 = arith.constant 0 : index
      %c0_8 = arith.constant 0 : index
      %12 = vector.load %arg2[%c0_5, %c0_6, %c0_7, %c0_8] : memref<2x4x16x16xbf16, #tpu.memory_space<vmem>>, vector<1x4x16x16xbf16>
      %13 = vector.shape_cast %12 : vector<1x4x16x16xbf16> to vector<4x16x16xbf16>
      %14 = arith.extf %13 : vector<4x16x16xbf16> to vector<4x16x16xf32>
      %15 = vector.extract_strided_slice %14 {offsets = [0, 0, 1], sizes = [4, 16, 1], strides = [1, 1, 1]} : vector<4x16x16xf32> to vector<4x16x1xf32>
      %16 = vector.extract_strided_slice %14 {offsets = [0, 0, 14], sizes = [4, 16, 1], strides = [1, 1, 1]} : vector<4x16x16xf32> to vector<4x16x1xf32>
      %17 = tpu.concatenate %15, %14, %16 in 2 : vector<4x16x1xf32>, vector<4x16x16xf32>, vector<4x16x1xf32> -> vector<4x16x18xf32>
      %18 = vector.extract_strided_slice %17 {offsets = [0, 1, 0], sizes = [4, 1, 18], strides = [1, 1, 1]} : vector<4x16x18xf32> to vector<4x1x18xf32>
      %19 = vector.extract_strided_slice %17 {offsets = [0, 14, 0], sizes = [4, 1, 18], strides = [1, 1, 1]} : vector<4x16x18xf32> to vector<4x1x18xf32>
      %20 = tpu.concatenate %18, %17, %19 in 1 : vector<4x1x18xf32>, vector<4x16x18xf32>, vector<4x1x18xf32> -> vector<4x18x18xf32>
      %21 = vector.extract_strided_slice %20 {offsets = [0, 0, 0], sizes = [4, 16, 16], strides = [1, 1, 1]} : vector<4x18x18xf32> to vector<4x16x16xf32>
      %22 = vector.shape_cast %21 : vector<4x16x16xf32> to vector<4x256xf32>
      %23 = vector.extract_strided_slice %20 {offsets = [0, 0, 1], sizes = [4, 16, 16], strides = [1, 1, 1]} : vector<4x18x18xf32> to vector<4x16x16xf32>
      %24 = vector.shape_cast %23 : vector<4x16x16xf32> to vector<4x256xf32>
      %25 = vector.extract_strided_slice %20 {offsets = [0, 0, 2], sizes = [4, 16, 16], strides = [1, 1, 1]} : vector<4x18x18xf32> to vector<4x16x16xf32>
      %26 = vector.shape_cast %25 : vector<4x16x16xf32> to vector<4x256xf32>
      %27 = vector.extract_strided_slice %20 {offsets = [0, 1, 0], sizes = [4, 16, 16], strides = [1, 1, 1]} : vector<4x18x18xf32> to vector<4x16x16xf32>
      %28 = vector.shape_cast %27 : vector<4x16x16xf32> to vector<4x256xf32>
      %29 = vector.extract_strided_slice %20 {offsets = [0, 1, 1], sizes = [4, 16, 16], strides = [1, 1, 1]} : vector<4x18x18xf32> to vector<4x16x16xf32>
      %30 = vector.shape_cast %29 : vector<4x16x16xf32> to vector<4x256xf32>
      %31 = vector.extract_strided_slice %20 {offsets = [0, 1, 2], sizes = [4, 16, 16], strides = [1, 1, 1]} : vector<4x18x18xf32> to vector<4x16x16xf32>
      %32 = vector.shape_cast %31 : vector<4x16x16xf32> to vector<4x256xf32>
      %33 = vector.extract_strided_slice %20 {offsets = [0, 2, 0], sizes = [4, 16, 16], strides = [1, 1, 1]} : vector<4x18x18xf32> to vector<4x16x16xf32>
      %34 = vector.shape_cast %33 : vector<4x16x16xf32> to vector<4x256xf32>
      %35 = vector.extract_strided_slice %20 {offsets = [0, 2, 1], sizes = [4, 16, 16], strides = [1, 1, 1]} : vector<4x18x18xf32> to vector<4x16x16xf32>
      %36 = vector.shape_cast %35 : vector<4x16x16xf32> to vector<4x256xf32>
      %37 = vector.extract_strided_slice %20 {offsets = [0, 2, 2], sizes = [4, 16, 16], strides = [1, 1, 1]} : vector<4x18x18xf32> to vector<4x16x16xf32>
      %38 = vector.shape_cast %37 : vector<4x16x16xf32> to vector<4x256xf32>
      %39 = tpu.concatenate %22, %24, %26, %28, %30, %32, %34, %36, %38 in 0 : vector<4x256xf32>, vector<4x256xf32>, vector<4x256xf32>, vector<4x256xf32>, vector<4x256xf32>, vector<4x256xf32>, vector<4x256xf32>, vector<4x256xf32>, vector<4x256xf32> -> vector<36x256xf32>
      %c0_9 = arith.constant 0 : index
      %c0_10 = arith.constant 0 : index
      %40 = vector.load %arg3[%c0_9, %c0_10] : memref<8x36xbf16, #tpu.memory_space<vmem>>, vector<8x36xbf16>
      %41 = arith.truncf %39 : vector<36x256xf32> to vector<36x256xbf16>
      %cst_11 = arith.constant dense<0.000000e+00> : vector<8x256xf32>
      %42 = tpu.matmul %40, %41, %cst_11 {dimension_numbers = #tpu.dot_dimension_numbers<[1], [0], [0], [1], [0, 0, 1, 1], [], []>} : vector<8x36xbf16>, vector<36x256xbf16>, vector<8x256xf32> -> vector<8x256xf32>
      %43 = vector.broadcast %9 : vector<8x1xf32> to vector<8x256xf32>
      %44 = arith.addf %42, %43 : vector<8x256xf32>
      %45 = vector.shape_cast %44 : vector<8x256xf32> to vector<1x8x256xf32>
      %c2_i32 = arith.constant 2 : i32
      %46 = arith.muli %arg1, %c2_i32 : i32
      %c0_i32_12 = arith.constant 0 : i32
      %47 = arith.addi %46, %c0_i32_12 : i32
      %48 = arith.index_cast %47 : i32 to index
      %c0_13 = arith.constant 0 : index
      %c0_14 = arith.constant 0 : index
      %49 = vector.load %arg6[%48, %c0_13, %c0_14] : memref<2x8x256xf32, #tpu.memory_space<vmem>>, vector<1x8x256xf32>
      tpu.vector_store %arg6[%48, %c0_13, %c0_14], %45 {strides = array<i32>} : memref<2x8x256xf32, #tpu.memory_space<vmem>>, vector<1x8x256xf32>,
      %cst_15 = arith.constant dense<0.000000e+00> : vector<8xf32>
      %50 = vector.multi_reduction <add>, %44, %cst_15 [1] : vector<8x256xf32> to vector<8xf32>
      %51 = vector.shape_cast %50 : vector<8xf32> to vector<8x1xf32>
      %52 = arith.addf %10, %51 : vector<8x1xf32>
      %53 = arith.mulf %44, %44 : vector<8x256xf32>
      %cst_16 = arith.constant dense<0.000000e+00> : vector<8xf32>
      %54 = vector.multi_reduction <add>, %53, %cst_16 [1] : vector<8x256xf32> to vector<8xf32>
      %55 = vector.shape_cast %54 : vector<8xf32> to vector<8x1xf32>
      %56 = arith.addf %11, %55 : vector<8x1xf32>
      %c1 = arith.constant 1 : index
      %c0_17 = arith.constant 0 : index
      %c0_18 = arith.constant 0 : index
      %c0_19 = arith.constant 0 : index
      %57 = vector.load %arg2[%c1, %c0_17, %c0_18, %c0_19] : memref<2x4x16x16xbf16, #tpu.memory_space<vmem>>, vector<1x4x16x16xbf16>
      %58 = vector.shape_cast %57 : vector<1x4x16x16xbf16> to vector<4x16x16xbf16>
      %59 = arith.extf %58 : vector<4x16x16xbf16> to vector<4x16x16xf32>
      %60 = vector.extract_strided_slice %59 {offsets = [0, 0, 1], sizes = [4, 16, 1], strides = [1, 1, 1]} : vector<4x16x16xf32> to vector<4x16x1xf32>
      %61 = vector.extract_strided_slice %59 {offsets = [0, 0, 14], sizes = [4, 16, 1], strides = [1, 1, 1]} : vector<4x16x16xf32> to vector<4x16x1xf32>
      %62 = tpu.concatenate %60, %59, %61 in 2 : vector<4x16x1xf32>, vector<4x16x16xf32>, vector<4x16x1xf32> -> vector<4x16x18xf32>
      %63 = vector.extract_strided_slice %62 {offsets = [0, 1, 0], sizes = [4, 1, 18], strides = [1, 1, 1]} : vector<4x16x18xf32> to vector<4x1x18xf32>
      %64 = vector.extract_strided_slice %62 {offsets = [0, 14, 0], sizes = [4, 1, 18], strides = [1, 1, 1]} : vector<4x16x18xf32> to vector<4x1x18xf32>
      %65 = tpu.concatenate %63, %62, %64 in 1 : vector<4x1x18xf32>, vector<4x16x18xf32>, vector<4x1x18xf32> -> vector<4x18x18xf32>
      %66 = vector.extract_strided_slice %65 {offsets = [0, 0, 0], sizes = [4, 16, 16], strides = [1, 1, 1]} : vector<4x18x18xf32> to vector<4x16x16xf32>
      %67 = vector.shape_cast %66 : vector<4x16x16xf32> to vector<4x256xf32>
      %68 = vector.extract_strided_slice %65 {offsets = [0, 0, 1], sizes = [4, 16, 16], strides = [1, 1, 1]} : vector<4x18x18xf32> to vector<4x16x16xf32>
      %69 = vector.shape_cast %68 : vector<4x16x16xf32> to vector<4x256xf32>
      %70 = vector.extract_strided_slice %65 {offsets = [0, 0, 2], sizes = [4, 16, 16], strides = [1, 1, 1]} : vector<4x18x18xf32> to vector<4x16x16xf32>
      %71 = vector.shape_cast %70 : vector<4x16x16xf32> to vector<4x256xf32>
      %72 = vector.extract_strided_slice %65 {offsets = [0, 1, 0], sizes = [4, 16, 16], strides = [1, 1, 1]} : vector<4x18x18xf32> to vector<4x16x16xf32>
      %73 = vector.shape_cast %72 : vector<4x16x16xf32> to vector<4x256xf32>
      %74 = vector.extract_strided_slice %65 {offsets = [0, 1, 1], sizes = [4, 16, 16], strides = [1, 1, 1]} : vector<4x18x18xf32> to vector<4x16x16xf32>
      %75 = vector.shape_cast %74 : vector<4x16x16xf32> to vector<4x256xf32>
      %76 = vector.extract_strided_slice %65 {offsets = [0, 1, 2], sizes = [4, 16, 16], strides = [1, 1, 1]} : vector<4x18x18xf32> to vector<4x16x16xf32>
      %77 = vector.shape_cast %76 : vector<4x16x16xf32> to vector<4x256xf32>
      %78 = vector.extract_strided_slice %65 {offsets = [0, 2, 0], sizes = [4, 16, 16], strides = [1, 1, 1]} : vector<4x18x18xf32> to vector<4x16x16xf32>
      %79 = vector.shape_cast %78 : vector<4x16x16xf32> to vector<4x256xf32>
      %80 = vector.extract_strided_slice %65 {offsets = [0, 2, 1], sizes = [4, 16, 16], strides = [1, 1, 1]} : vector<4x18x18xf32> to vector<4x16x16xf32>
      %81 = vector.shape_cast %80 : vector<4x16x16xf32> to vector<4x256xf32>
      %82 = vector.extract_strided_slice %65 {offsets = [0, 2, 2], sizes = [4, 16, 16], strides = [1, 1, 1]} : vector<4x18x18xf32> to vector<4x16x16xf32>
      %83 = vector.shape_cast %82 : vector<4x16x16xf32> to vector<4x256xf32>
      %84 = tpu.concatenate %67, %69, %71, %73, %75, %77, %79, %81, %83 in 0 : vector<4x256xf32>, vector<4x256xf32>, vector<4x256xf32>, vector<4x256xf32>, vector<4x256xf32>, vector<4x256xf32>, vector<4x256xf32>, vector<4x256xf32>, vector<4x256xf32> -> vector<36x256xf32>
      %c0_20 = arith.constant 0 : index
      %c0_21 = arith.constant 0 : index
      %85 = vector.load %arg3[%c0_20, %c0_21] : memref<8x36xbf16, #tpu.memory_space<vmem>>, vector<8x36xbf16>
      %86 = arith.truncf %84 : vector<36x256xf32> to vector<36x256xbf16>
      %cst_22 = arith.constant dense<0.000000e+00> : vector<8x256xf32>
      %87 = tpu.matmul %85, %86, %cst_22 {dimension_numbers = #tpu.dot_dimension_numbers<[1], [0], [0], [1], [0, 0, 1, 1], [], []>} : vector<8x36xbf16>, vector<36x256xbf16>, vector<8x256xf32> -> vector<8x256xf32>
      %88 = vector.broadcast %9 : vector<8x1xf32> to vector<8x256xf32>
      %89 = arith.addf %87, %88 : vector<8x256xf32>
      %90 = vector.shape_cast %89 : vector<8x256xf32> to vector<1x8x256xf32>
      %c2_i32_23 = arith.constant 2 : i32
      %91 = arith.muli %arg1, %c2_i32_23 : i32
      %c1_i32_24 = arith.constant 1 : i32
      %92 = arith.addi %91, %c1_i32_24 : i32
      %93 = arith.index_cast %92 : i32 to index
      %c0_25 = arith.constant 0 : index
      %c0_26 = arith.constant 0 : index
      %94 = vector.load %arg6[%93, %c0_25, %c0_26] : memref<2x8x256xf32, #tpu.memory_space<vmem>>, vector<1x8x256xf32>
      tpu.vector_store %arg6[%93, %c0_25, %c0_26], %90 {strides = array<i32>} : memref<2x8x256xf32, #tpu.memory_space<vmem>>, vector<1x8x256xf32>,
      %cst_27 = arith.constant dense<0.000000e+00> : vector<8xf32>
      %95 = vector.multi_reduction <add>, %89, %cst_27 [1] : vector<8x256xf32> to vector<8xf32>
      %96 = vector.shape_cast %95 : vector<8xf32> to vector<8x1xf32>
      %97 = arith.addf %52, %96 : vector<8x1xf32>
      %98 = arith.mulf %89, %89 : vector<8x256xf32>
      %cst_28 = arith.constant dense<0.000000e+00> : vector<8xf32>
      %99 = vector.multi_reduction <add>, %98, %cst_28 [1] : vector<8x256xf32> to vector<8xf32>
      %100 = vector.shape_cast %99 : vector<8xf32> to vector<8x1xf32>
      %101 = arith.addf %56, %100 : vector<8x1xf32>
      %c0_29 = arith.constant 0 : index
      %c0_30 = arith.constant 0 : index
      %102 = vector.load %arg7[%c0_29, %c0_30] : memref<8x2xf32, #tpu.memory_space<vmem>>, vector<8x2xf32>
      %103 = tpu.concatenate %97, %101 in 1 : vector<8x1xf32>, vector<8x1xf32> -> vector<8x2xf32>
      %104 = arith.addf %102, %103 : vector<8x2xf32>
      %c0_31 = arith.constant 0 : index
      %c0_32 = arith.constant 0 : index
      %105 = vector.load %arg7[%c0_31, %c0_32] : memref<8x2xf32, #tpu.memory_space<vmem>>, vector<8x2xf32>
      tpu.vector_store %arg7[%c0_31, %c0_32], %104 {strides = array<i32>} : memref<8x2xf32, #tpu.memory_space<vmem>>, vector<8x2xf32>,
      %c0_i32_33 = arith.constant 0 : i32
      %106 = arith.cmpi eq, %arg1, %c0_i32_33 : i32
      %107 = arith.extui %106 : i1 to i32
      %c0_i32_34 = arith.constant 0 : i32
      %108 = arith.cmpi ne, %107, %c0_i32_34 : i32
      scf.if %108 {
        %c0_35 = arith.constant 0 : index
        %c0_36 = arith.constant 0 : index
        %109 = vector.load %arg7[%c0_35, %c0_36] : memref<8x2xf32, #tpu.memory_space<vmem>>, vector<8x1xf32>
        %cst_37 = arith.constant 5.120000e+02 : f32
        %110 = vector.broadcast %cst_37 : f32 to vector<8x1xf32>
        %111 = arith.divf %109, %110 : vector<8x1xf32>
        %c0_38 = arith.constant 0 : index
        %c1_39 = arith.constant 1 : index
        %112 = vector.load %arg7[%c0_38, %c1_39] : memref<8x2xf32, #tpu.memory_space<vmem>>, vector<8x1xf32>
        %cst_40 = arith.constant 5.120000e+02 : f32
        %113 = vector.broadcast %cst_40 : f32 to vector<8x1xf32>
        %114 = arith.divf %112, %113 : vector<8x1xf32>
        %115 = arith.mulf %111, %111 : vector<8x1xf32>
        %116 = arith.subf %114, %115 : vector<8x1xf32>
        %cst_41 = arith.constant 0.000000e+00 : f32
        %117 = vector.broadcast %cst_41 : f32 to vector<8x1xf32>
        %118 = arith.maximumf %116, %117 : vector<8x1xf32>
        %cst_42 = arith.constant 9.99999974E-6 : f32
        %119 = vector.broadcast %cst_42 : f32 to vector<8x1xf32>
        %120 = arith.addf %118, %119 : vector<8x1xf32>
        %121 = math.rsqrt %120 : vector<8x1xf32>
        %c0_43 = arith.constant 0 : index
        %c0_44 = arith.constant 0 : index
        %122 = vector.load %arg4[%c0_43, %c0_44] : memref<8x3xf32, #tpu.memory_space<vmem>>, vector<8x1xf32>
        %123 = arith.mulf %122, %121 : vector<8x1xf32>
        %c0_45 = arith.constant 0 : index
        %c1_46 = arith.constant 1 : index
        %124 = vector.load %arg4[%c0_45, %c1_46] : memref<8x3xf32, #tpu.memory_space<vmem>>, vector<8x1xf32>
        %125 = arith.mulf %111, %123 : vector<8x1xf32>
        %126 = arith.subf %124, %125 : vector<8x1xf32>
        %127 = tpu.concatenate %123, %126 in 1 : vector<8x1xf32>, vector<8x1xf32> -> vector<8x2xf32>
        %c0_47 = arith.constant 0 : index
        %c0_48 = arith.constant 0 : index
        %128 = vector.load %arg7[%c0_47, %c0_48] : memref<8x2xf32, #tpu.memory_space<vmem>>, vector<8x2xf32>
        tpu.vector_store %arg7[%c0_47, %c0_48], %127 {strides = array<i32>} : memref<8x2xf32, #tpu.memory_space<vmem>>, vector<8x2xf32>,
      } else {
      }
    } else {
    }
    %c1_i32 = arith.constant 1 : i32
    %3 = arith.cmpi eq, %arg0, %c1_i32 : i32
    %4 = arith.extui %3 : i1 to i32
    %c0_i32_1 = arith.constant 0 : i32
    %5 = arith.cmpi ne, %4, %c0_i32_1 : i32
    scf.if %5 {
      %c0 = arith.constant 0 : index
      %c0_2 = arith.constant 0 : index
      %6 = vector.load %arg7[%c0, %c0_2] : memref<8x2xf32, #tpu.memory_space<vmem>>, vector<8x1xf32>
      %c0_3 = arith.constant 0 : index
      %c1 = arith.constant 1 : index
      %7 = vector.load %arg7[%c0_3, %c1] : memref<8x2xf32, #tpu.memory_space<vmem>>, vector<8x1xf32>
      %c2_i32 = arith.constant 2 : i32
      %8 = arith.muli %arg1, %c2_i32 : i32
      %c0_i32_4 = arith.constant 0 : i32
      %9 = arith.addi %8, %c0_i32_4 : i32
      %10 = arith.index_cast %9 : i32 to index
      %c0_5 = arith.constant 0 : index
      %c0_6 = arith.constant 0 : index
      %11 = vector.load %arg6[%10, %c0_5, %c0_6] : memref<2x8x256xf32, #tpu.memory_space<vmem>>, vector<1x8x256xf32>
      %12 = vector.shape_cast %11 : vector<1x8x256xf32> to vector<8x256xf32>
      %13 = vector.broadcast %6 : vector<8x1xf32> to vector<8x256xf32>
      %14 = arith.mulf %12, %13 : vector<8x256xf32>
      %15 = vector.broadcast %7 : vector<8x1xf32> to vector<8x256xf32>
      %16 = arith.addf %14, %15 : vector<8x256xf32>
      %cst = arith.constant 0.000000e+00 : f32
      %17 = vector.broadcast %cst : f32 to vector<8x256xf32>
      %18 = arith.maximumf %16, %17 : vector<8x256xf32>
      %c0_7 = arith.constant 0 : index
      %c0_8 = arith.constant 0 : index
      %c0_9 = arith.constant 0 : index
      %19 = vector.load %arg5[%c0_7, %c0_8, %c0_9] : memref<2x8x256xf32, #tpu.memory_space<vmem>>, vector<1x8x256xf32>
      %20 = vector.shape_cast %19 : vector<1x8x256xf32> to vector<8x256xf32>
      %21 = vector.shape_cast %18 : vector<8x256xf32> to vector<1x8x256xf32>
      tpu.vector_store %arg5[%c0_7, %c0_8, %c0_9], %21 {strides = array<i32>} : memref<2x8x256xf32, #tpu.memory_space<vmem>>, vector<1x8x256xf32>,
      %c2_i32_10 = arith.constant 2 : i32
      %22 = arith.muli %arg1, %c2_i32_10 : i32
      %c1_i32_11 = arith.constant 1 : i32
      %23 = arith.addi %22, %c1_i32_11 : i32
      %24 = arith.index_cast %23 : i32 to index
      %c0_12 = arith.constant 0 : index
      %c0_13 = arith.constant 0 : index
      %25 = vector.load %arg6[%24, %c0_12, %c0_13] : memref<2x8x256xf32, #tpu.memory_space<vmem>>, vector<1x8x256xf32>
      %26 = vector.shape_cast %25 : vector<1x8x256xf32> to vector<8x256xf32>
      %27 = vector.broadcast %6 : vector<8x1xf32> to vector<8x256xf32>
      %28 = arith.mulf %26, %27 : vector<8x256xf32>
      %29 = vector.broadcast %7 : vector<8x1xf32> to vector<8x256xf32>
      %30 = arith.addf %28, %29 : vector<8x256xf32>
      %cst_14 = arith.constant 0.000000e+00 : f32
      %31 = vector.broadcast %cst_14 : f32 to vector<8x256xf32>
      %32 = arith.maximumf %30, %31 : vector<8x256xf32>
      %c1_15 = arith.constant 1 : index
      %c0_16 = arith.constant 0 : index
      %c0_17 = arith.constant 0 : index
      %33 = vector.load %arg5[%c1_15, %c0_16, %c0_17] : memref<2x8x256xf32, #tpu.memory_space<vmem>>, vector<1x8x256xf32>
      %34 = vector.shape_cast %33 : vector<1x8x256xf32> to vector<8x256xf32>
      %35 = vector.shape_cast %32 : vector<8x256xf32> to vector<1x8x256xf32>
      tpu.vector_store %arg5[%c1_15, %c0_16, %c0_17], %35 {strides = array<i32>} : memref<2x8x256xf32, #tpu.memory_space<vmem>>, vector<1x8x256xf32>,
    } else {
    }
    return
  }
  func.func @transform_0(%arg0: i32, %arg1: i32) -> (i32, i32, i32, i32) {
    %c1_i32 = arith.constant 1 : i32
    %0 = arith.subi %c1_i32, %arg0 : i32
    %1 = arith.muli %arg1, %0 : i32
    %c0_i32 = arith.constant 0 : i32
    %c0_i32_0 = arith.constant 0 : i32
    %c0_i32_1 = arith.constant 0 : i32
    %c0_i32_2 = arith.constant 0 : i32
    return %1, %c0_i32, %c0_i32_0, %c0_i32_1 : i32, i32, i32, i32
  }
  func.func @transform_1(%arg0: i32, %arg1: i32) -> (i32, i32) {
    %c0_i32 = arith.constant 0 : i32
    %c0_i32_0 = arith.constant 0 : i32
    %c0_i32_1 = arith.constant 0 : i32
    return %c0_i32, %c0_i32_0 : i32, i32
  }
  func.func @transform_2(%arg0: i32, %arg1: i32) -> (i32, i32) {
    %c0_i32 = arith.constant 0 : i32
    %c0_i32_0 = arith.constant 0 : i32
    %c0_i32_1 = arith.constant 0 : i32
    return %c0_i32, %c0_i32_0 : i32, i32
  }
  func.func @transform_3(%arg0: i32, %arg1: i32) -> (i32, i32, i32) {
    %0 = arith.muli %arg1, %arg0 : i32
    %c0_i32 = arith.constant 0 : i32
    %c0_i32_0 = arith.constant 0 : i32
    %c0_i32_1 = arith.constant 0 : i32
    return %0, %c0_i32, %c0_i32_0 : i32, i32, i32
  }
}

</mosaic_0001>

<llo_original>
// kernel: cbr2d_forward.1
$region0: #{cbr2d_forward.1}
  #allocation0 [shape = 'u32[]', space=smem, size = 0x4, offset = 0x4, fixed_abs, tag = 'smem constant byte address 0x4 - core index']
  #allocation1 [shape = 'u32[72,128]{1,0:T(1,128)}', space=vmem, size = 0x9000, scoped, tag = 'internal scratch']
  #allocation2 [shape = 'f32[2,8,256]{2,1,0:T(8,128)}', space=vmem, size = 0x4000, scoped, tag = 'scratch operand']
  #allocation3 [shape = 'f32[8,2]{1,0:T(8,128)}', space=vmem, size = 0x1000, scoped, tag = 'scratch operand']
  %s0 = inlined_call_operand.vmem [shape: bf16[2,4,16,16], index: 0, kind: input, shape index: {}]
  %s1 = inlined_call_operand.vmem [shape: bf16[8,36], index: 1, kind: input, shape index: {}]
  %s2 = inlined_call_operand.vmem [shape: f32[8,3], index: 2, kind: input, shape index: {}]
  %s3 = inlined_call_operand.vmem [shape: f32[2,8,256], index: 3, kind: output, shape index: {}]
  %s4 = sld [smem:[#allocation0]]
  $region61: #{cbr2d_forward.1} parent=0
    _
  %s6 = ssub.s32 1, %s4
  %s7 = scalar_select 0, %s6, %s4
  loop: start=0, step=1, limit=4
  $region2: #{cbr2d_forward.1} parent=0 // loop_pre_header
    _
  $region3: #{cbr2d_forward.1} parent=0 // loop_header
    %s9 = sphi 0, %s13
    %p10 = scmp.ge.s32.totalorder %s9, 4
    %s16 = sphi 0, %s28
    %s17 = sphi 0, %s24
    %s18 = sphi 0, %s16
    %s19 = sphi 0, %s17
    %s20 = sphi 0, %s18
    %s21 = sphi 0, %s19
    %s35 = sphi 0, %s37
    %s38 = sphi 0, %s35
    %s39 = sphi 0, %s38
    %s55 = sphi 0, %s39
    %s59 = sphi 0, %s59
    %s61 = sphi 0, %s59
    %s62 = sphi 0, %s61
    %s76 = sphi 0, %s62
    %s80 = sphi 0, %s80
    %s82 = sphi 0, %s80
    %s83 = sphi 0, %s82
    %s97 = sphi 0, %s83
    %s105 = sphi 0, %s107
    %s108 = sphi 0, %s105
    %s109 = sphi 0, %s108
    %s125 = sphi 0, %s109
  $region4: #{cbr2d_forward.1} parent=0 // loop_header_branch
    %12 = sbr.rel (%p10) target = $region8
  $region5: #{cbr2d_forward.1} parent=0 // loop_body
    %s14 = ssub.s32 %s9, 1
    %s15 = ssub.s32 %s9, 2
    %s22 = sadd.s32 1, %s17
    %p23 = scmp.ge.s32.totalorder %s22, 1
    %s24 = scalar_select %p23, 0, %s22
    %s25 = sadd.s32 1, %s16
    %s26 = scalar_select %p23, %s25, %s16
    %p27 = scmp.ge.s32.totalorder %s26, 2
    %s28 = scalar_select %p27, 0, %s26
    %s29 = ssub.s32 1, %s16
    %s30 = smul.u32 %s17, %s29
    %s31 = ssub.s32 1, %s28
    %s32 = smul.u32 %s24, %s31
    %s33 = ssub.s32 %s30, %s32
    %p34 = scmp.eq.s32.totalorder %s33, 0
    %s36 = sadd.s32 %s35, 1
    %s37 = scalar_select %p34, %s35, %s36
    %p40 = pneg %p34
    %p41 = scmp.eq.s32.totalorder %s9, 1
    %p42 = por %p40, %p41
    %p43 = scmp.ne.s32.totalorder %s35, %s38
    %p44 = scmp.eq.s32.totalorder %s9, 0
    %p45 = por %p43, %p44
    %p46 = scmp.ne.s32.totalorder %s35, %s38
    %p47 = scmp.eq.s32.totalorder %s14, 1
    %p48 = por %p46, %p47
    %p49 = scmp.ne.s32.totalorder %s38, %s39
    %p50 = scmp.eq.s32.totalorder %s14, 0
    %p51 = por %p49, %p50
    %p52 = scmp.ne.s32.totalorder %s38, %s39
    %p53 = scmp.eq.s32.totalorder %s15, 1
    %p54 = por %p52, %p53
    %p56 = scmp.ne.s32.totalorder %s39, %s55
    %p57 = scmp.eq.s32.totalorder %s15, 0
    %p58 = por %p56, %p57
    %s60 = sadd.s32 %s59, 1
    %p63 = scmp.eq.s32.totalorder %s9, 1
    %p64 = scmp.ne.s32.totalorder %s59, %s61
    %p65 = scmp.eq.s32.totalorder %s9, 0
    %p66 = por %p64, %p65
    %p67 = scmp.ne.s32.totalorder %s59, %s61
    %p68 = scmp.eq.s32.totalorder %s14, 1
    %p69 = por %p67, %p68
    %p70 = scmp.ne.s32.totalorder %s61, %s62
    %p71 = scmp.eq.s32.totalorder %s14, 0
    %p72 = por %p70, %p71
    %p73 = scmp.ne.s32.totalorder %s61, %s62
    %p74 = scmp.eq.s32.totalorder %s15, 1
    %p75 = por %p73, %p74
    %p77 = scmp.ne.s32.totalorder %s62, %s76
    %p78 = scmp.eq.s32.totalorder %s15, 0
    %p79 = por %p77, %p78
    %s81 = sadd.s32 %s80, 1
    %p84 = scmp.eq.s32.totalorder %s9, 1
    %p85 = scmp.ne.s32.totalorder %s80, %s82
    %p86 = scmp.eq.s32.totalorder %s9, 0
    %p87 = por %p85, %p86
    %p88 = scmp.ne.s32.totalorder %s80, %s82
    %p89 = scmp.eq.s32.totalorder %s14, 1
    %p90 = por %p88, %p89
    %p91 = scmp.ne.s32.totalorder %s82, %s83
    %p92 = scmp.eq.s32.totalorder %s14, 0
    %p93 = por %p91, %p92
    %p94 = scmp.ne.s32.totalorder %s82, %s83
    %p95 = scmp.eq.s32.totalorder %s15, 1
    %p96 = por %p94, %p95
    %p98 = scmp.ne.s32.totalorder %s83, %s97
    %p99 = scmp.eq.s32.totalorder %s15, 0
    %p100 = por %p98, %p99
    %s101 = smul.u32 %s17, %s16
    %s102 = smul.u32 %s24, %s28
    %s103 = ssub.s32 %s101, %s102
    %p104 = scmp.eq.s32.totalorder %s103, 0
    %s106 = sadd.s32 %s105, 1
    %s107 = scalar_select %p104, %s105, %s106
    %p110 = pneg %p104
    %p111 = scmp.eq.s32.totalorder %s9, 1
    %p112 = por %p110, %p111
    %p113 = scmp.ne.s32.totalorder %s105, %s108
    %p114 = scmp.eq.s32.totalorder %s9, 0
    %p115 = por %p113, %p114
    %p116 = scmp.ne.s32.totalorder %s105, %s108
    %p117 = scmp.eq.s32.totalorder %s14, 1
    %p118 = por %p116, %p117
    %p119 = scmp.ne.s32.totalorder %s108, %s109
    %p120 = scmp.eq.s32.totalorder %s14, 0
    %p121 = por %p119, %p120
    %p122 = scmp.ne.s32.totalorder %s108, %s109
    %p123 = scmp.eq.s32.totalorder %s15, 1
    %p124 = por %p122, %p123
    %p126 = scmp.ne.s32.totalorder %s109, %s125
    %p127 = scmp.eq.s32.totalorder %s15, 0
    %p128 = por %p126, %p127
    %p129 = scmp.le.s32.totalorder 1, %s9
    %p130 = scmp.lt.s32.totalorder %s9, 3
    %p131 = pnand %p129, %p130
    %p132 = pneg %p131
    // Predicated region
    $region9: #{cbr2d_forward.1} parent=5 // pred_check
      _
    $region10: #{cbr2d_forward.1} parent=5 // pred_check_branch
      %134 = sbr.rel (%p131) target = $region12
    $region11: #{cbr2d_forward.1} parent=5 // pred_region
      %s135 = ssub.s32 %s9, 1
      // Predicated region
      $region13: #{cbr2d_forward.1} parent=11 // pred_check
        %p136 = pneg %p72
      $region14: #{cbr2d_forward.1} parent=11 // pred_check_branch
        %138 = sbr.rel (%p136) target = $region16
      $region15: #{cbr2d_forward.1} parent=11 // pred_region
        _
      $region16: #{cbr2d_forward.1} parent=11 // pred_fallthru
        _
      // Predicated region
      $region17: #{cbr2d_forward.1} parent=11 // pred_check
        %p139 = pneg %p93
      $region18: #{cbr2d_forward.1} parent=11 // pred_check_branch
        %141 = sbr.rel (%p139) target = $region20
      $region19: #{cbr2d_forward.1} parent=11 // pred_region
        _
      $region20: #{cbr2d_forward.1} parent=11 // pred_fallthru
        _
    $region12: #{cbr2d_forward.1} parent=5 // pred_fallthru
      _
    %p142 = scmp.lt.s32.totalorder %s9, 2
    // Predicated region
    $region21: #{cbr2d_forward.1} parent=5 // pred_check
      %p143 = pneg %p142
    $region22: #{cbr2d_forward.1} parent=5 // pred_check_branch
      %145 = sbr.rel (%p143) target = $region24
    $region23: #{cbr2d_forward.1} parent=5 // pred_region
      // Predicated region
      $region25: #{cbr2d_forward.1} parent=23 // pred_check
        %p146 = pneg %p45
      $region26: #{cbr2d_forward.1} parent=23 // pred_check_branch
        %148 = sbr.rel (%p146) target = $region28
      $region27: #{cbr2d_forward.1} parent=23 // pred_region
        %s149 = ssub.s32 1, %s16
        %s150 = smul.u32 %s17, %s149
        %s151 = smul.u32 2, %s150
        %p152 = scmp.lt.s32.totalorder %s151, 1
        %s153 = scalar_select %p152, %s151, 1
        %s154 = smul.addr %s153, 8
        %s155 = smul.addr %s154, 4
        %s156 = scalar_lea.vmem %s0, %s155
        %s157 = ssub.s32 1, %s16
        %s158 = smul.u32 %s17, %s157
        %s159 = smul.u32 2, %s158
      $region28: #{cbr2d_forward.1} parent=23 // pred_fallthru
        _
    $region24: #{cbr2d_forward.1} parent=5 // pred_fallthru
      _
    %p160 = scmp.le.s32.totalorder 1, %s9
    %p161 = scmp.lt.s32.totalorder %s9, 3
    %p162 = pnand %p160, %p161
    %p163 = pneg %p162
    // Predicated region
    $region29: #{cbr2d_forward.1} parent=5 // pred_check
      _
    $region30: #{cbr2d_forward.1} parent=5 // pred_check_branch
      %165 = sbr.rel (%p162) target = $region32
    $region31: #{cbr2d_forward.1} parent=5 // pred_region
      %s166 = ssub.s32 %s9, 1
      %s167 = ssub.s32 1, %s18
      %s168 = smul.u32 %s19, %s167
      %s169 = smul.u32 2, %s168
      %p170 = scmp.lt.s32.totalorder %s169, 1
      %s171 = scalar_select %p170, %s169, 1
      %s172 = smul.addr %s171, 8
      %s173 = smul.addr %s172, 4
      %s174 = scalar_lea.vmem %s0, %s173
      %p175 = pneg %p51
      %p176 = pneg %p48
      %p177 = pneg %p72
      %p178 = pneg %p69
      %p179 = pneg %p93
      %p180 = pneg %p90
      %p181 = pneg %p121
      %p182 = pneg %p118
      %s183 = smul.u32 %s19, %s18
      %s184 = smul.u32 2, %s183
      %p185 = scmp.lt.s32.totalorder %s184, 1
      %s186 = scalar_select %p185, %s184, 1
      %s187 = smul.addr %s186, 2
      %s188 = smul.addr %s187, 8
      %s189 = scalar_lea.vmem %s3, %s188
      %s190 = ssub.s32 1, %s18
      %s191 = smul.u32 %s19, %s190
      %s192 = smul.u32 2, %s191
      %p193 = scmp.lt.s32.totalorder %s192, 1
      %s194 = scalar_select %p193, %s192, 1
      %s195 = smul.addr %s194, 8
      %s196 = smul.addr %s195, 4
      %s197 = scalar_lea.vmem %s0, %s196
      %s198 = ssub.s32 1, %s18
      %s199 = smul.u32 %s19, %s198
      %s200 = smul.u32 2, %s199
      %s201 = smul.u32 %s19, %s18
      %s202 = smul.u32 2, %s201
      %p203 = scmp.lt.s32.totalorder %s202, 1
      %s204 = scalar_select %p203, %s202, 1
      %s205 = smul.addr %s204, 2
      %s206 = smul.addr %s205, 8
      %s207 = scalar_lea.vmem %s3, %s206
      %s208 = smul.u32 %s19, %s18
      %s209 = smul.u32 2, %s208
      %p211 = scmp.eq.s32.totalorder %s18, 0
      // Predicated region
      $region33: #{cbr2d_forward.1} parent=31 // pred_check
        %p212 = pneg %p211
      $region34: #{cbr2d_forward.1} parent=31 // pred_check_branch
        %214 = sbr.rel (%p212) target = $region36
      $region35: #{cbr2d_forward.1} parent=31 // pred_region
        %p215 = scmp.eq.s32.totalorder %s19, 0
        // Predicated region
        $region37: #{cbr2d_forward.1} parent=35 // pred_check
          %p216 = pneg %p215
        $region38: #{cbr2d_forward.1} parent=35 // pred_check_branch
          %218 = sbr.rel (%p216) target = $region40
        $region39: #{cbr2d_forward.1} parent=35 // pred_region
          %vm219 = vcmask 15360
          %220 = vst.msk [vmem:[#allocation3] sm:$0xff] %vm219, 0.0
        $region40: #{cbr2d_forward.1} parent=35 // pred_fallthru
          _
        %v221 = vld [vmem:[%s2] sm:$0xff]
        %v222 = vld [vmem:[%s197] sm:$0xf]
        %v223 = vld [vmem:[%s197 + $0x4] sm:$0xf]
        %v224 = vld [vmem:[%s197 + $0x8] sm:$0xf]
        %v225 = vld [vmem:[%s197 + $0xc] sm:$0xf]
        %v226 = vld [vmem:[%s197 + $0x10] sm:$0xf]
        %v227 = vld [vmem:[%s197 + $0x14] sm:$0xf]
        %v228 = vld [vmem:[%s197 + $0x18] sm:$0xf]
        %v229 = vld [vmem:[%s197 + $0x1c] sm:$0xf]
        %v230 = vunpack.c.l.bf16 %v222
        %v231 = vunpack.c.l.bf16 %v223
        %v232 = vunpack.c.l.bf16 %v224
        %v233 = vunpack.c.l.bf16 %v225
        %v234 = vunpack.c.l.bf16 %v226
        %v235 = vunpack.c.l.bf16 %v227
        %v236 = vunpack.c.l.bf16 %v228
        %v237 = vunpack.c.l.bf16 %v229
        %246 = vrot.lane.b32.xlu0 %v230, 127
        %v247 = vpop.permute.xlu0 %246
        %248 = vrot.lane.b32.xlu0 %v231, 127
        %v249 = vpop.permute.xlu0 %248
        %250 = vrot.lane.b32.xlu0 %v232, 127
        %v251 = vpop.permute.xlu0 %250
        %252 = vrot.lane.b32.xlu0 %v233, 127
        %v253 = vpop.permute.xlu0 %252
        %254 = vrot.lane.b32.xlu0 %v234, 127
        %v255 = vpop.permute.xlu0 %254
        %256 = vrot.lane.b32.xlu0 %v235, 127
        %v257 = vpop.permute.xlu0 %256
        %258 = vrot.lane.b32.xlu0 %v236, 127
        %v259 = vpop.permute.xlu0 %258
        %260 = vrot.lane.b32.xlu0 %v237, 127
        %v261 = vpop.permute.xlu0 %260
        %270 = vrot.lane.b32.xlu0 %v230, 1
        %v271 = vpop.permute.xlu0 %270
        %272 = vrot.lane.b32.xlu0 %v231, 1
        %v273 = vpop.permute.xlu0 %272
        %274 = vrot.lane.b32.xlu0 %v232, 1
        %v275 = vpop.permute.xlu0 %274
        %276 = vrot.lane.b32.xlu0 %v233, 1
        %v277 = vpop.permute.xlu0 %276
        %278 = vrot.lane.b32.xlu0 %v234, 1
        %v279 = vpop.permute.xlu0 %278
        %280 = vrot.lane.b32.xlu0 %v235, 1
        %v281 = vpop.permute.xlu0 %280
        %282 = vrot.lane.b32.xlu0 %v236, 1
        %v283 = vpop.permute.xlu0 %282
        %284 = vrot.lane.b32.xlu0 %v237, 1
        %v285 = vpop.permute.xlu0 %284
        %294 = vrot.lane.b32.xlu0 %v230, 3
        %v295 = vpop.permute.xlu0 %294
        %296 = vrot.lane.b32.xlu0 %v231, 3
        %v297 = vpop.permute.xlu0 %296
        %298 = vrot.lane.b32.xlu0 %v232, 3
        %v299 = vpop.permute.xlu0 %298
        %300 = vrot.lane.b32.xlu0 %v233, 3
        %v301 = vpop.permute.xlu0 %300
        %302 = vrot.lane.b32.xlu0 %v234, 3
        %v303 = vpop.permute.xlu0 %302
        %304 = vrot.lane.b32.xlu0 %v235, 3
        %v305 = vpop.permute.xlu0 %304
        %306 = vrot.lane.b32.xlu0 %v236, 3
        %v307 = vpop.permute.xlu0 %306
        %308 = vrot.lane.b32.xlu0 %v237, 3
        %v309 = vpop.permute.xlu0 %308
        %vm318 = vcmask 7168
        %v319 = vsel %vm318, %v247, %v271
        %v320 = vsel %vm318, %v249, %v273
        %v321 = vsel %vm318, %v251, %v275
        %v322 = vsel %vm318, %v253, %v277
        %v323 = vsel %vm318, %v255, %v279
        %v324 = vsel %vm318, %v257, %v281
        %v325 = vsel %vm318, %v259, %v283
        %v326 = vsel %vm318, %v261, %v285
        %vm327 = vcmask 138240
        %v328 = vsel %vm327, %v319, %v295
        %v329 = vsel %vm327, %v320, %v297
        %v330 = vsel %vm327, %v321, %v299
        %v331 = vsel %vm327, %v322, %v301
        %v332 = vsel %vm327, %v323, %v303
        %v333 = vsel %vm327, %v324, %v305
        %v334 = vsel %vm327, %v325, %v307
        %v335 = vsel %vm327, %v326, %v309
        %v340 = vrot.slane %v328, 1
        %v341 = vrot.slane %v330, 1
        %v342 = vrot.slane %v332, 1
        %v343 = vrot.slane %v334, 1
        %vm352 = vcmask 1040384
        %v353 = vrot.slane %v328, 7
        %v354 = vrot.slane %v329, 7
        %v355 = vsel %vm352, %v353, %v354
        %v356 = vrot.slane %v330, 7
        %v357 = vrot.slane %v331, 7
        %v358 = vsel %vm352, %v356, %v357
        %v359 = vrot.slane %v332, 7
        %v360 = vrot.slane %v333, 7
        %v361 = vsel %vm352, %v359, %v360
        %v362 = vrot.slane %v334, 7
        %v363 = vrot.slane %v335, 7
        %v364 = vsel %vm352, %v362, %v363
        %v377 = vrot.slane %v329, 5
        %v378 = vrot.slane %v331, 5
        %v379 = vrot.slane %v333, 5
        %v380 = vrot.slane %v335, 5
        %v385 = vsel %vm352, %v340, %v353
        %v386 = vsel %vm352, %v341, %v356
        %v387 = vsel %vm352, %v342, %v359
        %v388 = vsel %vm352, %v343, %v362
        %v389 = vsel %vm352, %v354, %v377
        %v390 = vsel %vm352, %v357, %v378
        %v391 = vsel %vm352, %v360, %v379
        %v392 = vsel %vm352, %v363, %v380
        %v393 = vrot.slane %v387, 4
        %vm394 = vcmask 1047556
        %v395 = vsel %vm394, %v393, %v385
        %v396 = vrot.slane %v385, 4
        %v397 = vsel %vm394, %v387, %v396
        %v399 = vunpack.c.l.s4 1983009808
        %v400 = vunpack.c.0.s8 %v399
        %v401 = vperm.slane %v395, %v400
        %v403 = vunpack.c.l.s4 1983009808
        %v404 = vunpack.c.0.s8 %v403
        %v405 = vperm.slane %v397, %v404
        %v406 = vrot.slane %v388, 4
        %v407 = vsel %vm394, %v406, %v386
        %v408 = vrot.slane %v386, 4
        %v409 = vsel %vm394, %v388, %v408
        %v411 = vunpack.c.l.s4 1983009808
        %v412 = vunpack.c.0.s8 %v411
        %v413 = vperm.slane %v407, %v412
        %v415 = vunpack.c.l.s4 1983009808
        %v416 = vunpack.c.0.s8 %v415
        %v417 = vperm.slane %v409, %v416
        %v418 = vrot.slane %v413, 4
        %v419 = vsel %vm394, %v418, %v401
        %v420 = vrot.slane %v401, 4
        %v421 = vsel %vm394, %v413, %v420
        %v423 = vunpack.c.l.s4 1934713408
        %v424 = vunpack.c.0.s8 %v423
        %v425 = vperm.slane %v419, %v424
        %v427 = vunpack.c.l.s4 1934713408
        %v428 = vunpack.c.0.s8 %v427
        %v429 = vperm.slane %v421, %v428
        %v430 = vrot.slane %v417, 4
        %v431 = vsel %vm394, %v430, %v405
        %v432 = vrot.slane %v405, 4
        %v433 = vsel %vm394, %v417, %v432
        %v435 = vunpack.c.l.s4 1934713408
        %v436 = vunpack.c.0.s8 %v435
        %v437 = vperm.slane %v431, %v436
        %v439 = vunpack.c.l.s4 1934713408
        %v440 = vunpack.c.0.s8 %v439
        %v441 = vperm.slane %v433, %v440
        %v442 = vrot.slane %v425, 4
        %v443 = vsel %vm394, 0.0, %v442
        %v444 = vrot.slane %v429, 4
        %v445 = vsel %vm394, 0.0, %v444
        %v446 = vrot.slane %v437, 4
        %v447 = vsel %vm394, 0.0, %v446
        %v448 = vrot.slane %v441, 4
        %v449 = vsel %vm394, 0.0, %v448
        %v450 = vrot.slane %v361, 4
        %v451 = vsel %vm394, %v450, %v355
        %v452 = vrot.slane %v355, 4
        %v453 = vsel %vm394, %v361, %v452
        %v455 = vunpack.c.l.s4 1983009808
        %v456 = vunpack.c.0.s8 %v455
        %v457 = vperm.slane %v451, %v456
        %v459 = vunpack.c.l.s4 1983009808
        %v460 = vunpack.c.0.s8 %v459
        %v461 = vperm.slane %v453, %v460
        %v462 = vrot.slane %v364, 4
        %v463 = vsel %vm394, %v462, %v358
        %v464 = vrot.slane %v358, 4
        %v465 = vsel %vm394, %v364, %v464
        %v467 = vunpack.c.l.s4 1983009808
        %v468 = vunpack.c.0.s8 %v467
        %v469 = vperm.slane %v463, %v468
        %v471 = vunpack.c.l.s4 1983009808
        %v472 = vunpack.c.0.s8 %v471
        %v473 = vperm.slane %v465, %v472
        %v474 = vrot.slane %v469, 4
        %v475 = vsel %vm394, %v474, %v457
        %v476 = vrot.slane %v457, 4
        %v477 = vsel %vm394, %v469, %v476
        %v479 = vunpack.c.l.s4 1934713408
        %v480 = vunpack.c.0.s8 %v479
        %v481 = vperm.slane %v475, %v480
        %v483 = vunpack.c.l.s4 1934713408
        %v484 = vunpack.c.0.s8 %v483
        %v485 = vperm.slane %v477, %v484
        %v486 = vrot.slane %v473, 4
        %v487 = vsel %vm394, %v486, %v461
        %v488 = vrot.slane %v461, 4
        %v489 = vsel %vm394, %v473, %v488
        %v491 = vunpack.c.l.s4 1934713408
        %v492 = vunpack.c.0.s8 %v491
        %v493 = vperm.slane %v487, %v492
        %v495 = vunpack.c.l.s4 1934713408
        %v496 = vunpack.c.0.s8 %v495
        %v497 = vperm.slane %v489, %v496
        %v498 = vrot.slane %v481, 4
        %v499 = vsel %vm394, 0.0, %v498
        %v500 = vrot.slane %v485, 4
        %v501 = vsel %vm394, 0.0, %v500
        %v502 = vrot.slane %v493, 4
        %v503 = vsel %vm394, 0.0, %v502
        %v504 = vrot.slane %v497, 4
        %v505 = vsel %vm394, 0.0, %v504
        %507 = vrot.lane.b32.xlu0 %v443, 16
        %v508 = vpop.permute.xlu0 %507
        %511 = vrot.lane.b32.xlu0 %v429, 32
        %v512 = vpop.permute.xlu0 %511
        %515 = vrot.lane.b32.xlu0 %v445, 48
        %v516 = vpop.permute.xlu0 %515
        %519 = vrot.lane.b32.xlu0 %v437, 64
        %v520 = vpop.permute.xlu0 %519
        %523 = vrot.lane.b32.xlu0 %v447, 80
        %v524 = vpop.permute.xlu0 %523
        %527 = vrot.lane.b32.xlu0 %v441, 96
        %v528 = vpop.permute.xlu0 %527
        %531 = vrot.lane.b32.xlu0 %v449, 112
        %v532 = vpop.permute.xlu0 %531
        %535 = vrot.lane.b32.xlu0 %v499, 16
        %v536 = vpop.permute.xlu0 %535
        %539 = vrot.lane.b32.xlu0 %v485, 32
        %v540 = vpop.permute.xlu0 %539
        %543 = vrot.lane.b32.xlu0 %v501, 48
        %v544 = vpop.permute.xlu0 %543
        %547 = vrot.lane.b32.xlu0 %v493, 64
        %v548 = vpop.permute.xlu0 %547
        %551 = vrot.lane.b32.xlu0 %v503, 80
        %v552 = vpop.permute.xlu0 %551
        %555 = vrot.lane.b32.xlu0 %v497, 96
        %v556 = vpop.permute.xlu0 %555
        %559 = vrot.lane.b32.xlu0 %v505, 112
        %v560 = vpop.permute.xlu0 %559
        %vm562 = vcmask 130048
        %v563 = vsel %vm562, %v425, %v508
        %vm564 = vcmask 261120
        %v565 = vsel %vm564, %v563, %v512
        %vm566 = vcmask 392192
        %v567 = vsel %vm566, %v565, %v516
        %vm568 = vcmask 523264
        %v569 = vsel %vm568, %v567, %v520
        %vm570 = vcmask 654336
        %v571 = vsel %vm570, %v569, %v524
        %vm572 = vcmask 785408
        %v573 = vsel %vm572, %v571, %v528
        %vm574 = vcmask 916480
        %v575 = vsel %vm574, %v573, %v532
        %v576 = vsel %vm562, %v481, %v536
        %v577 = vsel %vm564, %v576, %v540
        %v578 = vsel %vm566, %v577, %v544
        %v579 = vsel %vm568, %v578, %v548
        %v580 = vsel %vm570, %v579, %v552
        %v581 = vsel %vm572, %v580, %v556
        %v582 = vsel %vm574, %v581, %v560
        %587 = vrot.lane.b32.xlu0 %v385, 127
        %v588 = vpop.permute.xlu0 %587
        %589 = vrot.lane.b32.xlu0 %v355, 127
        %v590 = vpop.permute.xlu0 %589
        %591 = vrot.lane.b32.xlu0 %v386, 127
        %v592 = vpop.permute.xlu0 %591
        %593 = vrot.lane.b32.xlu0 %v358, 127
        %v594 = vpop.permute.xlu0 %593
        %595 = vrot.lane.b32.xlu0 %v387, 127
        %v596 = vpop.permute.xlu0 %595
        %597 = vrot.lane.b32.xlu0 %v361, 127
        %v598 = vpop.permute.xlu0 %597
        %599 = vrot.lane.b32.xlu0 %v388, 127
        %v600 = vpop.permute.xlu0 %599
        %601 = vrot.lane.b32.xlu0 %v364, 127
        %v602 = vpop.permute.xlu0 %601
        %v611 = vrot.slane %v596, 4
        %v612 = vsel %vm394, %v611, %v588
        %v613 = vrot.slane %v588, 4
        %v614 = vsel %vm394, %v596, %v613
        %v616 = vunpack.c.l.s4 1983009808
        %v617 = vunpack.c.0.s8 %v616
        %v618 = vperm.slane %v612, %v617
        %v620 = vunpack.c.l.s4 1983009808
        %v621 = vunpack.c.0.s8 %v620
        %v622 = vperm.slane %v614, %v621
        %v623 = vrot.slane %v600, 4
        %v624 = vsel %vm394, %v623, %v592
        %v625 = vrot.slane %v592, 4
        %v626 = vsel %vm394, %v600, %v625
        %v628 = vunpack.c.l.s4 1983009808
        %v629 = vunpack.c.0.s8 %v628
        %v630 = vperm.slane %v624, %v629
        %v632 = vunpack.c.l.s4 1983009808
        %v633 = vunpack.c.0.s8 %v632
        %v634 = vperm.slane %v626, %v633
        %v635 = vrot.slane %v630, 4
        %v636 = vsel %vm394, %v635, %v618
        %v637 = vrot.slane %v618, 4
        %v638 = vsel %vm394, %v630, %v637
        %v640 = vunpack.c.l.s4 1934713408
        %v641 = vunpack.c.0.s8 %v640
        %v642 = vperm.slane %v636, %v641
        %v644 = vunpack.c.l.s4 1934713408
        %v645 = vunpack.c.0.s8 %v644
        %v646 = vperm.slane %v638, %v645
        %v647 = vrot.slane %v634, 4
        %v648 = vsel %vm394, %v647, %v622
        %v649 = vrot.slane %v622, 4
        %v650 = vsel %vm394, %v634, %v649
        %v652 = vunpack.c.l.s4 1934713408
        %v653 = vunpack.c.0.s8 %v652
        %v654 = vperm.slane %v648, %v653
        %v656 = vunpack.c.l.s4 1934713408
        %v657 = vunpack.c.0.s8 %v656
        %v658 = vperm.slane %v650, %v657
        %v659 = vrot.slane %v642, 4
        %v660 = vsel %vm394, 0.0, %v659
        %v661 = vrot.slane %v646, 4
        %v662 = vsel %vm394, 0.0, %v661
        %v663 = vrot.slane %v654, 4
        %v664 = vsel %vm394, 0.0, %v663
        %v665 = vrot.slane %v658, 4
        %v666 = vsel %vm394, 0.0, %v665
        %v667 = vrot.slane %v598, 4
        %v668 = vsel %vm394, %v667, %v590
        %v669 = vrot.slane %v590, 4
        %v670 = vsel %vm394, %v598, %v669
        %v672 = vunpack.c.l.s4 1983009808
        %v673 = vunpack.c.0.s8 %v672
        %v674 = vperm.slane %v668, %v673
        %v676 = vunpack.c.l.s4 1983009808
        %v677 = vunpack.c.0.s8 %v676
        %v678 = vperm.slane %v670, %v677
        %v679 = vrot.slane %v602, 4
        %v680 = vsel %vm394, %v679, %v594
        %v681 = vrot.slane %v594, 4
        %v682 = vsel %vm394, %v602, %v681
        %v684 = vunpack.c.l.s4 1983009808
        %v685 = vunpack.c.0.s8 %v684
        %v686 = vperm.slane %v680, %v685
        %v688 = vunpack.c.l.s4 1983009808
        %v689 = vunpack.c.0.s8 %v688
        %v690 = vperm.slane %v682, %v689
        %v691 = vrot.slane %v686, 4
        %v692 = vsel %vm394, %v691, %v674
        %v693 = vrot.slane %v674, 4
        %v694 = vsel %vm394, %v686, %v693
        %v696 = vunpack.c.l.s4 1934713408
        %v697 = vunpack.c.0.s8 %v696
        %v698 = vperm.slane %v692, %v697
        %v700 = vunpack.c.l.s4 1934713408
        %v701 = vunpack.c.0.s8 %v700
        %v702 = vperm.slane %v694, %v701
        %v703 = vrot.slane %v690, 4
        %v704 = vsel %vm394, %v703, %v678
        %v705 = vrot.slane %v678, 4
        %v706 = vsel %vm394, %v690, %v705
        %v708 = vunpack.c.l.s4 1934713408
        %v709 = vunpack.c.0.s8 %v708
        %v710 = vperm.slane %v704, %v709
        %v712 = vunpack.c.l.s4 1934713408
        %v713 = vunpack.c.0.s8 %v712
        %v714 = vperm.slane %v706, %v713
        %v715 = vrot.slane %v698, 4
        %v716 = vsel %vm394, 0.0, %v715
        %v717 = vrot.slane %v702, 4
        %v718 = vsel %vm394, 0.0, %v717
        %v719 = vrot.slane %v710, 4
        %v720 = vsel %vm394, 0.0, %v719
        %v721 = vrot.slane %v714, 4
        %v722 = vsel %vm394, 0.0, %v721
        %724 = vrot.lane.b32.xlu0 %v660, 16
        %v725 = vpop.permute.xlu0 %724
        %728 = vrot.lane.b32.xlu0 %v646, 32
        %v729 = vpop.permute.xlu0 %728
        %732 = vrot.lane.b32.xlu0 %v662, 48
        %v733 = vpop.permute.xlu0 %732
        %736 = vrot.lane.b32.xlu0 %v654, 64
        %v737 = vpop.permute.xlu0 %736
        %740 = vrot.lane.b32.xlu0 %v664, 80
        %v741 = vpop.permute.xlu0 %740
        %744 = vrot.lane.b32.xlu0 %v658, 96
        %v745 = vpop.permute.xlu0 %744
        %748 = vrot.lane.b32.xlu0 %v666, 112
        %v749 = vpop.permute.xlu0 %748
        %752 = vrot.lane.b32.xlu0 %v716, 16
        %v753 = vpop.permute.xlu0 %752
        %756 = vrot.lane.b32.xlu0 %v702, 32
        %v757 = vpop.permute.xlu0 %756
        %760 = vrot.lane.b32.xlu0 %v718, 48
        %v761 = vpop.permute.xlu0 %760
        %764 = vrot.lane.b32.xlu0 %v710, 64
        %v765 = vpop.permute.xlu0 %764
        %768 = vrot.lane.b32.xlu0 %v720, 80
        %v769 = vpop.permute.xlu0 %768
        %772 = vrot.lane.b32.xlu0 %v714, 96
        %v773 = vpop.permute.xlu0 %772
        %776 = vrot.lane.b32.xlu0 %v722, 112
        %v777 = vpop.permute.xlu0 %776
        %v779 = vsel %vm562, %v642, %v725
        %v780 = vsel %vm564, %v779, %v729
        %v781 = vsel %vm566, %v780, %v733
        %v782 = vsel %vm568, %v781, %v737
        %v783 = vsel %vm570, %v782, %v741
        %v784 = vsel %vm572, %v783, %v745
        %v785 = vsel %vm574, %v784, %v749
        %v786 = vsel %vm562, %v698, %v753
        %v787 = vsel %vm564, %v786, %v757
        %v788 = vsel %vm566, %v787, %v761
        %v789 = vsel %vm568, %v788, %v765
        %v790 = vsel %vm570, %v789, %v769
        %v791 = vsel %vm572, %v790, %v773
        %v792 = vsel %vm574, %v791, %v777
        %793 = vrot.lane.b32.xlu0 %v385, 126
        %v794 = vpop.permute.xlu0 %793
        %795 = vrot.lane.b32.xlu0 %v355, 126
        %v796 = vpop.permute.xlu0 %795
        %797 = vrot.lane.b32.xlu0 %v386, 126
        %v798 = vpop.permute.xlu0 %797
        %799 = vrot.lane.b32.xlu0 %v358, 126
        %v800 = vpop.permute.xlu0 %799
        %801 = vrot.lane.b32.xlu0 %v387, 126
        %v802 = vpop.permute.xlu0 %801
        %803 = vrot.lane.b32.xlu0 %v361, 126
        %v804 = vpop.permute.xlu0 %803
        %805 = vrot.lane.b32.xlu0 %v388, 126
        %v806 = vpop.permute.xlu0 %805
        %807 = vrot.lane.b32.xlu0 %v364, 126
        %v808 = vpop.permute.xlu0 %807
        %v817 = vrot.slane %v802, 4
        %v818 = vsel %vm394, %v817, %v794
        %v819 = vrot.slane %v794, 4
        %v820 = vsel %vm394, %v802, %v819
        %v822 = vunpack.c.l.s4 1983009808
        %v823 = vunpack.c.0.s8 %v822
        %v824 = vperm.slane %v818, %v823
        %v826 = vunpack.c.l.s4 1983009808
        %v827 = vunpack.c.0.s8 %v826
        %v828 = vperm.slane %v820, %v827
        %v829 = vrot.slane %v806, 4
        %v830 = vsel %vm394, %v829, %v798
        %v831 = vrot.slane %v798, 4
        %v832 = vsel %vm394, %v806, %v831
        %v834 = vunpack.c.l.s4 1983009808
        %v835 = vunpack.c.0.s8 %v834
        %v836 = vperm.slane %v830, %v835
        %v838 = vunpack.c.l.s4 1983009808
        %v839 = vunpack.c.0.s8 %v838
        %v840 = vperm.slane %v832, %v839
        %v841 = vrot.slane %v836, 4
        %v842 = vsel %vm394, %v841, %v824
        %v843 = vrot.slane %v824, 4
        %v844 = vsel %vm394, %v836, %v843
        %v846 = vunpack.c.l.s4 1934713408
        %v847 = vunpack.c.0.s8 %v846
        %v848 = vperm.slane %v842, %v847
        %v850 = vunpack.c.l.s4 1934713408
        %v851 = vunpack.c.0.s8 %v850
        %v852 = vperm.slane %v844, %v851
        %v853 = vrot.slane %v840, 4
        %v854 = vsel %vm394, %v853, %v828
        %v855 = vrot.slane %v828, 4
        %v856 = vsel %vm394, %v840, %v855
        %v858 = vunpack.c.l.s4 1934713408
        %v859 = vunpack.c.0.s8 %v858
        %v860 = vperm.slane %v854, %v859
        %v862 = vunpack.c.l.s4 1934713408
        %v863 = vunpack.c.0.s8 %v862
        %v864 = vperm.slane %v856, %v863
        %v865 = vrot.slane %v848, 4
        %v866 = vsel %vm394, 0.0, %v865
        %v867 = vrot.slane %v852, 4
        %v868 = vsel %vm394, 0.0, %v867
        %v869 = vrot.slane %v860, 4
        %v870 = vsel %vm394, 0.0, %v869
        %v871 = vrot.slane %v864, 4
        %v872 = vsel %vm394, 0.0, %v871
        %v873 = vrot.slane %v804, 4
        %v874 = vsel %vm394, %v873, %v796
        %v875 = vrot.slane %v796, 4
        %v876 = vsel %vm394, %v804, %v875
        %v878 = vunpack.c.l.s4 1983009808
        %v879 = vunpack.c.0.s8 %v878
        %v880 = vperm.slane %v874, %v879
        %v882 = vunpack.c.l.s4 1983009808
        %v883 = vunpack.c.0.s8 %v882
        %v884 = vperm.slane %v876, %v883
        %v885 = vrot.slane %v808, 4
        %v886 = vsel %vm394, %v885, %v800
        %v887 = vrot.slane %v800, 4
        %v888 = vsel %vm394, %v808, %v887
        %v890 = vunpack.c.l.s4 1983009808
        %v891 = vunpack.c.0.s8 %v890
        %v892 = vperm.slane %v886, %v891
        %v894 = vunpack.c.l.s4 1983009808
        %v895 = vunpack.c.0.s8 %v894
        %v896 = vperm.slane %v888, %v895
        %v897 = vrot.slane %v892, 4
        %v898 = vsel %vm394, %v897, %v880
        %v899 = vrot.slane %v880, 4
        %v900 = vsel %vm394, %v892, %v899
        %v902 = vunpack.c.l.s4 1934713408
        %v903 = vunpack.c.0.s8 %v902
        %v904 = vperm.slane %v898, %v903
        %v906 = vunpack.c.l.s4 1934713408
        %v907 = vunpack.c.0.s8 %v906
        %v908 = vperm.slane %v900, %v907
        %v909 = vrot.slane %v896, 4
        %v910 = vsel %vm394, %v909, %v884
        %v911 = vrot.slane %v884, 4
        %v912 = vsel %vm394, %v896, %v911
        %v914 = vunpack.c.l.s4 1934713408
        %v915 = vunpack.c.0.s8 %v914
        %v916 = vperm.slane %v910, %v915
        %v918 = vunpack.c.l.s4 1934713408
        %v919 = vunpack.c.0.s8 %v918
        %v920 = vperm.slane %v912, %v919
        %v921 = vrot.slane %v904, 4
        %v922 = vsel %vm394, 0.0, %v921
        %v923 = vrot.slane %v908, 4
        %v924 = vsel %vm394, 0.0, %v923
        %v925 = vrot.slane %v916, 4
        %v926 = vsel %vm394, 0.0, %v925
        %v927 = vrot.slane %v920, 4
        %v928 = vsel %vm394, 0.0, %v927
        %930 = vrot.lane.b32.xlu0 %v866, 16
        %v931 = vpop.permute.xlu0 %930
        %934 = vrot.lane.b32.xlu0 %v852, 32
        %v935 = vpop.permute.xlu0 %934
        %938 = vrot.lane.b32.xlu0 %v868, 48
        %v939 = vpop.permute.xlu0 %938
        %942 = vrot.lane.b32.xlu0 %v860, 64
        %v943 = vpop.permute.xlu0 %942
        %946 = vrot.lane.b32.xlu0 %v870, 80
        %v947 = vpop.permute.xlu0 %946
        %950 = vrot.lane.b32.xlu0 %v864, 96
        %v951 = vpop.permute.xlu0 %950
        %954 = vrot.lane.b32.xlu0 %v872, 112
        %v955 = vpop.permute.xlu0 %954
        %958 = vrot.lane.b32.xlu0 %v922, 16
        %v959 = vpop.permute.xlu0 %958
        %962 = vrot.lane.b32.xlu0 %v908, 32
        %v963 = vpop.permute.xlu0 %962
        %966 = vrot.lane.b32.xlu0 %v924, 48
        %v967 = vpop.permute.xlu0 %966
        %970 = vrot.lane.b32.xlu0 %v916, 64
        %v971 = vpop.permute.xlu0 %970
        %974 = vrot.lane.b32.xlu0 %v926, 80
        %v975 = vpop.permute.xlu0 %974
        %978 = vrot.lane.b32.xlu0 %v920, 96
        %v979 = vpop.permute.xlu0 %978
        %982 = vrot.lane.b32.xlu0 %v928, 112
        %v983 = vpop.permute.xlu0 %982
        %v985 = vsel %vm562, %v848, %v931
        %v986 = vsel %vm564, %v985, %v935
        %v987 = vsel %vm566, %v986, %v939
        %v988 = vsel %vm568, %v987, %v943
        %v989 = vsel %vm570, %v988, %v947
        %v990 = vsel %vm572, %v989, %v951
        %v991 = vsel %vm574, %v990, %v955
        %v992 = vsel %vm562, %v904, %v959
        %v993 = vsel %vm564, %v992, %v963
        %v994 = vsel %vm566, %v993, %v967
        %v995 = vsel %vm568, %v994, %v971
        %v996 = vsel %vm570, %v995, %v975
        %v997 = vsel %vm572, %v996, %v979
        %v998 = vsel %vm574, %v997, %v983
        %vm1003 = vcmask 1046528
        %v1004 = vrot.slane %v385, 1
        %v1005 = vrot.slane %v355, 1
        %v1006 = vsel %vm1003, %v1004, %v1005
        %v1007 = vrot.slane %v389, 1
        %v1008 = vsel %vm1003, %v1005, %v1007
        %v1009 = vrot.slane %v386, 1
        %v1010 = vrot.slane %v358, 1
        %v1011 = vsel %vm1003, %v1009, %v1010
        %v1012 = vrot.slane %v390, 1
        %v1013 = vsel %vm1003, %v1010, %v1012
        %v1014 = vrot.slane %v387, 1
        %v1015 = vrot.slane %v361, 1
        %v1016 = vsel %vm1003, %v1014, %v1015
        %v1017 = vrot.slane %v391, 1
        %v1018 = vsel %vm1003, %v1015, %v1017
        %v1019 = vrot.slane %v388, 1
        %v1020 = vrot.slane %v364, 1
        %v1021 = vsel %vm1003, %v1019, %v1020
        %v1022 = vrot.slane %v392, 1
        %v1023 = vsel %vm1003, %v1020, %v1022
        %v1032 = vrot.slane %v1016, 4
        %v1033 = vsel %vm394, %v1032, %v1006
        %v1034 = vrot.slane %v1006, 4
        %v1035 = vsel %vm394, %v1016, %v1034
        %v1037 = vunpack.c.l.s4 1983009808
        %v1038 = vunpack.c.0.s8 %v1037
        %v1039 = vperm.slane %v1033, %v1038
        %v1041 = vunpack.c.l.s4 1983009808
        %v1042 = vunpack.c.0.s8 %v1041
        %v1043 = vperm.slane %v1035, %v1042
        %v1044 = vrot.slane %v1021, 4
        %v1045 = vsel %vm394, %v1044, %v1011
        %v1046 = vrot.slane %v1011, 4
        %v1047 = vsel %vm394, %v1021, %v1046
        %v1049 = vunpack.c.l.s4 1983009808
        %v1050 = vunpack.c.0.s8 %v1049
        %v1051 = vperm.slane %v1045, %v1050
        %v1053 = vunpack.c.l.s4 1983009808
        %v1054 = vunpack.c.0.s8 %v1053
        %v1055 = vperm.slane %v1047, %v1054
        %v1056 = vrot.slane %v1051, 4
        %v1057 = vsel %vm394, %v1056, %v1039
        %v1058 = vrot.slane %v1039, 4
        %v1059 = vsel %vm394, %v1051, %v1058
        %v1061 = vunpack.c.l.s4 1934713408
        %v1062 = vunpack.c.0.s8 %v1061
        %v1063 = vperm.slane %v1057, %v1062
        %v1065 = vunpack.c.l.s4 1934713408
        %v1066 = vunpack.c.0.s8 %v1065
        %v1067 = vperm.slane %v1059, %v1066
        %v1068 = vrot.slane %v1055, 4
        %v1069 = vsel %vm394, %v1068, %v1043
        %v1070 = vrot.slane %v1043, 4
        %v1071 = vsel %vm394, %v1055, %v1070
        %v1073 = vunpack.c.l.s4 1934713408
        %v1074 = vunpack.c.0.s8 %v1073
        %v1075 = vperm.slane %v1069, %v1074
        %v1077 = vunpack.c.l.s4 1934713408
        %v1078 = vunpack.c.0.s8 %v1077
        %v1079 = vperm.slane %v1071, %v1078
        %v1080 = vrot.slane %v1063, 4
        %v1081 = vsel %vm394, 0.0, %v1080
        %v1082 = vrot.slane %v1067, 4
        %v1083 = vsel %vm394, 0.0, %v1082
        %v1084 = vrot.slane %v1075, 4
        %v1085 = vsel %vm394, 0.0, %v1084
        %v1086 = vrot.slane %v1079, 4
        %v1087 = vsel %vm394, 0.0, %v1086
        %v1088 = vrot.slane %v1018, 4
        %v1089 = vsel %vm394, %v1088, %v1008
        %v1090 = vrot.slane %v1008, 4
        %v1091 = vsel %vm394, %v1018, %v1090
        %v1093 = vunpack.c.l.s4 1983009808
        %v1094 = vunpack.c.0.s8 %v1093
        %v1095 = vperm.slane %v1089, %v1094
        %v1097 = vunpack.c.l.s4 1983009808
        %v1098 = vunpack.c.0.s8 %v1097
        %v1099 = vperm.slane %v1091, %v1098
        %v1100 = vrot.slane %v1023, 4
        %v1101 = vsel %vm394, %v1100, %v1013
        %v1102 = vrot.slane %v1013, 4
        %v1103 = vsel %vm394, %v1023, %v1102
        %v1105 = vunpack.c.l.s4 1983009808
        %v1106 = vunpack.c.0.s8 %v1105
        %v1107 = vperm.slane %v1101, %v1106
        %v1109 = vunpack.c.l.s4 1983009808
        %v1110 = vunpack.c.0.s8 %v1109
        %v1111 = vperm.slane %v1103, %v1110
        %v1112 = vrot.slane %v1107, 4
        %v1113 = vsel %vm394, %v1112, %v1095
        %v1114 = vrot.slane %v1095, 4
        %v1115 = vsel %vm394, %v1107, %v1114
        %v1117 = vunpack.c.l.s4 1934713408
        %v1118 = vunpack.c.0.s8 %v1117
        %v1119 = vperm.slane %v1113, %v1118
        %v1121 = vunpack.c.l.s4 1934713408
        %v1122 = vunpack.c.0.s8 %v1121
        %v1123 = vperm.slane %v1115, %v1122
        %v1124 = vrot.slane %v1111, 4
        %v1125 = vsel %vm394, %v1124, %v1099
        %v1126 = vrot.slane %v1099, 4
        %v1127 = vsel %vm394, %v1111, %v1126
        %v1129 = vunpack.c.l.s4 1934713408
        %v1130 = vunpack.c.0.s8 %v1129
        %v1131 = vperm.slane %v1125, %v1130
        %v1133 = vunpack.c.l.s4 1934713408
        %v1134 = vunpack.c.0.s8 %v1133
        %v1135 = vperm.slane %v1127, %v1134
        %v1136 = vrot.slane %v1119, 4
        %v1137 = vsel %vm394, 0.0, %v1136
        %v1138 = vrot.slane %v1123, 4
        %v1139 = vsel %vm394, 0.0, %v1138
        %v1140 = vrot.slane %v1131, 4
        %v1141 = vsel %vm394, 0.0, %v1140
        %v1142 = vrot.slane %v1135, 4
        %v1143 = vsel %vm394, 0.0, %v1142
        %1145 = vrot.lane.b32.xlu0 %v1081, 16
        %v1146 = vpop.permute.xlu0 %1145
        %1149 = vrot.lane.b32.xlu0 %v1067, 32
        %v1150 = vpop.permute.xlu0 %1149
        %1153 = vrot.lane.b32.xlu0 %v1083, 48
        %v1154 = vpop.permute.xlu0 %1153
        %1157 = vrot.lane.b32.xlu0 %v1075, 64
        %v1158 = vpop.permute.xlu0 %1157
        %1161 = vrot.lane.b32.xlu0 %v1085, 80
        %v1162 = vpop.permute.xlu0 %1161
        %1165 = vrot.lane.b32.xlu0 %v1079, 96
        %v1166 = vpop.permute.xlu0 %1165
        %1169 = vrot.lane.b32.xlu0 %v1087, 112
        %v1170 = vpop.permute.xlu0 %1169
        %1173 = vrot.lane.b32.xlu0 %v1137, 16
        %v1174 = vpop.permute.xlu0 %1173
        %1177 = vrot.lane.b32.xlu0 %v1123, 32
        %v1178 = vpop.permute.xlu0 %1177
        %1181 = vrot.lane.b32.xlu0 %v1139, 48
        %v1182 = vpop.permute.xlu0 %1181
        %1185 = vrot.lane.b32.xlu0 %v1131, 64
        %v1186 = vpop.permute.xlu0 %1185
        %1189 = vrot.lane.b32.xlu0 %v1141, 80
        %v1190 = vpop.permute.xlu0 %1189
        %1193 = vrot.lane.b32.xlu0 %v1135, 96
        %v1194 = vpop.permute.xlu0 %1193
        %1197 = vrot.lane.b32.xlu0 %v1143, 112
        %v1198 = vpop.permute.xlu0 %1197
        %v1200 = vsel %vm562, %v1063, %v1146
        %v1201 = vsel %vm564, %v1200, %v1150
        %v1202 = vsel %vm566, %v1201, %v1154
        %v1203 = vsel %vm568, %v1202, %v1158
        %v1204 = vsel %vm570, %v1203, %v1162
        %v1205 = vsel %vm572, %v1204, %v1166
        %v1206 = vsel %vm574, %v1205, %v1170
        %v1207 = vsel %vm562, %v1119, %v1174
        %v1208 = vsel %vm564, %v1207, %v1178
        %v1209 = vsel %vm566, %v1208, %v1182
        %v1210 = vsel %vm568, %v1209, %v1186
        %v1211 = vsel %vm570, %v1210, %v1190
        %v1212 = vsel %vm572, %v1211, %v1194
        %v1213 = vsel %vm574, %v1212, %v1198
        %1214 = vrot.lane.b32.xlu0 %v1006, 127
        %v1215 = vpop.permute.xlu0 %1214
        %1216 = vrot.lane.b32.xlu0 %v1008, 127
        %v1217 = vpop.permute.xlu0 %1216
        %1218 = vrot.lane.b32.xlu0 %v1011, 127
        %v1219 = vpop.permute.xlu0 %1218
        %1220 = vrot.lane.b32.xlu0 %v1013, 127
        %v1221 = vpop.permute.xlu0 %1220
        %1222 = vrot.lane.b32.xlu0 %v1016, 127
        %v1223 = vpop.permute.xlu0 %1222
        %1224 = vrot.lane.b32.xlu0 %v1018, 127
        %v1225 = vpop.permute.xlu0 %1224
        %1226 = vrot.lane.b32.xlu0 %v1021, 127
        %v1227 = vpop.permute.xlu0 %1226
        %1228 = vrot.lane.b32.xlu0 %v1023, 127
        %v1229 = vpop.permute.xlu0 %1228
        %v1238 = vrot.slane %v1223, 4
        %v1239 = vsel %vm394, %v1238, %v1215
        %v1240 = vrot.slane %v1215, 4
        %v1241 = vsel %vm394, %v1223, %v1240
        %v1243 = vunpack.c.l.s4 1983009808
        %v1244 = vunpack.c.0.s8 %v1243
        %v1245 = vperm.slane %v1239, %v1244
        %v1247 = vunpack.c.l.s4 1983009808
        %v1248 = vunpack.c.0.s8 %v1247
        %v1249 = vperm.slane %v1241, %v1248
        %v1250 = vrot.slane %v1227, 4
        %v1251 = vsel %vm394, %v1250, %v1219
        %v1252 = vrot.slane %v1219, 4
        %v1253 = vsel %vm394, %v1227, %v1252
        %v1255 = vunpack.c.l.s4 1983009808
        %v1256 = vunpack.c.0.s8 %v1255
        %v1257 = vperm.slane %v1251, %v1256
        %v1259 = vunpack.c.l.s4 1983009808
        %v1260 = vunpack.c.0.s8 %v1259
        %v1261 = vperm.slane %v1253, %v1260
        %v1262 = vrot.slane %v1257, 4
        %v1263 = vsel %vm394, %v1262, %v1245
        %v1264 = vrot.slane %v1245, 4
        %v1265 = vsel %vm394, %v1257, %v1264
        %v1267 = vunpack.c.l.s4 1934713408
        %v1268 = vunpack.c.0.s8 %v1267
        %v1269 = vperm.slane %v1263, %v1268
        %v1271 = vunpack.c.l.s4 1934713408
        %v1272 = vunpack.c.0.s8 %v1271
        %v1273 = vperm.slane %v1265, %v1272
        %v1274 = vrot.slane %v1261, 4
        %v1275 = vsel %vm394, %v1274, %v1249
        %v1276 = vrot.slane %v1249, 4
        %v1277 = vsel %vm394, %v1261, %v1276
        %v1279 = vunpack.c.l.s4 1934713408
        %v1280 = vunpack.c.0.s8 %v1279
        %v1281 = vperm.slane %v1275, %v1280
        %v1283 = vunpack.c.l.s4 1934713408
        %v1284 = vunpack.c.0.s8 %v1283
        %v1285 = vperm.slane %v1277, %v1284
        %v1286 = vrot.slane %v1269, 4
        %v1287 = vsel %vm394, 0.0, %v1286
        %v1288 = vrot.slane %v1273, 4
        %v1289 = vsel %vm394, 0.0, %v1288
        %v1290 = vrot.slane %v1281, 4
        %v1291 = vsel %vm394, 0.0, %v1290
        %v1292 = vrot.slane %v1285, 4
        %v1293 = vsel %vm394, 0.0, %v1292
        %v1294 = vrot.slane %v1225, 4
        %v1295 = vsel %vm394, %v1294, %v1217
        %v1296 = vrot.slane %v1217, 4
        %v1297 = vsel %vm394, %v1225, %v1296
        %v1299 = vunpack.c.l.s4 1983009808
        %v1300 = vunpack.c.0.s8 %v1299
        %v1301 = vperm.slane %v1295, %v1300
        %v1303 = vunpack.c.l.s4 1983009808
        %v1304 = vunpack.c.0.s8 %v1303
        %v1305 = vperm.slane %v1297, %v1304
        %v1306 = vrot.slane %v1229, 4
        %v1307 = vsel %vm394, %v1306, %v1221
        %v1308 = vrot.slane %v1221, 4
        %v1309 = vsel %vm394, %v1229, %v1308
        %v1311 = vunpack.c.l.s4 1983009808
        %v1312 = vunpack.c.0.s8 %v1311
        %v1313 = vperm.slane %v1307, %v1312
        %v1315 = vunpack.c.l.s4 1983009808
        %v1316 = vunpack.c.0.s8 %v1315
        %v1317 = vperm.slane %v1309, %v1316
        %v1318 = vrot.slane %v1313, 4
        %v1319 = vsel %vm394, %v1318, %v1301
        %v1320 = vrot.slane %v1301, 4
        %v1321 = vsel %vm394, %v1313, %v1320
        %v1323 = vunpack.c.l.s4 1934713408
        %v1324 = vunpack.c.0.s8 %v1323
        %v1325 = vperm.slane %v1319, %v1324
        %v1327 = vunpack.c.l.s4 1934713408
        %v1328 = vunpack.c.0.s8 %v1327
        %v1329 = vperm.slane %v1321, %v1328
        %v1330 = vrot.slane %v1317, 4
        %v1331 = vsel %vm394, %v1330, %v1305
        %v1332 = vrot.slane %v1305, 4
        %v1333 = vsel %vm394, %v1317, %v1332
        %v1335 = vunpack.c.l.s4 1934713408
        %v1336 = vunpack.c.0.s8 %v1335
        %v1337 = vperm.slane %v1331, %v1336
        %v1339 = vunpack.c.l.s4 1934713408
        %v1340 = vunpack.c.0.s8 %v1339
        %v1341 = vperm.slane %v1333, %v1340
        %v1342 = vrot.slane %v1325, 4
        %v1343 = vsel %vm394, 0.0, %v1342
        %v1344 = vrot.slane %v1329, 4
        %v1345 = vsel %vm394, 0.0, %v1344
        %v1346 = vrot.slane %v1337, 4
        %v1347 = vsel %vm394, 0.0, %v1346
        %v1348 = vrot.slane %v1341, 4
        %v1349 = vsel %vm394, 0.0, %v1348
        %1351 = vrot.lane.b32.xlu0 %v1287, 16
        %v1352 = vpop.permute.xlu0 %1351
        %1355 = vrot.lane.b32.xlu0 %v1273, 32
        %v1356 = vpop.permute.xlu0 %1355
        %1359 = vrot.lane.b32.xlu0 %v1289, 48
        %v1360 = vpop.permute.xlu0 %1359
        %1363 = vrot.lane.b32.xlu0 %v1281, 64
        %v1364 = vpop.permute.xlu0 %1363
        %1367 = vrot.lane.b32.xlu0 %v1291, 80
        %v1368 = vpop.permute.xlu0 %1367
        %1371 = vrot.lane.b32.xlu0 %v1285, 96
        %v1372 = vpop.permute.xlu0 %1371
        %1375 = vrot.lane.b32.xlu0 %v1293, 112
        %v1376 = vpop.permute.xlu0 %1375
        %1379 = vrot.lane.b32.xlu0 %v1343, 16
        %v1380 = vpop.permute.xlu0 %1379
        %1383 = vrot.lane.b32.xlu0 %v1329, 32
        %v1384 = vpop.permute.xlu0 %1383
        %1387 = vrot.lane.b32.xlu0 %v1345, 48
        %v1388 = vpop.permute.xlu0 %1387
        %1391 = vrot.lane.b32.xlu0 %v1337, 64
        %v1392 = vpop.permute.xlu0 %1391
        %1395 = vrot.lane.b32.xlu0 %v1347, 80
        %v1396 = vpop.permute.xlu0 %1395
        %1399 = vrot.lane.b32.xlu0 %v1341, 96
        %v1400 = vpop.permute.xlu0 %1399
        %1403 = vrot.lane.b32.xlu0 %v1349, 112
        %v1404 = vpop.permute.xlu0 %1403
        %v1406 = vsel %vm562, %v1269, %v1352
        %v1407 = vsel %vm564, %v1406, %v1356
        %v1408 = vsel %vm566, %v1407, %v1360
        %v1409 = vsel %vm568, %v1408, %v1364
        %v1410 = vsel %vm570, %v1409, %v1368
        %v1411 = vsel %vm572, %v1410, %v1372
        %v1412 = vsel %vm574, %v1411, %v1376
        %v1413 = vsel %vm562, %v1325, %v1380
        %v1414 = vsel %vm564, %v1413, %v1384
        %v1415 = vsel %vm566, %v1414, %v1388
        %v1416 = vsel %vm568, %v1415, %v1392
        %v1417 = vsel %vm570, %v1416, %v1396
        %v1418 = vsel %vm572, %v1417, %v1400
        %v1419 = vsel %vm574, %v1418, %v1404
        %1420 = vrot.lane.b32.xlu0 %v1006, 126
        %v1421 = vpop.permute.xlu0 %1420
        %1422 = vrot.lane.b32.xlu0 %v1008, 126
        %v1423 = vpop.permute.xlu0 %1422
        %1424 = vrot.lane.b32.xlu0 %v1011, 126
        %v1425 = vpop.permute.xlu0 %1424
        %1426 = vrot.lane.b32.xlu0 %v1013, 126
        %v1427 = vpop.permute.xlu0 %1426
        %1428 = vrot.lane.b32.xlu0 %v1016, 126
        %v1429 = vpop.permute.xlu0 %1428
        %1430 = vrot.lane.b32.xlu0 %v1018, 126
        %v1431 = vpop.permute.xlu0 %1430
        %1432 = vrot.lane.b32.xlu0 %v1021, 126
        %v1433 = vpop.permute.xlu0 %1432
        %1434 = vrot.lane.b32.xlu0 %v1023, 126
        %v1435 = vpop.permute.xlu0 %1434
        %v1444 = vrot.slane %v1429, 4
        %v1445 = vsel %vm394, %v1444, %v1421
        %v1446 = vrot.slane %v1421, 4
        %v1447 = vsel %vm394, %v1429, %v1446
        %v1449 = vunpack.c.l.s4 1983009808
        %v1450 = vunpack.c.0.s8 %v1449
        %v1451 = vperm.slane %v1445, %v1450
        %v1453 = vunpack.c.l.s4 1983009808
        %v1454 = vunpack.c.0.s8 %v1453
        %v1455 = vperm.slane %v1447, %v1454
        %v1456 = vrot.slane %v1433, 4
        %v1457 = vsel %vm394, %v1456, %v1425
        %v1458 = vrot.slane %v1425, 4
        %v1459 = vsel %vm394, %v1433, %v1458
        %v1461 = vunpack.c.l.s4 1983009808
        %v1462 = vunpack.c.0.s8 %v1461
        %v1463 = vperm.slane %v1457, %v1462
        %v1465 = vunpack.c.l.s4 1983009808
        %v1466 = vunpack.c.0.s8 %v1465
        %v1467 = vperm.slane %v1459, %v1466
        %v1468 = vrot.slane %v1463, 4
        %v1469 = vsel %vm394, %v1468, %v1451
        %v1470 = vrot.slane %v1451, 4
        %v1471 = vsel %vm394, %v1463, %v1470
        %v1473 = vunpack.c.l.s4 1934713408
        %v1474 = vunpack.c.0.s8 %v1473
        %v1475 = vperm.slane %v1469, %v1474
        %v1477 = vunpack.c.l.s4 1934713408
        %v1478 = vunpack.c.0.s8 %v1477
        %v1479 = vperm.slane %v1471, %v1478
        %v1480 = vrot.slane %v1467, 4
        %v1481 = vsel %vm394, %v1480, %v1455
        %v1482 = vrot.slane %v1455, 4
        %v1483 = vsel %vm394, %v1467, %v1482
        %v1485 = vunpack.c.l.s4 1934713408
        %v1486 = vunpack.c.0.s8 %v1485
        %v1487 = vperm.slane %v1481, %v1486
        %v1489 = vunpack.c.l.s4 1934713408
        %v1490 = vunpack.c.0.s8 %v1489
        %v1491 = vperm.slane %v1483, %v1490
        %v1492 = vrot.slane %v1475, 4
        %v1493 = vsel %vm394, 0.0, %v1492
        %v1494 = vrot.slane %v1479, 4
        %v1495 = vsel %vm394, 0.0, %v1494
        %v1496 = vrot.slane %v1487, 4
        %v1497 = vsel %vm394, 0.0, %v1496
        %v1498 = vrot.slane %v1491, 4
        %v1499 = vsel %vm394, 0.0, %v1498
        %v1500 = vrot.slane %v1431, 4
        %v1501 = vsel %vm394, %v1500, %v1423
        %v1502 = vrot.slane %v1423, 4
        %v1503 = vsel %vm394, %v1431, %v1502
        %v1505 = vunpack.c.l.s4 1983009808
        %v1506 = vunpack.c.0.s8 %v1505
        %v1507 = vperm.slane %v1501, %v1506
        %v1509 = vunpack.c.l.s4 1983009808
        %v1510 = vunpack.c.0.s8 %v1509
        %v1511 = vperm.slane %v1503, %v1510
        %v1512 = vrot.slane %v1435, 4
        %v1513 = vsel %vm394, %v1512, %v1427
        %v1514 = vrot.slane %v1427, 4
        %v1515 = vsel %vm394, %v1435, %v1514
        %v1517 = vunpack.c.l.s4 1983009808
        %v1518 = vunpack.c.0.s8 %v1517
        %v1519 = vperm.slane %v1513, %v1518
        %v1521 = vunpack.c.l.s4 1983009808
        %v1522 = vunpack.c.0.s8 %v1521
        %v1523 = vperm.slane %v1515, %v1522
        %v1524 = vrot.slane %v1519, 4
        %v1525 = vsel %vm394, %v1524, %v1507
        %v1526 = vrot.slane %v1507, 4
        %v1527 = vsel %vm394, %v1519, %v1526
        %v1529 = vunpack.c.l.s4 1934713408
        %v1530 = vunpack.c.0.s8 %v1529
        %v1531 = vperm.slane %v1525, %v1530
        %v1533 = vunpack.c.l.s4 1934713408
        %v1534 = vunpack.c.0.s8 %v1533
        %v1535 = vperm.slane %v1527, %v1534
        %v1536 = vrot.slane %v1523, 4
        %v1537 = vsel %vm394, %v1536, %v1511
        %v1538 = vrot.slane %v1511, 4
        %v1539 = vsel %vm394, %v1523, %v1538
        %v1541 = vunpack.c.l.s4 1934713408
        %v1542 = vunpack.c.0.s8 %v1541
        %v1543 = vperm.slane %v1537, %v1542
        %v1545 = vunpack.c.l.s4 1934713408
        %v1546 = vunpack.c.0.s8 %v1545
        %v1547 = vperm.slane %v1539, %v1546
        %v1548 = vrot.slane %v1531, 4
        %v1549 = vsel %vm394, 0.0, %v1548
        %v1550 = vrot.slane %v1535, 4
        %v1551 = vsel %vm394, 0.0, %v1550
        %v1552 = vrot.slane %v1543, 4
        %v1553 = vsel %vm394, 0.0, %v1552
        %v1554 = vrot.slane %v1547, 4
        %v1555 = vsel %vm394, 0.0, %v1554
        %1557 = vrot.lane.b32.xlu0 %v1493, 16
        %v1558 = vpop.permute.xlu0 %1557
        %1561 = vrot.lane.b32.xlu0 %v1479, 32
        %v1562 = vpop.permute.xlu0 %1561
        %1565 = vrot.lane.b32.xlu0 %v1495, 48
        %v1566 = vpop.permute.xlu0 %1565
        %1569 = vrot.lane.b32.xlu0 %v1487, 64
        %v1570 = vpop.permute.xlu0 %1569
        %1573 = vrot.lane.b32.xlu0 %v1497, 80
        %v1574 = vpop.permute.xlu0 %1573
        %1577 = vrot.lane.b32.xlu0 %v1491, 96
        %v1578 = vpop.permute.xlu0 %1577
        %1581 = vrot.lane.b32.xlu0 %v1499, 112
        %v1582 = vpop.permute.xlu0 %1581
        %1585 = vrot.lane.b32.xlu0 %v1549, 16
        %v1586 = vpop.permute.xlu0 %1585
        %1589 = vrot.lane.b32.xlu0 %v1535, 32
        %v1590 = vpop.permute.xlu0 %1589
        %1593 = vrot.lane.b32.xlu0 %v1551, 48
        %v1594 = vpop.permute.xlu0 %1593
        %1597 = vrot.lane.b32.xlu0 %v1543, 64
        %v1598 = vpop.permute.xlu0 %1597
        %1601 = vrot.lane.b32.xlu0 %v1553, 80
        %v1602 = vpop.permute.xlu0 %1601
        %1605 = vrot.lane.b32.xlu0 %v1547, 96
        %v1606 = vpop.permute.xlu0 %1605
        %1609 = vrot.lane.b32.xlu0 %v1555, 112
        %v1610 = vpop.permute.xlu0 %1609
        %v1612 = vsel %vm562, %v1475, %v1558
        %v1613 = vsel %vm564, %v1612, %v1562
        %v1614 = vsel %vm566, %v1613, %v1566
        %v1615 = vsel %vm568, %v1614, %v1570
        %v1616 = vsel %vm570, %v1615, %v1574
        %v1617 = vsel %vm572, %v1616, %v1578
        %v1618 = vsel %vm574, %v1617, %v1582
        %v1619 = vsel %vm562, %v1531, %v1586
        %v1620 = vsel %vm564, %v1619, %v1590
        %v1621 = vsel %vm566, %v1620, %v1594
        %v1622 = vsel %vm568, %v1621, %v1598
        %v1623 = vsel %vm570, %v1622, %v1602
        %v1624 = vsel %vm572, %v1623, %v1606
        %v1625 = vsel %vm574, %v1624, %v1610
        %vm1626 = vcmask 1045504
        %v1627 = vrot.slane %v385, 2
        %v1628 = vrot.slane %v355, 2
        %v1629 = vsel %vm1626, %v1627, %v1628
        %v1630 = vrot.slane %v389, 2
        %v1631 = vsel %vm1626, %v1628, %v1630
        %v1632 = vrot.slane %v386, 2
        %v1633 = vrot.slane %v358, 2
        %v1634 = vsel %vm1626, %v1632, %v1633
        %v1635 = vrot.slane %v390, 2
        %v1636 = vsel %vm1626, %v1633, %v1635
        %v1637 = vrot.slane %v387, 2
        %v1638 = vrot.slane %v361, 2
        %v1639 = vsel %vm1626, %v1637, %v1638
        %v1640 = vrot.slane %v391, 2
        %v1641 = vsel %vm1626, %v1638, %v1640
        %v1642 = vrot.slane %v388, 2
        %v1643 = vrot.slane %v364, 2
        %v1644 = vsel %vm1626, %v1642, %v1643
        %v1645 = vrot.slane %v392, 2
        %v1646 = vsel %vm1626, %v1643, %v1645
        %v1655 = vrot.slane %v1639, 4
        %v1656 = vsel %vm394, %v1655, %v1629
        %v1657 = vrot.slane %v1629, 4
        %v1658 = vsel %vm394, %v1639, %v1657
        %v1660 = vunpack.c.l.s4 1983009808
        %v1661 = vunpack.c.0.s8 %v1660
        %v1662 = vperm.slane %v1656, %v1661
        %v1664 = vunpack.c.l.s4 1983009808
        %v1665 = vunpack.c.0.s8 %v1664
        %v1666 = vperm.slane %v1658, %v1665
        %v1667 = vrot.slane %v1644, 4
        %v1668 = vsel %vm394, %v1667, %v1634
        %v1669 = vrot.slane %v1634, 4
        %v1670 = vsel %vm394, %v1644, %v1669
        %v1672 = vunpack.c.l.s4 1983009808
        %v1673 = vunpack.c.0.s8 %v1672
        %v1674 = vperm.slane %v1668, %v1673
        %v1676 = vunpack.c.l.s4 1983009808
        %v1677 = vunpack.c.0.s8 %v1676
        %v1678 = vperm.slane %v1670, %v1677
        %v1679 = vrot.slane %v1674, 4
        %v1680 = vsel %vm394, %v1679, %v1662
        %v1681 = vrot.slane %v1662, 4
        %v1682 = vsel %vm394, %v1674, %v1681
        %v1684 = vunpack.c.l.s4 1934713408
        %v1685 = vunpack.c.0.s8 %v1684
        %v1686 = vperm.slane %v1680, %v1685
        %v1688 = vunpack.c.l.s4 1934713408
        %v1689 = vunpack.c.0.s8 %v1688
        %v1690 = vperm.slane %v1682, %v1689
        %v1691 = vrot.slane %v1678, 4
        %v1692 = vsel %vm394, %v1691, %v1666
        %v1693 = vrot.slane %v1666, 4
        %v1694 = vsel %vm394, %v1678, %v1693
        %v1696 = vunpack.c.l.s4 1934713408
        %v1697 = vunpack.c.0.s8 %v1696
        %v1698 = vperm.slane %v1692, %v1697
        %v1700 = vunpack.c.l.s4 1934713408
        %v1701 = vunpack.c.0.s8 %v1700
        %v1702 = vperm.slane %v1694, %v1701
        %v1703 = vrot.slane %v1686, 4
        %v1704 = vsel %vm394, 0.0, %v1703
        %v1705 = vrot.slane %v1690, 4
        %v1706 = vsel %vm394, 0.0, %v1705
        %v1707 = vrot.slane %v1698, 4
        %v1708 = vsel %vm394, 0.0, %v1707
        %v1709 = vrot.slane %v1702, 4
        %v1710 = vsel %vm394, 0.0, %v1709
        %v1711 = vrot.slane %v1641, 4
        %v1712 = vsel %vm394, %v1711, %v1631
        %v1713 = vrot.slane %v1631, 4
        %v1714 = vsel %vm394, %v1641, %v1713
        %v1716 = vunpack.c.l.s4 1983009808
        %v1717 = vunpack.c.0.s8 %v1716
        %v1718 = vperm.slane %v1712, %v1717
        %v1720 = vunpack.c.l.s4 1983009808
        %v1721 = vunpack.c.0.s8 %v1720
        %v1722 = vperm.slane %v1714, %v1721
        %v1723 = vrot.slane %v1646, 4
        %v1724 = vsel %vm394, %v1723, %v1636
        %v1725 = vrot.slane %v1636, 4
        %v1726 = vsel %vm394, %v1646, %v1725
        %v1728 = vunpack.c.l.s4 1983009808
        %v1729 = vunpack.c.0.s8 %v1728
        %v1730 = vperm.slane %v1724, %v1729
        %v1732 = vunpack.c.l.s4 1983009808
        %v1733 = vunpack.c.0.s8 %v1732
        %v1734 = vperm.slane %v1726, %v1733
        %v1735 = vrot.slane %v1730, 4
        %v1736 = vsel %vm394, %v1735, %v1718
        %v1737 = vrot.slane %v1718, 4
        %v1738 = vsel %vm394, %v1730, %v1737
        %v1740 = vunpack.c.l.s4 1934713408
        %v1741 = vunpack.c.0.s8 %v1740
        %v1742 = vperm.slane %v1736, %v1741
        %v1744 = vunpack.c.l.s4 1934713408
        %v1745 = vunpack.c.0.s8 %v1744
        %v1746 = vperm.slane %v1738, %v1745
        %v1747 = vrot.slane %v1734, 4
        %v1748 = vsel %vm394, %v1747, %v1722
        %v1749 = vrot.slane %v1722, 4
        %v1750 = vsel %vm394, %v1734, %v1749
        %v1752 = vunpack.c.l.s4 1934713408
        %v1753 = vunpack.c.0.s8 %v1752
        %v1754 = vperm.slane %v1748, %v1753
        %v1756 = vunpack.c.l.s4 1934713408
        %v1757 = vunpack.c.0.s8 %v1756
        %v1758 = vperm.slane %v1750, %v1757
        %v1759 = vrot.slane %v1742, 4
        %v1760 = vsel %vm394, 0.0, %v1759
        %v1761 = vrot.slane %v1746, 4
        %v1762 = vsel %vm394, 0.0, %v1761
        %v1763 = vrot.slane %v1754, 4
        %v1764 = vsel %vm394, 0.0, %v1763
        %v1765 = vrot.slane %v1758, 4
        %v1766 = vsel %vm394, 0.0, %v1765
        %1768 = vrot.lane.b32.xlu0 %v1704, 16
        %v1769 = vpop.permute.xlu0 %1768
        %1772 = vrot.lane.b32.xlu0 %v1690, 32
        %v1773 = vpop.permute.xlu0 %1772
        %1776 = vrot.lane.b32.xlu0 %v1706, 48
        %v1777 = vpop.permute.xlu0 %1776
        %1780 = vrot.lane.b32.xlu0 %v1698, 64
        %v1781 = vpop.permute.xlu0 %1780
        %1784 = vrot.lane.b32.xlu0 %v1708, 80
        %v1785 = vpop.permute.xlu0 %1784
        %1788 = vrot.lane.b32.xlu0 %v1702, 96
        %v1789 = vpop.permute.xlu0 %1788
        %1792 = vrot.lane.b32.xlu0 %v1710, 112
        %v1793 = vpop.permute.xlu0 %1792
        %1796 = vrot.lane.b32.xlu0 %v1760, 16
        %v1797 = vpop.permute.xlu0 %1796
        %1800 = vrot.lane.b32.xlu0 %v1746, 32
        %v1801 = vpop.permute.xlu0 %1800
        %1804 = vrot.lane.b32.xlu0 %v1762, 48
        %v1805 = vpop.permute.xlu0 %1804
        %1808 = vrot.lane.b32.xlu0 %v1754, 64
        %v1809 = vpop.permute.xlu0 %1808
        %1812 = vrot.lane.b32.xlu0 %v1764, 80
        %v1813 = vpop.permute.xlu0 %1812
        %1816 = vrot.lane.b32.xlu0 %v1758, 96
        %v1817 = vpop.permute.xlu0 %1816
        %1820 = vrot.lane.b32.xlu0 %v1766, 112
        %v1821 = vpop.permute.xlu0 %1820
        %v1823 = vsel %vm562, %v1686, %v1769
        %v1824 = vsel %vm564, %v1823, %v1773
        %v1825 = vsel %vm566, %v1824, %v1777
        %v1826 = vsel %vm568, %v1825, %v1781
        %v1827 = vsel %vm570, %v1826, %v1785
        %v1828 = vsel %vm572, %v1827, %v1789
        %v1829 = vsel %vm574, %v1828, %v1793
        %v1830 = vsel %vm562, %v1742, %v1797
        %v1831 = vsel %vm564, %v1830, %v1801
        %v1832 = vsel %vm566, %v1831, %v1805
        %v1833 = vsel %vm568, %v1832, %v1809
        %v1834 = vsel %vm570, %v1833, %v1813
        %v1835 = vsel %vm572, %v1834, %v1817
        %v1836 = vsel %vm574, %v1835, %v1821
        %1837 = vrot.lane.b32.xlu0 %v1629, 127
        %v1838 = vpop.permute.xlu0 %1837
        %1839 = vrot.lane.b32.xlu0 %v1631, 127
        %v1840 = vpop.permute.xlu0 %1839
        %1841 = vrot.lane.b32.xlu0 %v1634, 127
        %v1842 = vpop.permute.xlu0 %1841
        %1843 = vrot.lane.b32.xlu0 %v1636, 127
        %v1844 = vpop.permute.xlu0 %1843
        %1845 = vrot.lane.b32.xlu0 %v1639, 127
        %v1846 = vpop.permute.xlu0 %1845
        %1847 = vrot.lane.b32.xlu0 %v1641, 127
        %v1848 = vpop.permute.xlu0 %1847
        %1849 = vrot.lane.b32.xlu0 %v1644, 127
        %v1850 = vpop.permute.xlu0 %1849
        %1851 = vrot.lane.b32.xlu0 %v1646, 127
        %v1852 = vpop.permute.xlu0 %1851
        %v1861 = vrot.slane %v1846, 4
        %v1862 = vsel %vm394, %v1861, %v1838
        %v1863 = vrot.slane %v1838, 4
        %v1864 = vsel %vm394, %v1846, %v1863
        %v1866 = vunpack.c.l.s4 1983009808
        %v1867 = vunpack.c.0.s8 %v1866
        %v1868 = vperm.slane %v1862, %v1867
        %v1870 = vunpack.c.l.s4 1983009808
        %v1871 = vunpack.c.0.s8 %v1870
        %v1872 = vperm.slane %v1864, %v1871
        %v1873 = vrot.slane %v1850, 4
        %v1874 = vsel %vm394, %v1873, %v1842
        %v1875 = vrot.slane %v1842, 4
        %v1876 = vsel %vm394, %v1850, %v1875
        %v1878 = vunpack.c.l.s4 1983009808
        %v1879 = vunpack.c.0.s8 %v1878
        %v1880 = vperm.slane %v1874, %v1879
        %v1882 = vunpack.c.l.s4 1983009808
        %v1883 = vunpack.c.0.s8 %v1882
        %v1884 = vperm.slane %v1876, %v1883
        %v1885 = vrot.slane %v1880, 4
        %v1886 = vsel %vm394, %v1885, %v1868
        %v1887 = vrot.slane %v1868, 4
        %v1888 = vsel %vm394, %v1880, %v1887
        %v1890 = vunpack.c.l.s4 1934713408
        %v1891 = vunpack.c.0.s8 %v1890
        %v1892 = vperm.slane %v1886, %v1891
        %v1894 = vunpack.c.l.s4 1934713408
        %v1895 = vunpack.c.0.s8 %v1894
        %v1896 = vperm.slane %v1888, %v1895
        %v1897 = vrot.slane %v1884, 4
        %v1898 = vsel %vm394, %v1897, %v1872
        %v1899 = vrot.slane %v1872, 4
        %v1900 = vsel %vm394, %v1884, %v1899
        %v1902 = vunpack.c.l.s4 1934713408
        %v1903 = vunpack.c.0.s8 %v1902
        %v1904 = vperm.slane %v1898, %v1903
        %v1906 = vunpack.c.l.s4 1934713408
        %v1907 = vunpack.c.0.s8 %v1906
        %v1908 = vperm.slane %v1900, %v1907
        %v1909 = vrot.slane %v1892, 4
        %v1910 = vsel %vm394, 0.0, %v1909
        %v1911 = vrot.slane %v1896, 4
        %v1912 = vsel %vm394, 0.0, %v1911
        %v1913 = vrot.slane %v1904, 4
        %v1914 = vsel %vm394, 0.0, %v1913
        %v1915 = vrot.slane %v1908, 4
        %v1916 = vsel %vm394, 0.0, %v1915
        %v1917 = vrot.slane %v1848, 4
        %v1918 = vsel %vm394, %v1917, %v1840
        %v1919 = vrot.slane %v1840, 4
        %v1920 = vsel %vm394, %v1848, %v1919
        %v1922 = vunpack.c.l.s4 1983009808
        %v1923 = vunpack.c.0.s8 %v1922
        %v1924 = vperm.slane %v1918, %v1923
        %v1926 = vunpack.c.l.s4 1983009808
        %v1927 = vunpack.c.0.s8 %v1926
        %v1928 = vperm.slane %v1920, %v1927
        %v1929 = vrot.slane %v1852, 4
        %v1930 = vsel %vm394, %v1929, %v1844
        %v1931 = vrot.slane %v1844, 4
        %v1932 = vsel %vm394, %v1852, %v1931
        %v1934 = vunpack.c.l.s4 1983009808
        %v1935 = vunpack.c.0.s8 %v1934
        %v1936 = vperm.slane %v1930, %v1935
        %v1938 = vunpack.c.l.s4 1983009808
        %v1939 = vunpack.c.0.s8 %v1938
        %v1940 = vperm.slane %v1932, %v1939
        %v1941 = vrot.slane %v1936, 4
        %v1942 = vsel %vm394, %v1941, %v1924
        %v1943 = vrot.slane %v1924, 4
        %v1944 = vsel %vm394, %v1936, %v1943
        %v1946 = vunpack.c.l.s4 1934713408
        %v1947 = vunpack.c.0.s8 %v1946
        %v1948 = vperm.slane %v1942, %v1947
        %v1950 = vunpack.c.l.s4 1934713408
        %v1951 = vunpack.c.0.s8 %v1950
        %v1952 = vperm.slane %v1944, %v1951
        %v1953 = vrot.slane %v1940, 4
        %v1954 = vsel %vm394, %v1953, %v1928
        %v1955 = vrot.slane %v1928, 4
        %v1956 = vsel %vm394, %v1940, %v1955
        %v1958 = vunpack.c.l.s4 1934713408
        %v1959 = vunpack.c.0.s8 %v1958
        %v1960 = vperm.slane %v1954, %v1959
        %v1962 = vunpack.c.l.s4 1934713408
        %v1963 = vunpack.c.0.s8 %v1962
        %v1964 = vperm.slane %v1956, %v1963
        %v1965 = vrot.slane %v1948, 4
        %v1966 = vsel %vm394, 0.0, %v1965
        %v1967 = vrot.slane %v1952, 4
        %v1968 = vsel %vm394, 0.0, %v1967
        %v1969 = vrot.slane %v1960, 4
        %v1970 = vsel %vm394, 0.0, %v1969
        %v1971 = vrot.slane %v1964, 4
        %v1972 = vsel %vm394, 0.0, %v1971
        %1974 = vrot.lane.b32.xlu0 %v1910, 16
        %v1975 = vpop.permute.xlu0 %1974
        %1978 = vrot.lane.b32.xlu0 %v1896, 32
        %v1979 = vpop.permute.xlu0 %1978
        %1982 = vrot.lane.b32.xlu0 %v1912, 48
        %v1983 = vpop.permute.xlu0 %1982
        %1986 = vrot.lane.b32.xlu0 %v1904, 64
        %v1987 = vpop.permute.xlu0 %1986
        %1990 = vrot.lane.b32.xlu0 %v1914, 80
        %v1991 = vpop.permute.xlu0 %1990
        %1994 = vrot.lane.b32.xlu0 %v1908, 96
        %v1995 = vpop.permute.xlu0 %1994
        %1998 = vrot.lane.b32.xlu0 %v1916, 112
        %v1999 = vpop.permute.xlu0 %1998
        %2002 = vrot.lane.b32.xlu0 %v1966, 16
        %v2003 = vpop.permute.xlu0 %2002
        %2006 = vrot.lane.b32.xlu0 %v1952, 32
        %v2007 = vpop.permute.xlu0 %2006
        %2010 = vrot.lane.b32.xlu0 %v1968, 48
        %v2011 = vpop.permute.xlu0 %2010
        %2014 = vrot.lane.b32.xlu0 %v1960, 64
        %v2015 = vpop.permute.xlu0 %2014
        %2018 = vrot.lane.b32.xlu0 %v1970, 80
        %v2019 = vpop.permute.xlu0 %2018
        %2022 = vrot.lane.b32.xlu0 %v1964, 96
        %v2023 = vpop.permute.xlu0 %2022
        %2026 = vrot.lane.b32.xlu0 %v1972, 112
        %v2027 = vpop.permute.xlu0 %2026
        %v2029 = vsel %vm562, %v1892, %v1975
        %v2030 = vsel %vm564, %v2029, %v1979
        %v2031 = vsel %vm566, %v2030, %v1983
        %v2032 = vsel %vm568, %v2031, %v1987
        %v2033 = vsel %vm570, %v2032, %v1991
        %v2034 = vsel %vm572, %v2033, %v1995
        %v2035 = vsel %vm574, %v2034, %v1999
        %v2036 = vsel %vm562, %v1948, %v2003
        %v2037 = vsel %vm564, %v2036, %v2007
        %v2038 = vsel %vm566, %v2037, %v2011
        %v2039 = vsel %vm568, %v2038, %v2015
        %v2040 = vsel %vm570, %v2039, %v2019
        %v2041 = vsel %vm572, %v2040, %v2023
        %v2042 = vsel %vm574, %v2041, %v2027
        %2043 = vrot.lane.b32.xlu0 %v1629, 126
        %v2044 = vpop.permute.xlu0 %2043
        %2045 = vrot.lane.b32.xlu0 %v1631, 126
        %v2046 = vpop.permute.xlu0 %2045
        %2047 = vrot.lane.b32.xlu0 %v1634, 126
        %v2048 = vpop.permute.xlu0 %2047
        %2049 = vrot.lane.b32.xlu0 %v1636, 126
        %v2050 = vpop.permute.xlu0 %2049
        %2051 = vrot.lane.b32.xlu0 %v1639, 126
        %v2052 = vpop.permute.xlu0 %2051
        %2053 = vrot.lane.b32.xlu0 %v1641, 126
        %v2054 = vpop.permute.xlu0 %2053
        %2055 = vrot.lane.b32.xlu0 %v1644, 126
        %v2056 = vpop.permute.xlu0 %2055
        %2057 = vrot.lane.b32.xlu0 %v1646, 126
        %v2058 = vpop.permute.xlu0 %2057
        %v2067 = vrot.slane %v2052, 4
        %v2068 = vsel %vm394, %v2067, %v2044
        %v2069 = vrot.slane %v2044, 4
        %v2070 = vsel %vm394, %v2052, %v2069
        %v2072 = vunpack.c.l.s4 1983009808
        %v2073 = vunpack.c.0.s8 %v2072
        %v2074 = vperm.slane %v2068, %v2073
        %v2076 = vunpack.c.l.s4 1983009808
        %v2077 = vunpack.c.0.s8 %v2076
        %v2078 = vperm.slane %v2070, %v2077
        %v2079 = vrot.slane %v2056, 4
        %v2080 = vsel %vm394, %v2079, %v2048
        %v2081 = vrot.slane %v2048, 4
        %v2082 = vsel %vm394, %v2056, %v2081
        %v2084 = vunpack.c.l.s4 1983009808
        %v2085 = vunpack.c.0.s8 %v2084
        %v2086 = vperm.slane %v2080, %v2085
        %v2088 = vunpack.c.l.s4 1983009808
        %v2089 = vunpack.c.0.s8 %v2088
        %v2090 = vperm.slane %v2082, %v2089
        %v2091 = vrot.slane %v2086, 4
        %v2092 = vsel %vm394, %v2091, %v2074
        %v2093 = vrot.slane %v2074, 4
        %v2094 = vsel %vm394, %v2086, %v2093
        %v2096 = vunpack.c.l.s4 1934713408
        %v2097 = vunpack.c.0.s8 %v2096
        %v2098 = vperm.slane %v2092, %v2097
        %v2100 = vunpack.c.l.s4 1934713408
        %v2101 = vunpack.c.0.s8 %v2100
        %v2102 = vperm.slane %v2094, %v2101
        %v2103 = vrot.slane %v2090, 4
        %v2104 = vsel %vm394, %v2103, %v2078
        %v2105 = vrot.slane %v2078, 4
        %v2106 = vsel %vm394, %v2090, %v2105
        %v2108 = vunpack.c.l.s4 1934713408
        %v2109 = vunpack.c.0.s8 %v2108
        %v2110 = vperm.slane %v2104, %v2109
        %v2112 = vunpack.c.l.s4 1934713408
        %v2113 = vunpack.c.0.s8 %v2112
        %v2114 = vperm.slane %v2106, %v2113
        %v2115 = vrot.slane %v2098, 4
        %v2116 = vsel %vm394, 0.0, %v2115
        %v2117 = vrot.slane %v2102, 4
        %v2118 = vsel %vm394, 0.0, %v2117
        %v2119 = vrot.slane %v2110, 4
        %v2120 = vsel %vm394, 0.0, %v2119
        %v2121 = vrot.slane %v2114, 4
        %v2122 = vsel %vm394, 0.0, %v2121
        %v2123 = vrot.slane %v2054, 4
        %v2124 = vsel %vm394, %v2123, %v2046
        %v2125 = vrot.slane %v2046, 4
        %v2126 = vsel %vm394, %v2054, %v2125
        %v2128 = vunpack.c.l.s4 1983009808
        %v2129 = vunpack.c.0.s8 %v2128
        %v2130 = vperm.slane %v2124, %v2129
        %v2132 = vunpack.c.l.s4 1983009808
        %v2133 = vunpack.c.0.s8 %v2132
        %v2134 = vperm.slane %v2126, %v2133
        %v2135 = vrot.slane %v2058, 4
        %v2136 = vsel %vm394, %v2135, %v2050
        %v2137 = vrot.slane %v2050, 4
        %v2138 = vsel %vm394, %v2058, %v2137
        %v2140 = vunpack.c.l.s4 1983009808
        %v2141 = vunpack.c.0.s8 %v2140
        %v2142 = vperm.slane %v2136, %v2141
        %v2144 = vunpack.c.l.s4 1983009808
        %v2145 = vunpack.c.0.s8 %v2144
        %v2146 = vperm.slane %v2138, %v2145
        %v2147 = vrot.slane %v2142, 4
        %v2148 = vsel %vm394, %v2147, %v2130
        %v2149 = vrot.slane %v2130, 4
        %v2150 = vsel %vm394, %v2142, %v2149
        %v2152 = vunpack.c.l.s4 1934713408
        %v2153 = vunpack.c.0.s8 %v2152
        %v2154 = vperm.slane %v2148, %v2153
        %v2156 = vunpack.c.l.s4 1934713408
        %v2157 = vunpack.c.0.s8 %v2156
        %v2158 = vperm.slane %v2150, %v2157
        %v2159 = vrot.slane %v2146, 4
        %v2160 = vsel %vm394, %v2159, %v2134
        %v2161 = vrot.slane %v2134, 4
        %v2162 = vsel %vm394, %v2146, %v2161
        %v2164 = vunpack.c.l.s4 1934713408
        %v2165 = vunpack.c.0.s8 %v2164
        %v2166 = vperm.slane %v2160, %v2165
        %v2168 = vunpack.c.l.s4 1934713408
        %v2169 = vunpack.c.0.s8 %v2168
        %v2170 = vperm.slane %v2162, %v2169
        %v2171 = vrot.slane %v2154, 4
        %v2172 = vsel %vm394, 0.0, %v2171
        %v2173 = vrot.slane %v2158, 4
        %v2174 = vsel %vm394, 0.0, %v2173
        %v2175 = vrot.slane %v2166, 4
        %v2176 = vsel %vm394, 0.0, %v2175
        %v2177 = vrot.slane %v2170, 4
        %v2178 = vsel %vm394, 0.0, %v2177
        %2180 = vrot.lane.b32.xlu0 %v2116, 16
        %v2181 = vpop.permute.xlu0 %2180
        %2184 = vrot.lane.b32.xlu0 %v2102, 32
        %v2185 = vpop.permute.xlu0 %2184
        %2188 = vrot.lane.b32.xlu0 %v2118, 48
        %v2189 = vpop.permute.xlu0 %2188
        %2192 = vrot.lane.b32.xlu0 %v2110, 64
        %v2193 = vpop.permute.xlu0 %2192
        %2196 = vrot.lane.b32.xlu0 %v2120, 80
        %v2197 = vpop.permute.xlu0 %2196
        %2200 = vrot.lane.b32.xlu0 %v2114, 96
        %v2201 = vpop.permute.xlu0 %2200
        %2204 = vrot.lane.b32.xlu0 %v2122, 112
        %v2205 = vpop.permute.xlu0 %2204
        %2208 = vrot.lane.b32.xlu0 %v2172, 16
        %v2209 = vpop.permute.xlu0 %2208
        %2212 = vrot.lane.b32.xlu0 %v2158, 32
        %v2213 = vpop.permute.xlu0 %2212
        %2216 = vrot.lane.b32.xlu0 %v2174, 48
        %v2217 = vpop.permute.xlu0 %2216
        %2220 = vrot.lane.b32.xlu0 %v2166, 64
        %v2221 = vpop.permute.xlu0 %2220
        %2224 = vrot.lane.b32.xlu0 %v2176, 80
        %v2225 = vpop.permute.xlu0 %2224
        %2228 = vrot.lane.b32.xlu0 %v2170, 96
        %v2229 = vpop.permute.xlu0 %2228
        %2232 = vrot.lane.b32.xlu0 %v2178, 112
        %v2233 = vpop.permute.xlu0 %2232
        %v2235 = vsel %vm562, %v2098, %v2181
        %v2236 = vsel %vm564, %v2235, %v2185
        %v2237 = vsel %vm566, %v2236, %v2189
        %v2238 = vsel %vm568, %v2237, %v2193
        %v2239 = vsel %vm570, %v2238, %v2197
        %v2240 = vsel %vm572, %v2239, %v2201
        %v2241 = vsel %vm574, %v2240, %v2205
        %v2242 = vsel %vm562, %v2154, %v2209
        %v2243 = vsel %vm564, %v2242, %v2213
        %v2244 = vsel %vm566, %v2243, %v2217
        %v2245 = vsel %vm568, %v2244, %v2221
        %v2246 = vsel %vm570, %v2245, %v2225
        %v2247 = vsel %vm572, %v2246, %v2229
        %v2248 = vsel %vm574, %v2247, %v2233
        %v2251 = vrot.slane %v785, 4
        %v2252 = vrot.slane %v792, 4
        %v2257 = vrot.slane %v1206, 4
        %v2258 = vrot.slane %v1213, 4
        %v2263 = vrot.slane %v1618, 4
        %v2264 = vrot.slane %v1625, 4
        %v2269 = vrot.slane %v2035, 4
        %v2270 = vrot.slane %v2042, 4
        %vm2273 = vcmask 1043456
        %v2274 = vsel %vm2273, %v575, %v2251
        %v2275 = vsel %vm2273, %v582, %v2252
        %v2276 = vsel %vm2273, %v991, %v2257
        %v2277 = vsel %vm2273, %v998, %v2258
        %v2278 = vsel %vm2273, %v1412, %v2263
        %v2279 = vsel %vm2273, %v1419, %v2264
        %v2280 = vsel %vm2273, %v1829, %v2269
        %v2281 = vsel %vm2273, %v1836, %v2270
        %v2282 = vld [vmem:[%s1] sm:$0xf]
        %v2283 = vpack.c.bf16 %v2276, %v2274
        %v2284 = vpack.c.bf16 %v2277, %v2275
        %v2285 = vpack.c.bf16 %v2280, %v2278
        %v2286 = vpack.c.bf16 %v2281, %v2279
        %v2287 = vpack.c.bf16 %v2241, %v2241
        %v2288 = vpack.c.bf16 %v2248, %v2248
        %2290 = vset.pattern.permute.xlu0 2
        %2291 = vperm.xlu0 %2290, %v221
        %v2292 = vpop.permute.xlu0 %2291
        %vm2294 = vcmask 293888
        %v2296 = vsel %vm2294, %v2282, 0
        %vm2298 = vcmask 1041408
        %v2300 = vsel %vm2298, %v2287, 0
        %v2303 = vsel %vm2298, %v2288, 0
        %2305 = vmatpush.bf16.msra.mxu0 0
        %2306 = vmatpush.bf16.msra.mxu0 0
        %2307 = vmatpush.bf16.msra.mxu0 0
        %2308 = vmatpush.bf16.msra.mxu0 0
        %2309 = vmatpush.bf16.msra.mxu0 0
        %2310 = vmatpush.bf16.msra.mxu0 %v2300
        %2311 = vmatpush.bf16.msra.mxu0 %v2285
        %2312 = vmatpush.bf16.msra.mxu0 %v2283
        %2313 = vmatmul.bf16.gmra.mxu0 %v2296
        %v2314 = vpop.f32.mrf.mxu0
        %v2315 = vadd.f32 %v2292, %v2314
        %v2316 = vpop.f32.mrf.mxu0
        %2317 = vdwg.mxu0
        %2318 = vmatpush.bf16.msra.mxu0 0
        %2319 = vmatpush.bf16.msra.mxu0 0
        %2320 = vmatpush.bf16.msra.mxu0 0
        %2321 = vmatpush.bf16.msra.mxu0 0
        %2322 = vmatpush.bf16.msra.mxu0 0
        %2323 = vmatpush.bf16.msra.mxu0 %v2303
        %2324 = vmatpush.bf16.msra.mxu0 %v2286
        %2325 = vmatpush.bf16.msra.mxu0 %v2284
        %2326 = vmatmul.bf16.gmra.mxu0 %v2296
        %v2327 = vpop.f32.mrf.mxu0
        %v2328 = vadd.f32 %v2292, %v2327
        %v2329 = vpop.f32.mrf.mxu0
        %2330 = vdwg.mxu0
        %s2331 = smul.u32 %s19, 2
        %s2332 = smul.u32 %s2331, 2
        %s2333 = smul.addr %s2332, 8
        %s2334 = scalar_lea.vmem [#allocation2], %s2333
        %2335 = vst [vmem:[%s2334] sm:$0xff] %v2315
        %2336 = vst [vmem:[%s2334 + $0x8] sm:$0xff] %v2328
        %v2337 = vadd.f32 %v2315, %v2328
        %2338 = vadd.xlane.f32.xlu0 %v2337
        %v2339 = vpop.xlane.xlu0 %2338
        %v2340 = vadd.f32 %v2339, 0.0
        %v2341 = vmul.f32 %v2315, %v2315
        %v2342 = vmul.f32 %v2328, %v2328
        %v2343 = vadd.f32 %v2341, %v2342
        %2344 = vadd.xlane.f32.xlu0 %v2343
        %v2345 = vpop.xlane.xlu0 %2344
        %v2346 = vadd.f32 %v2345, 0.0
        %s2347 = scalar_lea.vmem %s197, 32
        %v2348 = vld [vmem:[%s2347] sm:$0xf]
        %v2349 = vld [vmem:[%s2347 + $0x4] sm:$0xf]
        %v2350 = vld [vmem:[%s2347 + $0x8] sm:$0xf]
        %v2351 = vld [vmem:[%s2347 + $0xc] sm:$0xf]
        %v2352 = vld [vmem:[%s2347 + $0x10] sm:$0xf]
        %v2353 = vld [vmem:[%s2347 + $0x14] sm:$0xf]
        %v2354 = vld [vmem:[%s2347 + $0x18] sm:$0xf]
        %v2355 = vld [vmem:[%s2347 + $0x1c] sm:$0xf]
        %v2356 = vunpack.c.l.bf16 %v2348
        %v2357 = vunpack.c.l.bf16 %v2349
        %v2358 = vunpack.c.l.bf16 %v2350
        %v2359 = vunpack.c.l.bf16 %v2351
        %v2360 = vunpack.c.l.bf16 %v2352
        %v2361 = vunpack.c.l.bf16 %v2353
        %v2362 = vunpack.c.l.bf16 %v2354
        %v2363 = vunpack.c.l.bf16 %v2355
        %2372 = vrot.lane.b32.xlu0 %v2356, 127
        %v2373 = vpop.permute.xlu0 %2372
        %2374 = vrot.lane.b32.xlu0 %v2357, 127
        %v2375 = vpop.permute.xlu0 %2374
        %2376 = vrot.lane.b32.xlu0 %v2358, 127
        %v2377 = vpop.permute.xlu0 %2376
        %2378 = vrot.lane.b32.xlu0 %v2359, 127
        %v2379 = vpop.permute.xlu0 %2378
        %2380 = vrot.lane.b32.xlu0 %v2360, 127
        %v2381 = vpop.permute.xlu0 %2380
        %2382 = vrot.lane.b32.xlu0 %v2361, 127
        %v2383 = vpop.permute.xlu0 %2382
        %2384 = vrot.lane.b32.xlu0 %v2362, 127
        %v2385 = vpop.permute.xlu0 %2384
        %2386 = vrot.lane.b32.xlu0 %v2363, 127
        %v2387 = vpop.permute.xlu0 %2386
        %2396 = vrot.lane.b32.xlu0 %v2356, 1
        %v2397 = vpop.permute.xlu0 %2396
        %2398 = vrot.lane.b32.xlu0 %v2357, 1
        %v2399 = vpop.permute.xlu0 %2398
        %2400 = vrot.lane.b32.xlu0 %v2358, 1
        %v2401 = vpop.permute.xlu0 %2400
        %2402 = vrot.lane.b32.xlu0 %v2359, 1
        %v2403 = vpop.permute.xlu0 %2402
        %2404 = vrot.lane.b32.xlu0 %v2360, 1
        %v2405 = vpop.permute.xlu0 %2404
        %2406 = vrot.lane.b32.xlu0 %v2361, 1
        %v2407 = vpop.permute.xlu0 %2406
        %2408 = vrot.lane.b32.xlu0 %v2362, 1
        %v2409 = vpop.permute.xlu0 %2408
        %2410 = vrot.lane.b32.xlu0 %v2363, 1
        %v2411 = vpop.permute.xlu0 %2410
        %2420 = vrot.lane.b32.xlu0 %v2356, 3
        %v2421 = vpop.permute.xlu0 %2420
        %2422 = vrot.lane.b32.xlu0 %v2357, 3
        %v2423 = vpop.permute.xlu0 %2422
        %2424 = vrot.lane.b32.xlu0 %v2358, 3
        %v2425 = vpop.permute.xlu0 %2424
        %2426 = vrot.lane.b32.xlu0 %v2359, 3
        %v2427 = vpop.permute.xlu0 %2426
        %2428 = vrot.lane.b32.xlu0 %v2360, 3
        %v2429 = vpop.permute.xlu0 %2428
        %2430 = vrot.lane.b32.xlu0 %v2361, 3
        %v2431 = vpop.permute.xlu0 %2430
        %2432 = vrot.lane.b32.xlu0 %v2362, 3
        %v2433 = vpop.permute.xlu0 %2432
        %2434 = vrot.lane.b32.xlu0 %v2363, 3
        %v2435 = vpop.permute.xlu0 %2434
        %v2444 = vsel %vm318, %v2373, %v2397
        %v2445 = vsel %vm318, %v2375, %v2399
        %v2446 = vsel %vm318, %v2377, %v2401
        %v2447 = vsel %vm318, %v2379, %v2403
        %v2448 = vsel %vm318, %v2381, %v2405
        %v2449 = vsel %vm318, %v2383, %v2407
        %v2450 = vsel %vm318, %v2385, %v2409
        %v2451 = vsel %vm318, %v2387, %v2411
        %v2452 = vsel %vm327, %v2444, %v2421
        %v2453 = vsel %vm327, %v2445, %v2423
        %v2454 = vsel %vm327, %v2446, %v2425
        %v2455 = vsel %vm327, %v2447, %v2427
        %v2456 = vsel %vm327, %v2448, %v2429
        %v2457 = vsel %vm327, %v2449, %v2431
        %v2458 = vsel %vm327, %v2450, %v2433
        %v2459 = vsel %vm327, %v2451, %v2435
        %v2464 = vrot.slane %v2452, 1
        %v2465 = vrot.slane %v2454, 1
        %v2466 = vrot.slane %v2456, 1
        %v2467 = vrot.slane %v2458, 1
        %v2476 = vrot.slane %v2452, 7
        %v2477 = vrot.slane %v2453, 7
        %v2478 = vsel %vm352, %v2476, %v2477
        %v2479 = vrot.slane %v2454, 7
        %v2480 = vrot.slane %v2455, 7
        %v2481 = vsel %vm352, %v2479, %v2480
        %v2482 = vrot.slane %v2456, 7
        %v2483 = vrot.slane %v2457, 7
        %v2484 = vsel %vm352, %v2482, %v2483
        %v2485 = vrot.slane %v2458, 7
        %v2486 = vrot.slane %v2459, 7
        %v2487 = vsel %vm352, %v2485, %v2486
        %v2500 = vrot.slane %v2453, 5
        %v2501 = vrot.slane %v2455, 5
        %v2502 = vrot.slane %v2457, 5
        %v2503 = vrot.slane %v2459, 5
        %v2508 = vsel %vm352, %v2464, %v2476
        %v2509 = vsel %vm352, %v2465, %v2479
        %v2510 = vsel %vm352, %v2466, %v2482
        %v2511 = vsel %vm352, %v2467, %v2485
        %v2512 = vsel %vm352, %v2477, %v2500
        %v2513 = vsel %vm352, %v2480, %v2501
        %v2514 = vsel %vm352, %v2483, %v2502
        %v2515 = vsel %vm352, %v2486, %v2503
        %v2516 = vrot.slane %v2510, 4
        %v2517 = vsel %vm394, %v2516, %v2508
        %v2518 = vrot.slane %v2508, 4
        %v2519 = vsel %vm394, %v2510, %v2518
        %v2521 = vunpack.c.l.s4 1983009808
        %v2522 = vunpack.c.0.s8 %v2521
        %v2523 = vperm.slane %v2517, %v2522
        %v2525 = vunpack.c.l.s4 1983009808
        %v2526 = vunpack.c.0.s8 %v2525
        %v2527 = vperm.slane %v2519, %v2526
        %v2528 = vrot.slane %v2511, 4
        %v2529 = vsel %vm394, %v2528, %v2509
        %v2530 = vrot.slane %v2509, 4
        %v2531 = vsel %vm394, %v2511, %v2530
        %v2533 = vunpack.c.l.s4 1983009808
        %v2534 = vunpack.c.0.s8 %v2533
        %v2535 = vperm.slane %v2529, %v2534
        %v2537 = vunpack.c.l.s4 1983009808
        %v2538 = vunpack.c.0.s8 %v2537
        %v2539 = vperm.slane %v2531, %v2538
        %v2540 = vrot.slane %v2535, 4
        %v2541 = vsel %vm394, %v2540, %v2523
        %v2542 = vrot.slane %v2523, 4
        %v2543 = vsel %vm394, %v2535, %v2542
        %v2545 = vunpack.c.l.s4 1934713408
        %v2546 = vunpack.c.0.s8 %v2545
        %v2547 = vperm.slane %v2541, %v2546
        %v2549 = vunpack.c.l.s4 1934713408
        %v2550 = vunpack.c.0.s8 %v2549
        %v2551 = vperm.slane %v2543, %v2550
        %v2552 = vrot.slane %v2539, 4
        %v2553 = vsel %vm394, %v2552, %v2527
        %v2554 = vrot.slane %v2527, 4
        %v2555 = vsel %vm394, %v2539, %v2554
        %v2557 = vunpack.c.l.s4 1934713408
        %v2558 = vunpack.c.0.s8 %v2557
        %v2559 = vperm.slane %v2553, %v2558
        %v2561 = vunpack.c.l.s4 1934713408
        %v2562 = vunpack.c.0.s8 %v2561
        %v2563 = vperm.slane %v2555, %v2562
        %v2564 = vrot.slane %v2547, 4
        %v2565 = vsel %vm394, 0.0, %v2564
        %v2566 = vrot.slane %v2551, 4
        %v2567 = vsel %vm394, 0.0, %v2566
        %v2568 = vrot.slane %v2559, 4
        %v2569 = vsel %vm394, 0.0, %v2568
        %v2570 = vrot.slane %v2563, 4
        %v2571 = vsel %vm394, 0.0, %v2570
        %v2572 = vrot.slane %v2484, 4
        %v2573 = vsel %vm394, %v2572, %v2478
        %v2574 = vrot.slane %v2478, 4
        %v2575 = vsel %vm394, %v2484, %v2574
        %v2577 = vunpack.c.l.s4 1983009808
        %v2578 = vunpack.c.0.s8 %v2577
        %v2579 = vperm.slane %v2573, %v2578
        %v2581 = vunpack.c.l.s4 1983009808
        %v2582 = vunpack.c.0.s8 %v2581
        %v2583 = vperm.slane %v2575, %v2582
        %v2584 = vrot.slane %v2487, 4
        %v2585 = vsel %vm394, %v2584, %v2481
        %v2586 = vrot.slane %v2481, 4
        %v2587 = vsel %vm394, %v2487, %v2586
        %v2589 = vunpack.c.l.s4 1983009808
        %v2590 = vunpack.c.0.s8 %v2589
        %v2591 = vperm.slane %v2585, %v2590
        %v2593 = vunpack.c.l.s4 1983009808
        %v2594 = vunpack.c.0.s8 %v2593
        %v2595 = vperm.slane %v2587, %v2594
        %v2596 = vrot.slane %v2591, 4
        %v2597 = vsel %vm394, %v2596, %v2579
        %v2598 = vrot.slane %v2579, 4
        %v2599 = vsel %vm394, %v2591, %v2598
        %v2601 = vunpack.c.l.s4 1934713408
        %v2602 = vunpack.c.0.s8 %v2601
        %v2603 = vperm.slane %v2597, %v2602
        %v2605 = vunpack.c.l.s4 1934713408
        %v2606 = vunpack.c.0.s8 %v2605
        %v2607 = vperm.slane %v2599, %v2606
        %v2608 = vrot.slane %v2595, 4
        %v2609 = vsel %vm394, %v2608, %v2583
        %v2610 = vrot.slane %v2583, 4
        %v2611 = vsel %vm394, %v2595, %v2610
        %v2613 = vunpack.c.l.s4 1934713408
        %v2614 = vunpack.c.0.s8 %v2613
        %v2615 = vperm.slane %v2609, %v2614
        %v2617 = vunpack.c.l.s4 1934713408
        %v2618 = vunpack.c.0.s8 %v2617
        %v2619 = vperm.slane %v2611, %v2618
        %v2620 = vrot.slane %v2603, 4
        %v2621 = vsel %vm394, 0.0, %v2620
        %v2622 = vrot.slane %v2607, 4
        %v2623 = vsel %vm394, 0.0, %v2622
        %v2624 = vrot.slane %v2615, 4
        %v2625 = vsel %vm394, 0.0, %v2624
        %v2626 = vrot.slane %v2619, 4
        %v2627 = vsel %vm394, 0.0, %v2626
        %2629 = vrot.lane.b32.xlu0 %v2565, 16
        %v2630 = vpop.permute.xlu0 %2629
        %2633 = vrot.lane.b32.xlu0 %v2551, 32
        %v2634 = vpop.permute.xlu0 %2633
        %2637 = vrot.lane.b32.xlu0 %v2567, 48
        %v2638 = vpop.permute.xlu0 %2637
        %2641 = vrot.lane.b32.xlu0 %v2559, 64
        %v2642 = vpop.permute.xlu0 %2641
        %2645 = vrot.lane.b32.xlu0 %v2569, 80
        %v2646 = vpop.permute.xlu0 %2645
        %2649 = vrot.lane.b32.xlu0 %v2563, 96
        %v2650 = vpop.permute.xlu0 %2649
        %2653 = vrot.lane.b32.xlu0 %v2571, 112
        %v2654 = vpop.permute.xlu0 %2653
        %2657 = vrot.lane.b32.xlu0 %v2621, 16
        %v2658 = vpop.permute.xlu0 %2657
        %2661 = vrot.lane.b32.xlu0 %v2607, 32
        %v2662 = vpop.permute.xlu0 %2661
        %2665 = vrot.lane.b32.xlu0 %v2623, 48
        %v2666 = vpop.permute.xlu0 %2665
        %2669 = vrot.lane.b32.xlu0 %v2615, 64
        %v2670 = vpop.permute.xlu0 %2669
        %2673 = vrot.lane.b32.xlu0 %v2625, 80
        %v2674 = vpop.permute.xlu0 %2673
        %2677 = vrot.lane.b32.xlu0 %v2619, 96
        %v2678 = vpop.permute.xlu0 %2677
        %2681 = vrot.lane.b32.xlu0 %v2627, 112
        %v2682 = vpop.permute.xlu0 %2681
        %v2684 = vsel %vm562, %v2547, %v2630
        %v2685 = vsel %vm564, %v2684, %v2634
        %v2686 = vsel %vm566, %v2685, %v2638
        %v2687 = vsel %vm568, %v2686, %v2642
        %v2688 = vsel %vm570, %v2687, %v2646
        %v2689 = vsel %vm572, %v2688, %v2650
        %v2690 = vsel %vm574, %v2689, %v2654
        %v2691 = vsel %vm562, %v2603, %v2658
        %v2692 = vsel %vm564, %v2691, %v2662
        %v2693 = vsel %vm566, %v2692, %v2666
        %v2694 = vsel %vm568, %v2693, %v2670
        %v2695 = vsel %vm570, %v2694, %v2674
        %v2696 = vsel %vm572, %v2695, %v2678
        %v2697 = vsel %vm574, %v2696, %v2682
        %2702 = vrot.lane.b32.xlu0 %v2508, 127
        %v2703 = vpop.permute.xlu0 %2702
        %2704 = vrot.lane.b32.xlu0 %v2478, 127
        %v2705 = vpop.permute.xlu0 %2704
        %2706 = vrot.lane.b32.xlu0 %v2509, 127
        %v2707 = vpop.permute.xlu0 %2706
        %2708 = vrot.lane.b32.xlu0 %v2481, 127
        %v2709 = vpop.permute.xlu0 %2708
        %2710 = vrot.lane.b32.xlu0 %v2510, 127
        %v2711 = vpop.permute.xlu0 %2710
        %2712 = vrot.lane.b32.xlu0 %v2484, 127
        %v2713 = vpop.permute.xlu0 %2712
        %2714 = vrot.lane.b32.xlu0 %v2511, 127
        %v2715 = vpop.permute.xlu0 %2714
        %2716 = vrot.lane.b32.xlu0 %v2487, 127
        %v2717 = vpop.permute.xlu0 %2716
        %v2726 = vrot.slane %v2711, 4
        %v2727 = vsel %vm394, %v2726, %v2703
        %v2728 = vrot.slane %v2703, 4
        %v2729 = vsel %vm394, %v2711, %v2728
        %v2731 = vunpack.c.l.s4 1983009808
        %v2732 = vunpack.c.0.s8 %v2731
        %v2733 = vperm.slane %v2727, %v2732
        %v2735 = vunpack.c.l.s4 1983009808
        %v2736 = vunpack.c.0.s8 %v2735
        %v2737 = vperm.slane %v2729, %v2736
        %v2738 = vrot.slane %v2715, 4
        %v2739 = vsel %vm394, %v2738, %v2707
        %v2740 = vrot.slane %v2707, 4
        %v2741 = vsel %vm394, %v2715, %v2740
        %v2743 = vunpack.c.l.s4 1983009808
        %v2744 = vunpack.c.0.s8 %v2743
        %v2745 = vperm.slane %v2739, %v2744
        %v2747 = vunpack.c.l.s4 1983009808
        %v2748 = vunpack.c.0.s8 %v2747
        %v2749 = vperm.slane %v2741, %v2748
        %v2750 = vrot.slane %v2745, 4
        %v2751 = vsel %vm394, %v2750, %v2733
        %v2752 = vrot.slane %v2733, 4
        %v2753 = vsel %vm394, %v2745, %v2752
        %v2755 = vunpack.c.l.s4 1934713408
        %v2756 = vunpack.c.0.s8 %v2755
        %v2757 = vperm.slane %v2751, %v2756
        %v2759 = vunpack.c.l.s4 1934713408
        %v2760 = vunpack.c.0.s8 %v2759
        %v2761 = vperm.slane %v2753, %v2760
        %v2762 = vrot.slane %v2749, 4
        %v2763 = vsel %vm394, %v2762, %v2737
        %v2764 = vrot.slane %v2737, 4
        %v2765 = vsel %vm394, %v2749, %v2764
        %v2767 = vunpack.c.l.s4 1934713408
        %v2768 = vunpack.c.0.s8 %v2767
        %v2769 = vperm.slane %v2763, %v2768
        %v2771 = vunpack.c.l.s4 1934713408
        %v2772 = vunpack.c.0.s8 %v2771
        %v2773 = vperm.slane %v2765, %v2772
        %v2774 = vrot.slane %v2757, 4
        %v2775 = vsel %vm394, 0.0, %v2774
        %v2776 = vrot.slane %v2761, 4
        %v2777 = vsel %vm394, 0.0, %v2776
        %v2778 = vrot.slane %v2769, 4
        %v2779 = vsel %vm394, 0.0, %v2778
        %v2780 = vrot.slane %v2773, 4
        %v2781 = vsel %vm394, 0.0, %v2780
        %v2782 = vrot.slane %v2713, 4
        %v2783 = vsel %vm394, %v2782, %v2705
        %v2784 = vrot.slane %v2705, 4
        %v2785 = vsel %vm394, %v2713, %v2784
        %v2787 = vunpack.c.l.s4 1983009808
        %v2788 = vunpack.c.0.s8 %v2787
        %v2789 = vperm.slane %v2783, %v2788
        %v2791 = vunpack.c.l.s4 1983009808
        %v2792 = vunpack.c.0.s8 %v2791
        %v2793 = vperm.slane %v2785, %v2792
        %v2794 = vrot.slane %v2717, 4
        %v2795 = vsel %vm394, %v2794, %v2709
        %v2796 = vrot.slane %v2709, 4
        %v2797 = vsel %vm394, %v2717, %v2796
        %v2799 = vunpack.c.l.s4 1983009808
        %v2800 = vunpack.c.0.s8 %v2799
        %v2801 = vperm.slane %v2795, %v2800
        %v2803 = vunpack.c.l.s4 1983009808
        %v2804 = vunpack.c.0.s8 %v2803
        %v2805 = vperm.slane %v2797, %v2804
        %v2806 = vrot.slane %v2801, 4
        %v2807 = vsel %vm394, %v2806, %v2789
        %v2808 = vrot.slane %v2789, 4
        %v2809 = vsel %vm394, %v2801, %v2808
        %v2811 = vunpack.c.l.s4 1934713408
        %v2812 = vunpack.c.0.s8 %v2811
        %v2813 = vperm.slane %v2807, %v2812
        %v2815 = vunpack.c.l.s4 1934713408
        %v2816 = vunpack.c.0.s8 %v2815
        %v2817 = vperm.slane %v2809, %v2816
        %v2818 = vrot.slane %v2805, 4
        %v2819 = vsel %vm394, %v2818, %v2793
        %v2820 = vrot.slane %v2793, 4
        %v2821 = vsel %vm394, %v2805, %v2820
        %v2823 = vunpack.c.l.s4 1934713408
        %v2824 = vunpack.c.0.s8 %v2823
        %v2825 = vperm.slane %v2819, %v2824
        %v2827 = vunpack.c.l.s4 1934713408
        %v2828 = vunpack.c.0.s8 %v2827
        %v2829 = vperm.slane %v2821, %v2828
        %v2830 = vrot.slane %v2813, 4
        %v2831 = vsel %vm394, 0.0, %v2830
        %v2832 = vrot.slane %v2817, 4
        %v2833 = vsel %vm394, 0.0, %v2832
        %v2834 = vrot.slane %v2825, 4
        %v2835 = vsel %vm394, 0.0, %v2834
        %v2836 = vrot.slane %v2829, 4
        %v2837 = vsel %vm394, 0.0, %v2836
        %2839 = vrot.lane.b32.xlu0 %v2775, 16
        %v2840 = vpop.permute.xlu0 %2839
        %2843 = vrot.lane.b32.xlu0 %v2761, 32
        %v2844 = vpop.permute.xlu0 %2843
        %2847 = vrot.lane.b32.xlu0 %v2777, 48
        %v2848 = vpop.permute.xlu0 %2847
        %2851 = vrot.lane.b32.xlu0 %v2769, 64
        %v2852 = vpop.permute.xlu0 %2851
        %2855 = vrot.lane.b32.xlu0 %v2779, 80
        %v2856 = vpop.permute.xlu0 %2855
        %2859 = vrot.lane.b32.xlu0 %v2773, 96
        %v2860 = vpop.permute.xlu0 %2859
        %2863 = vrot.lane.b32.xlu0 %v2781, 112
        %v2864 = vpop.permute.xlu0 %2863
        %2867 = vrot.lane.b32.xlu0 %v2831, 16
        %v2868 = vpop.permute.xlu0 %2867
        %2871 = vrot.lane.b32.xlu0 %v2817, 32
        %v2872 = vpop.permute.xlu0 %2871
        %2875 = vrot.lane.b32.xlu0 %v2833, 48
        %v2876 = vpop.permute.xlu0 %2875
        %2879 = vrot.lane.b32.xlu0 %v2825, 64
        %v2880 = vpop.permute.xlu0 %2879
        %2883 = vrot.lane.b32.xlu0 %v2835, 80
        %v2884 = vpop.permute.xlu0 %2883
        %2887 = vrot.lane.b32.xlu0 %v2829, 96
        %v2888 = vpop.permute.xlu0 %2887
        %2891 = vrot.lane.b32.xlu0 %v2837, 112
        %v2892 = vpop.permute.xlu0 %2891
        %v2894 = vsel %vm562, %v2757, %v2840
        %v2895 = vsel %vm564, %v2894, %v2844
        %v2896 = vsel %vm566, %v2895, %v2848
        %v2897 = vsel %vm568, %v2896, %v2852
        %v2898 = vsel %vm570, %v2897, %v2856
        %v2899 = vsel %vm572, %v2898, %v2860
        %v2900 = vsel %vm574, %v2899, %v2864
        %v2901 = vsel %vm562, %v2813, %v2868
        %v2902 = vsel %vm564, %v2901, %v2872
        %v2903 = vsel %vm566, %v2902, %v2876
        %v2904 = vsel %vm568, %v2903, %v2880
        %v2905 = vsel %vm570, %v2904, %v2884
        %v2906 = vsel %vm572, %v2905, %v2888
        %v2907 = vsel %vm574, %v2906, %v2892
        %2908 = vrot.lane.b32.xlu0 %v2508, 126
        %v2909 = vpop.permute.xlu0 %2908
        %2910 = vrot.lane.b32.xlu0 %v2478, 126
        %v2911 = vpop.permute.xlu0 %2910
        %2912 = vrot.lane.b32.xlu0 %v2509, 126
        %v2913 = vpop.permute.xlu0 %2912
        %2914 = vrot.lane.b32.xlu0 %v2481, 126
        %v2915 = vpop.permute.xlu0 %2914
        %2916 = vrot.lane.b32.xlu0 %v2510, 126
        %v2917 = vpop.permute.xlu0 %2916
        %2918 = vrot.lane.b32.xlu0 %v2484, 126
        %v2919 = vpop.permute.xlu0 %2918
        %2920 = vrot.lane.b32.xlu0 %v2511, 126
        %v2921 = vpop.permute.xlu0 %2920
        %2922 = vrot.lane.b32.xlu0 %v2487, 126
        %v2923 = vpop.permute.xlu0 %2922
        %v2932 = vrot.slane %v2917, 4
        %v2933 = vsel %vm394, %v2932, %v2909
        %v2934 = vrot.slane %v2909, 4
        %v2935 = vsel %vm394, %v2917, %v2934
        %v2937 = vunpack.c.l.s4 1983009808
        %v2938 = vunpack.c.0.s8 %v2937
        %v2939 = vperm.slane %v2933, %v2938
        %v2941 = vunpack.c.l.s4 1983009808
        %v2942 = vunpack.c.0.s8 %v2941
        %v2943 = vperm.slane %v2935, %v2942
        %v2944 = vrot.slane %v2921, 4
        %v2945 = vsel %vm394, %v2944, %v2913
        %v2946 = vrot.slane %v2913, 4
        %v2947 = vsel %vm394, %v2921, %v2946
        %v2949 = vunpack.c.l.s4 1983009808
        %v2950 = vunpack.c.0.s8 %v2949
        %v2951 = vperm.slane %v2945, %v2950
        %v2953 = vunpack.c.l.s4 1983009808
        %v2954 = vunpack.c.0.s8 %v2953
        %v2955 = vperm.slane %v2947, %v2954
        %v2956 = vrot.slane %v2951, 4
        %v2957 = vsel %vm394, %v2956, %v2939
        %v2958 = vrot.slane %v2939, 4
        %v2959 = vsel %vm394, %v2951, %v2958
        %v2961 = vunpack.c.l.s4 1934713408
        %v2962 = vunpack.c.0.s8 %v2961
        %v2963 = vperm.slane %v2957, %v2962
        %v2965 = vunpack.c.l.s4 1934713408
        %v2966 = vunpack.c.0.s8 %v2965
        %v2967 = vperm.slane %v2959, %v2966
        %v2968 = vrot.slane %v2955, 4
        %v2969 = vsel %vm394, %v2968, %v2943
        %v2970 = vrot.slane %v2943, 4
        %v2971 = vsel %vm394, %v2955, %v2970
        %v2973 = vunpack.c.l.s4 1934713408
        %v2974 = vunpack.c.0.s8 %v2973
        %v2975 = vperm.slane %v2969, %v2974
        %v2977 = vunpack.c.l.s4 1934713408
        %v2978 = vunpack.c.0.s8 %v2977
        %v2979 = vperm.slane %v2971, %v2978
        %v2980 = vrot.slane %v2963, 4
        %v2981 = vsel %vm394, 0.0, %v2980
        %v2982 = vrot.slane %v2967, 4
        %v2983 = vsel %vm394, 0.0, %v2982
        %v2984 = vrot.slane %v2975, 4
        %v2985 = vsel %vm394, 0.0, %v2984
        %v2986 = vrot.slane %v2979, 4
        %v2987 = vsel %vm394, 0.0, %v2986
        %v2988 = vrot.slane %v2919, 4
        %v2989 = vsel %vm394, %v2988, %v2911
        %v2990 = vrot.slane %v2911, 4
        %v2991 = vsel %vm394, %v2919, %v2990
        %v2993 = vunpack.c.l.s4 1983009808
        %v2994 = vunpack.c.0.s8 %v2993
        %v2995 = vperm.slane %v2989, %v2994
        %v2997 = vunpack.c.l.s4 1983009808
        %v2998 = vunpack.c.0.s8 %v2997
        %v2999 = vperm.slane %v2991, %v2998
        %v3000 = vrot.slane %v2923, 4
        %v3001 = vsel %vm394, %v3000, %v2915
        %v3002 = vrot.slane %v2915, 4
        %v3003 = vsel %vm394, %v2923, %v3002
        %v3005 = vunpack.c.l.s4 1983009808
        %v3006 = vunpack.c.0.s8 %v3005
        %v3007 = vperm.slane %v3001, %v3006
        %v3009 = vunpack.c.l.s4 1983009808
        %v3010 = vunpack.c.0.s8 %v3009
        %v3011 = vperm.slane %v3003, %v3010
        %v3012 = vrot.slane %v3007, 4
        %v3013 = vsel %vm394, %v3012, %v2995
        %v3014 = vrot.slane %v2995, 4
        %v3015 = vsel %vm394, %v3007, %v3014
        %v3017 = vunpack.c.l.s4 1934713408
        %v3018 = vunpack.c.0.s8 %v3017
        %v3019 = vperm.slane %v3013, %v3018
        %v3021 = vunpack.c.l.s4 1934713408
        %v3022 = vunpack.c.0.s8 %v3021
        %v3023 = vperm.slane %v3015, %v3022
        %v3024 = vrot.slane %v3011, 4
        %v3025 = vsel %vm394, %v3024, %v2999
        %v3026 = vrot.slane %v2999, 4
        %v3027 = vsel %vm394, %v3011, %v3026
        %v3029 = vunpack.c.l.s4 1934713408
        %v3030 = vunpack.c.0.s8 %v3029
        %v3031 = vperm.slane %v3025, %v3030
        %v3033 = vunpack.c.l.s4 1934713408
        %v3034 = vunpack.c.0.s8 %v3033
        %v3035 = vperm.slane %v3027, %v3034
        %v3036 = vrot.slane %v3019, 4
        %v3037 = vsel %vm394, 0.0, %v3036
        %v3038 = vrot.slane %v3023, 4
        %v3039 = vsel %vm394, 0.0, %v3038
        %v3040 = vrot.slane %v3031, 4
        %v3041 = vsel %vm394, 0.0, %v3040
        %v3042 = vrot.slane %v3035, 4
        %v3043 = vsel %vm394, 0.0, %v3042
        %3045 = vrot.lane.b32.xlu0 %v2981, 16
        %v3046 = vpop.permute.xlu0 %3045
        %3049 = vrot.lane.b32.xlu0 %v2967, 32
        %v3050 = vpop.permute.xlu0 %3049
        %3053 = vrot.lane.b32.xlu0 %v2983, 48
        %v3054 = vpop.permute.xlu0 %3053
        %3057 = vrot.lane.b32.xlu0 %v2975, 64
        %v3058 = vpop.permute.xlu0 %3057
        %3061 = vrot.lane.b32.xlu0 %v2985, 80
        %v3062 = vpop.permute.xlu0 %3061
        %3065 = vrot.lane.b32.xlu0 %v2979, 96
        %v3066 = vpop.permute.xlu0 %3065
        %3069 = vrot.lane.b32.xlu0 %v2987, 112
        %v3070 = vpop.permute.xlu0 %3069
        %3073 = vrot.lane.b32.xlu0 %v3037, 16
        %v3074 = vpop.permute.xlu0 %3073
        %3077 = vrot.lane.b32.xlu0 %v3023, 32
        %v3078 = vpop.permute.xlu0 %3077
        %3081 = vrot.lane.b32.xlu0 %v3039, 48
        %v3082 = vpop.permute.xlu0 %3081
        %3085 = vrot.lane.b32.xlu0 %v3031, 64
        %v3086 = vpop.permute.xlu0 %3085
        %3089 = vrot.lane.b32.xlu0 %v3041, 80
        %v3090 = vpop.permute.xlu0 %3089
        %3093 = vrot.lane.b32.xlu0 %v3035, 96
        %v3094 = vpop.permute.xlu0 %3093
        %3097 = vrot.lane.b32.xlu0 %v3043, 112
        %v3098 = vpop.permute.xlu0 %3097
        %v3100 = vsel %vm562, %v2963, %v3046
        %v3101 = vsel %vm564, %v3100, %v3050
        %v3102 = vsel %vm566, %v3101, %v3054
        %v3103 = vsel %vm568, %v3102, %v3058
        %v3104 = vsel %vm570, %v3103, %v3062
        %v3105 = vsel %vm572, %v3104, %v3066
        %v3106 = vsel %vm574, %v3105, %v3070
        %v3107 = vsel %vm562, %v3019, %v3074
        %v3108 = vsel %vm564, %v3107, %v3078
        %v3109 = vsel %vm566, %v3108, %v3082
        %v3110 = vsel %vm568, %v3109, %v3086
        %v3111 = vsel %vm570, %v3110, %v3090
        %v3112 = vsel %vm572, %v3111, %v3094
        %v3113 = vsel %vm574, %v3112, %v3098
        %v3118 = vrot.slane %v2508, 1
        %v3119 = vrot.slane %v2478, 1
        %v3120 = vsel %vm1003, %v3118, %v3119
        %v3121 = vrot.slane %v2512, 1
        %v3122 = vsel %vm1003, %v3119, %v3121
        %v3123 = vrot.slane %v2509, 1
        %v3124 = vrot.slane %v2481, 1
        %v3125 = vsel %vm1003, %v3123, %v3124
        %v3126 = vrot.slane %v2513, 1
        %v3127 = vsel %vm1003, %v3124, %v3126
        %v3128 = vrot.slane %v2510, 1
        %v3129 = vrot.slane %v2484, 1
        %v3130 = vsel %vm1003, %v3128, %v3129
        %v3131 = vrot.slane %v2514, 1
        %v3132 = vsel %vm1003, %v3129, %v3131
        %v3133 = vrot.slane %v2511, 1
        %v3134 = vrot.slane %v2487, 1
        %v3135 = vsel %vm1003, %v3133, %v3134
        %v3136 = vrot.slane %v2515, 1
        %v3137 = vsel %vm1003, %v3134, %v3136
        %v3146 = vrot.slane %v3130, 4
        %v3147 = vsel %vm394, %v3146, %v3120
        %v3148 = vrot.slane %v3120, 4
        %v3149 = vsel %vm394, %v3130, %v3148
        %v3151 = vunpack.c.l.s4 1983009808
        %v3152 = vunpack.c.0.s8 %v3151
        %v3153 = vperm.slane %v3147, %v3152
        %v3155 = vunpack.c.l.s4 1983009808
        %v3156 = vunpack.c.0.s8 %v3155
        %v3157 = vperm.slane %v3149, %v3156
        %v3158 = vrot.slane %v3135, 4
        %v3159 = vsel %vm394, %v3158, %v3125
        %v3160 = vrot.slane %v3125, 4
        %v3161 = vsel %vm394, %v3135, %v3160
        %v3163 = vunpack.c.l.s4 1983009808
        %v3164 = vunpack.c.0.s8 %v3163
        %v3165 = vperm.slane %v3159, %v3164
        %v3167 = vunpack.c.l.s4 1983009808
        %v3168 = vunpack.c.0.s8 %v3167
        %v3169 = vperm.slane %v3161, %v3168
        %v3170 = vrot.slane %v3165, 4
        %v3171 = vsel %vm394, %v3170, %v3153
        %v3172 = vrot.slane %v3153, 4
        %v3173 = vsel %vm394, %v3165, %v3172
        %v3175 = vunpack.c.l.s4 1934713408
        %v3176 = vunpack.c.0.s8 %v3175
        %v3177 = vperm.slane %v3171, %v3176
        %v3179 = vunpack.c.l.s4 1934713408
        %v3180 = vunpack.c.0.s8 %v3179
        %v3181 = vperm.slane %v3173, %v3180
        %v3182 = vrot.slane %v3169, 4
        %v3183 = vsel %vm394, %v3182, %v3157
        %v3184 = vrot.slane %v3157, 4
        %v3185 = vsel %vm394, %v3169, %v3184
        %v3187 = vunpack.c.l.s4 1934713408
        %v3188 = vunpack.c.0.s8 %v3187
        %v3189 = vperm.slane %v3183, %v3188
        %v3191 = vunpack.c.l.s4 1934713408
        %v3192 = vunpack.c.0.s8 %v3191
        %v3193 = vperm.slane %v3185, %v3192
        %v3194 = vrot.slane %v3177, 4
        %v3195 = vsel %vm394, 0.0, %v3194
        %v3196 = vrot.slane %v3181, 4
        %v3197 = vsel %vm394, 0.0, %v3196
        %v3198 = vrot.slane %v3189, 4
        %v3199 = vsel %vm394, 0.0, %v3198
        %v3200 = vrot.slane %v3193, 4
        %v3201 = vsel %vm394, 0.0, %v3200
        %v3202 = vrot.slane %v3132, 4
        %v3203 = vsel %vm394, %v3202, %v3122
        %v3204 = vrot.slane %v3122, 4
        %v3205 = vsel %vm394, %v3132, %v3204
        %v3207 = vunpack.c.l.s4 1983009808
        %v3208 = vunpack.c.0.s8 %v3207
        %v3209 = vperm.slane %v3203, %v3208
        %v3211 = vunpack.c.l.s4 1983009808
        %v3212 = vunpack.c.0.s8 %v3211
        %v3213 = vperm.slane %v3205, %v3212
        %v3214 = vrot.slane %v3137, 4
        %v3215 = vsel %vm394, %v3214, %v3127
        %v3216 = vrot.slane %v3127, 4
        %v3217 = vsel %vm394, %v3137, %v3216
        %v3219 = vunpack.c.l.s4 1983009808
        %v3220 = vunpack.c.0.s8 %v3219
        %v3221 = vperm.slane %v3215, %v3220
        %v3223 = vunpack.c.l.s4 1983009808
        %v3224 = vunpack.c.0.s8 %v3223
        %v3225 = vperm.slane %v3217, %v3224
        %v3226 = vrot.slane %v3221, 4
        %v3227 = vsel %vm394, %v3226, %v3209
        %v3228 = vrot.slane %v3209, 4
        %v3229 = vsel %vm394, %v3221, %v3228
        %v3231 = vunpack.c.l.s4 1934713408
        %v3232 = vunpack.c.0.s8 %v3231
        %v3233 = vperm.slane %v3227, %v3232
        %v3235 = vunpack.c.l.s4 1934713408
        %v3236 = vunpack.c.0.s8 %v3235
        %v3237 = vperm.slane %v3229, %v3236
        %v3238 = vrot.slane %v3225, 4
        %v3239 = vsel %vm394, %v3238, %v3213
        %v3240 = vrot.slane %v3213, 4
        %v3241 = vsel %vm394, %v3225, %v3240
        %v3243 = vunpack.c.l.s4 1934713408
        %v3244 = vunpack.c.0.s8 %v3243
        %v3245 = vperm.slane %v3239, %v3244
        %v3247 = vunpack.c.l.s4 1934713408
        %v3248 = vunpack.c.0.s8 %v3247
        %v3249 = vperm.slane %v3241, %v3248
        %v3250 = vrot.slane %v3233, 4
        %v3251 = vsel %vm394, 0.0, %v3250
        %v3252 = vrot.slane %v3237, 4
        %v3253 = vsel %vm394, 0.0, %v3252
        %v3254 = vrot.slane %v3245, 4
        %v3255 = vsel %vm394, 0.0, %v3254
        %v3256 = vrot.slane %v3249, 4
        %v3257 = vsel %vm394, 0.0, %v3256
        %3259 = vrot.lane.b32.xlu0 %v3195, 16
        %v3260 = vpop.permute.xlu0 %3259
        %3263 = vrot.lane.b32.xlu0 %v3181, 32
        %v3264 = vpop.permute.xlu0 %3263
        %3267 = vrot.lane.b32.xlu0 %v3197, 48
        %v3268 = vpop.permute.xlu0 %3267
        %3271 = vrot.lane.b32.xlu0 %v3189, 64
        %v3272 = vpop.permute.xlu0 %3271
        %3275 = vrot.lane.b32.xlu0 %v3199, 80
        %v3276 = vpop.permute.xlu0 %3275
        %3279 = vrot.lane.b32.xlu0 %v3193, 96
        %v3280 = vpop.permute.xlu0 %3279
        %3283 = vrot.lane.b32.xlu0 %v3201, 112
        %v3284 = vpop.permute.xlu0 %3283
        %3287 = vrot.lane.b32.xlu0 %v3251, 16
        %v3288 = vpop.permute.xlu0 %3287
        %3291 = vrot.lane.b32.xlu0 %v3237, 32
        %v3292 = vpop.permute.xlu0 %3291
        %3295 = vrot.lane.b32.xlu0 %v3253, 48
        %v3296 = vpop.permute.xlu0 %3295
        %3299 = vrot.lane.b32.xlu0 %v3245, 64
        %v3300 = vpop.permute.xlu0 %3299
        %3303 = vrot.lane.b32.xlu0 %v3255, 80
        %v3304 = vpop.permute.xlu0 %3303
        %3307 = vrot.lane.b32.xlu0 %v3249, 96
        %v3308 = vpop.permute.xlu0 %3307
        %3311 = vrot.lane.b32.xlu0 %v3257, 112
        %v3312 = vpop.permute.xlu0 %3311
        %v3314 = vsel %vm562, %v3177, %v3260
        %v3315 = vsel %vm564, %v3314, %v3264
        %v3316 = vsel %vm566, %v3315, %v3268
        %v3317 = vsel %vm568, %v3316, %v3272
        %v3318 = vsel %vm570, %v3317, %v3276
        %v3319 = vsel %vm572, %v3318, %v3280
        %v3320 = vsel %vm574, %v3319, %v3284
        %v3321 = vsel %vm562, %v3233, %v3288
        %v3322 = vsel %vm564, %v3321, %v3292
        %v3323 = vsel %vm566, %v3322, %v3296
        %v3324 = vsel %vm568, %v3323, %v3300
        %v3325 = vsel %vm570, %v3324, %v3304
        %v3326 = vsel %vm572, %v3325, %v3308
        %v3327 = vsel %vm574, %v3326, %v3312
        %3328 = vrot.lane.b32.xlu0 %v3120, 127
        %v3329 = vpop.permute.xlu0 %3328
        %3330 = vrot.lane.b32.xlu0 %v3122, 127
        %v3331 = vpop.permute.xlu0 %3330
        %3332 = vrot.lane.b32.xlu0 %v3125, 127
        %v3333 = vpop.permute.xlu0 %3332
        %3334 = vrot.lane.b32.xlu0 %v3127, 127
        %v3335 = vpop.permute.xlu0 %3334
        %3336 = vrot.lane.b32.xlu0 %v3130, 127
        %v3337 = vpop.permute.xlu0 %3336
        %3338 = vrot.lane.b32.xlu0 %v3132, 127
        %v3339 = vpop.permute.xlu0 %3338
        %3340 = vrot.lane.b32.xlu0 %v3135, 127
        %v3341 = vpop.permute.xlu0 %3340
        %3342 = vrot.lane.b32.xlu0 %v3137, 127
        %v3343 = vpop.permute.xlu0 %3342
        %v3352 = vrot.slane %v3337, 4
        %v3353 = vsel %vm394, %v3352, %v3329
        %v3354 = vrot.slane %v3329, 4
        %v3355 = vsel %vm394, %v3337, %v3354
        %v3357 = vunpack.c.l.s4 1983009808
        %v3358 = vunpack.c.0.s8 %v3357
        %v3359 = vperm.slane %v3353, %v3358
        %v3361 = vunpack.c.l.s4 1983009808
        %v3362 = vunpack.c.0.s8 %v3361
        %v3363 = vperm.slane %v3355, %v3362
        %v3364 = vrot.slane %v3341, 4
        %v3365 = vsel %vm394, %v3364, %v3333
        %v3366 = vrot.slane %v3333, 4
        %v3367 = vsel %vm394, %v3341, %v3366
        %v3369 = vunpack.c.l.s4 1983009808
        %v3370 = vunpack.c.0.s8 %v3369
        %v3371 = vperm.slane %v3365, %v3370
        %v3373 = vunpack.c.l.s4 1983009808
        %v3374 = vunpack.c.0.s8 %v3373
        %v3375 = vperm.slane %v3367, %v3374
        %v3376 = vrot.slane %v3371, 4
        %v3377 = vsel %vm394, %v3376, %v3359
        %v3378 = vrot.slane %v3359, 4
        %v3379 = vsel %vm394, %v3371, %v3378
        %v3381 = vunpack.c.l.s4 1934713408
        %v3382 = vunpack.c.0.s8 %v3381
        %v3383 = vperm.slane %v3377, %v3382
        %v3385 = vunpack.c.l.s4 1934713408
        %v3386 = vunpack.c.0.s8 %v3385
        %v3387 = vperm.slane %v3379, %v3386
        %v3388 = vrot.slane %v3375, 4
        %v3389 = vsel %vm394, %v3388, %v3363
        %v3390 = vrot.slane %v3363, 4
        %v3391 = vsel %vm394, %v3375, %v3390
        %v3393 = vunpack.c.l.s4 1934713408
        %v3394 = vunpack.c.0.s8 %v3393
        %v3395 = vperm.slane %v3389, %v3394
        %v3397 = vunpack.c.l.s4 1934713408
        %v3398 = vunpack.c.0.s8 %v3397
        %v3399 = vperm.slane %v3391, %v3398
        %v3400 = vrot.slane %v3383, 4
        %v3401 = vsel %vm394, 0.0, %v3400
        %v3402 = vrot.slane %v3387, 4
        %v3403 = vsel %vm394, 0.0, %v3402
        %v3404 = vrot.slane %v3395, 4
        %v3405 = vsel %vm394, 0.0, %v3404
        %v3406 = vrot.slane %v3399, 4
        %v3407 = vsel %vm394, 0.0, %v3406
        %v3408 = vrot.slane %v3339, 4
        %v3409 = vsel %vm394, %v3408, %v3331
        %v3410 = vrot.slane %v3331, 4
        %v3411 = vsel %vm394, %v3339, %v3410
        %v3413 = vunpack.c.l.s4 1983009808
        %v3414 = vunpack.c.0.s8 %v3413
        %v3415 = vperm.slane %v3409, %v3414
        %v3417 = vunpack.c.l.s4 1983009808
        %v3418 = vunpack.c.0.s8 %v3417
        %v3419 = vperm.slane %v3411, %v3418
        %v3420 = vrot.slane %v3343, 4
        %v3421 = vsel %vm394, %v3420, %v3335
        %v3422 = vrot.slane %v3335, 4
        %v3423 = vsel %vm394, %v3343, %v3422
        %v3425 = vunpack.c.l.s4 1983009808
        %v3426 = vunpack.c.0.s8 %v3425
        %v3427 = vperm.slane %v3421, %v3426
        %v3429 = vunpack.c.l.s4 1983009808
        %v3430 = vunpack.c.0.s8 %v3429
        %v3431 = vperm.slane %v3423, %v3430
        %v3432 = vrot.slane %v3427, 4
        %v3433 = vsel %vm394, %v3432, %v3415
        %v3434 = vrot.slane %v3415, 4
        %v3435 = vsel %vm394, %v3427, %v3434
        %v3437 = vunpack.c.l.s4 1934713408
        %v3438 = vunpack.c.0.s8 %v3437
        %v3439 = vperm.slane %v3433, %v3438
        %v3441 = vunpack.c.l.s4 1934713408
        %v3442 = vunpack.c.0.s8 %v3441
        %v3443 = vperm.slane %v3435, %v3442
        %v3444 = vrot.slane %v3431, 4
        %v3445 = vsel %vm394, %v3444, %v3419
        %v3446 = vrot.slane %v3419, 4
        %v3447 = vsel %vm394, %v3431, %v3446
        %v3449 = vunpack.c.l.s4 1934713408
        %v3450 = vunpack.c.0.s8 %v3449
        %v3451 = vperm.slane %v3445, %v3450
        %v3453 = vunpack.c.l.s4 1934713408
        %v3454 = vunpack.c.0.s8 %v3453
        %v3455 = vperm.slane %v3447, %v3454
        %v3456 = vrot.slane %v3439, 4
        %v3457 = vsel %vm394, 0.0, %v3456
        %v3458 = vrot.slane %v3443, 4
        %v3459 = vsel %vm394, 0.0, %v3458
        %v3460 = vrot.slane %v3451, 4
        %v3461 = vsel %vm394, 0.0, %v3460
        %v3462 = vrot.slane %v3455, 4
        %v3463 = vsel %vm394, 0.0, %v3462
        %3465 = vrot.lane.b32.xlu0 %v3401, 16
        %v3466 = vpop.permute.xlu0 %3465
        %3469 = vrot.lane.b32.xlu0 %v3387, 32
        %v3470 = vpop.permute.xlu0 %3469
        %3473 = vrot.lane.b32.xlu0 %v3403, 48
        %v3474 = vpop.permute.xlu0 %3473
        %3477 = vrot.lane.b32.xlu0 %v3395, 64
        %v3478 = vpop.permute.xlu0 %3477
        %3481 = vrot.lane.b32.xlu0 %v3405, 80
        %v3482 = vpop.permute.xlu0 %3481
        %3485 = vrot.lane.b32.xlu0 %v3399, 96
        %v3486 = vpop.permute.xlu0 %3485
        %3489 = vrot.lane.b32.xlu0 %v3407, 112
        %v3490 = vpop.permute.xlu0 %3489
        %3493 = vrot.lane.b32.xlu0 %v3457, 16
        %v3494 = vpop.permute.xlu0 %3493
        %3497 = vrot.lane.b32.xlu0 %v3443, 32
        %v3498 = vpop.permute.xlu0 %3497
        %3501 = vrot.lane.b32.xlu0 %v3459, 48
        %v3502 = vpop.permute.xlu0 %3501
        %3505 = vrot.lane.b32.xlu0 %v3451, 64
        %v3506 = vpop.permute.xlu0 %3505
        %3509 = vrot.lane.b32.xlu0 %v3461, 80
        %v3510 = vpop.permute.xlu0 %3509
        %3513 = vrot.lane.b32.xlu0 %v3455, 96
        %v3514 = vpop.permute.xlu0 %3513
        %3517 = vrot.lane.b32.xlu0 %v3463, 112
        %v3518 = vpop.permute.xlu0 %3517
        %v3520 = vsel %vm562, %v3383, %v3466
        %v3521 = vsel %vm564, %v3520, %v3470
        %v3522 = vsel %vm566, %v3521, %v3474
        %v3523 = vsel %vm568, %v3522, %v3478
        %v3524 = vsel %vm570, %v3523, %v3482
        %v3525 = vsel %vm572, %v3524, %v3486
        %v3526 = vsel %vm574, %v3525, %v3490
        %v3527 = vsel %vm562, %v3439, %v3494
        %v3528 = vsel %vm564, %v3527, %v3498
        %v3529 = vsel %vm566, %v3528, %v3502
        %v3530 = vsel %vm568, %v3529, %v3506
        %v3531 = vsel %vm570, %v3530, %v3510
        %v3532 = vsel %vm572, %v3531, %v3514
        %v3533 = vsel %vm574, %v3532, %v3518
        %3534 = vrot.lane.b32.xlu0 %v3120, 126
        %v3535 = vpop.permute.xlu0 %3534
        %3536 = vrot.lane.b32.xlu0 %v3122, 126
        %v3537 = vpop.permute.xlu0 %3536
        %3538 = vrot.lane.b32.xlu0 %v3125, 126
        %v3539 = vpop.permute.xlu0 %3538
        %3540 = vrot.lane.b32.xlu0 %v3127, 126
        %v3541 = vpop.permute.xlu0 %3540
        %3542 = vrot.lane.b32.xlu0 %v3130, 126
        %v3543 = vpop.permute.xlu0 %3542
        %3544 = vrot.lane.b32.xlu0 %v3132, 126
        %v3545 = vpop.permute.xlu0 %3544
        %3546 = vrot.lane.b32.xlu0 %v3135, 126
        %v3547 = vpop.permute.xlu0 %3546
        %3548 = vrot.lane.b32.xlu0 %v3137, 126
        %v3549 = vpop.permute.xlu0 %3548
        %v3558 = vrot.slane %v3543, 4
        %v3559 = vsel %vm394, %v3558, %v3535
        %v3560 = vrot.slane %v3535, 4
        %v3561 = vsel %vm394, %v3543, %v3560
        %v3563 = vunpack.c.l.s4 1983009808
        %v3564 = vunpack.c.0.s8 %v3563
        %v3565 = vperm.slane %v3559, %v3564
        %v3567 = vunpack.c.l.s4 1983009808
        %v3568 = vunpack.c.0.s8 %v3567
        %v3569 = vperm.slane %v3561, %v3568
        %v3570 = vrot.slane %v3547, 4
        %v3571 = vsel %vm394, %v3570, %v3539
        %v3572 = vrot.slane %v3539, 4
        %v3573 = vsel %vm394, %v3547, %v3572
        %v3575 = vunpack.c.l.s4 1983009808
        %v3576 = vunpack.c.0.s8 %v3575
        %v3577 = vperm.slane %v3571, %v3576
        %v3579 = vunpack.c.l.s4 1983009808
        %v3580 = vunpack.c.0.s8 %v3579
        %v3581 = vperm.slane %v3573, %v3580
        %v3582 = vrot.slane %v3577, 4
        %v3583 = vsel %vm394, %v3582, %v3565
        %v3584 = vrot.slane %v3565, 4
        %v3585 = vsel %vm394, %v3577, %v3584
        %v3587 = vunpack.c.l.s4 1934713408
        %v3588 = vunpack.c.0.s8 %v3587
        %v3589 = vperm.slane %v3583, %v3588
        %v3591 = vunpack.c.l.s4 1934713408
        %v3592 = vunpack.c.0.s8 %v3591
        %v3593 = vperm.slane %v3585, %v3592
        %v3594 = vrot.slane %v3581, 4
        %v3595 = vsel %vm394, %v3594, %v3569
        %v3596 = vrot.slane %v3569, 4
        %v3597 = vsel %vm394, %v3581, %v3596
        %v3599 = vunpack.c.l.s4 1934713408
        %v3600 = vunpack.c.0.s8 %v3599
        %v3601 = vperm.slane %v3595, %v3600
        %v3603 = vunpack.c.l.s4 1934713408
        %v3604 = vunpack.c.0.s8 %v3603
        %v3605 = vperm.slane %v3597, %v3604
        %v3606 = vrot.slane %v3589, 4
        %v3607 = vsel %vm394, 0.0, %v3606
        %v3608 = vrot.slane %v3593, 4
        %v3609 = vsel %vm394, 0.0, %v3608
        %v3610 = vrot.slane %v3601, 4
        %v3611 = vsel %vm394, 0.0, %v3610
        %v3612 = vrot.slane %v3605, 4
        %v3613 = vsel %vm394, 0.0, %v3612
        %v3614 = vrot.slane %v3545, 4
        %v3615 = vsel %vm394, %v3614, %v3537
        %v3616 = vrot.slane %v3537, 4
        %v3617 = vsel %vm394, %v3545, %v3616
        %v3619 = vunpack.c.l.s4 1983009808
        %v3620 = vunpack.c.0.s8 %v3619
        %v3621 = vperm.slane %v3615, %v3620
        %v3623 = vunpack.c.l.s4 1983009808
        %v3624 = vunpack.c.0.s8 %v3623
        %v3625 = vperm.slane %v3617, %v3624
        %v3626 = vrot.slane %v3549, 4
        %v3627 = vsel %vm394, %v3626, %v3541
        %v3628 = vrot.slane %v3541, 4
        %v3629 = vsel %vm394, %v3549, %v3628
        %v3631 = vunpack.c.l.s4 1983009808
        %v3632 = vunpack.c.0.s8 %v3631
        %v3633 = vperm.slane %v3627, %v3632
        %v3635 = vunpack.c.l.s4 1983009808
        %v3636 = vunpack.c.0.s8 %v3635
        %v3637 = vperm.slane %v3629, %v3636
        %v3638 = vrot.slane %v3633, 4
        %v3639 = vsel %vm394, %v3638, %v3621
        %v3640 = vrot.slane %v3621, 4
        %v3641 = vsel %vm394, %v3633, %v3640
        %v3643 = vunpack.c.l.s4 1934713408
        %v3644 = vunpack.c.0.s8 %v3643
        %v3645 = vperm.slane %v3639, %v3644
        %v3647 = vunpack.c.l.s4 1934713408
        %v3648 = vunpack.c.0.s8 %v3647
        %v3649 = vperm.slane %v3641, %v3648
        %v3650 = vrot.slane %v3637, 4
        %v3651 = vsel %vm394, %v3650, %v3625
        %v3652 = vrot.slane %v3625, 4
        %v3653 = vsel %vm394, %v3637, %v3652
        %v3655 = vunpack.c.l.s4 1934713408
        %v3656 = vunpack.c.0.s8 %v3655
        %v3657 = vperm.slane %v3651, %v3656
        %v3659 = vunpack.c.l.s4 1934713408
        %v3660 = vunpack.c.0.s8 %v3659
        %v3661 = vperm.slane %v3653, %v3660
        %v3662 = vrot.slane %v3645, 4
        %v3663 = vsel %vm394, 0.0, %v3662
        %v3664 = vrot.slane %v3649, 4
        %v3665 = vsel %vm394, 0.0, %v3664
        %v3666 = vrot.slane %v3657, 4
        %v3667 = vsel %vm394, 0.0, %v3666
        %v3668 = vrot.slane %v3661, 4
        %v3669 = vsel %vm394, 0.0, %v3668
        %3671 = vrot.lane.b32.xlu0 %v3607, 16
        %v3672 = vpop.permute.xlu0 %3671
        %3675 = vrot.lane.b32.xlu0 %v3593, 32
        %v3676 = vpop.permute.xlu0 %3675
        %3679 = vrot.lane.b32.xlu0 %v3609, 48
        %v3680 = vpop.permute.xlu0 %3679
        %3683 = vrot.lane.b32.xlu0 %v3601, 64
        %v3684 = vpop.permute.xlu0 %3683
        %3687 = vrot.lane.b32.xlu0 %v3611, 80
        %v3688 = vpop.permute.xlu0 %3687
        %3691 = vrot.lane.b32.xlu0 %v3605, 96
        %v3692 = vpop.permute.xlu0 %3691
        %3695 = vrot.lane.b32.xlu0 %v3613, 112
        %v3696 = vpop.permute.xlu0 %3695
        %3699 = vrot.lane.b32.xlu0 %v3663, 16
        %v3700 = vpop.permute.xlu0 %3699
        %3703 = vrot.lane.b32.xlu0 %v3649, 32
        %v3704 = vpop.permute.xlu0 %3703
        %3707 = vrot.lane.b32.xlu0 %v3665, 48
        %v3708 = vpop.permute.xlu0 %3707
        %3711 = vrot.lane.b32.xlu0 %v3657, 64
        %v3712 = vpop.permute.xlu0 %3711
        %3715 = vrot.lane.b32.xlu0 %v3667, 80
        %v3716 = vpop.permute.xlu0 %3715
        %3719 = vrot.lane.b32.xlu0 %v3661, 96
        %v3720 = vpop.permute.xlu0 %3719
        %3723 = vrot.lane.b32.xlu0 %v3669, 112
        %v3724 = vpop.permute.xlu0 %3723
        %v3726 = vsel %vm562, %v3589, %v3672
        %v3727 = vsel %vm564, %v3726, %v3676
        %v3728 = vsel %vm566, %v3727, %v3680
        %v3729 = vsel %vm568, %v3728, %v3684
        %v3730 = vsel %vm570, %v3729, %v3688
        %v3731 = vsel %vm572, %v3730, %v3692
        %v3732 = vsel %vm574, %v3731, %v3696
        %v3733 = vsel %vm562, %v3645, %v3700
        %v3734 = vsel %vm564, %v3733, %v3704
        %v3735 = vsel %vm566, %v3734, %v3708
        %v3736 = vsel %vm568, %v3735, %v3712
        %v3737 = vsel %vm570, %v3736, %v3716
        %v3738 = vsel %vm572, %v3737, %v3720
        %v3739 = vsel %vm574, %v3738, %v3724
        %v3740 = vrot.slane %v2508, 2
        %v3741 = vrot.slane %v2478, 2
        %v3742 = vsel %vm1626, %v3740, %v3741
        %v3743 = vrot.slane %v2512, 2
        %v3744 = vsel %vm1626, %v3741, %v3743
        %v3745 = vrot.slane %v2509, 2
        %v3746 = vrot.slane %v2481, 2
        %v3747 = vsel %vm1626, %v3745, %v3746
        %v3748 = vrot.slane %v2513, 2
        %v3749 = vsel %vm1626, %v3746, %v3748
        %v3750 = vrot.slane %v2510, 2
        %v3751 = vrot.slane %v2484, 2
        %v3752 = vsel %vm1626, %v3750, %v3751
        %v3753 = vrot.slane %v2514, 2
        %v3754 = vsel %vm1626, %v3751, %v3753
        %v3755 = vrot.slane %v2511, 2
        %v3756 = vrot.slane %v2487, 2
        %v3757 = vsel %vm1626, %v3755, %v3756
        %v3758 = vrot.slane %v2515, 2
        %v3759 = vsel %vm1626, %v3756, %v3758
        %v3768 = vrot.slane %v3752, 4
        %v3769 = vsel %vm394, %v3768, %v3742
        %v3770 = vrot.slane %v3742, 4
        %v3771 = vsel %vm394, %v3752, %v3770
        %v3773 = vunpack.c.l.s4 1983009808
        %v3774 = vunpack.c.0.s8 %v3773
        %v3775 = vperm.slane %v3769, %v3774
        %v3777 = vunpack.c.l.s4 1983009808
        %v3778 = vunpack.c.0.s8 %v3777
        %v3779 = vperm.slane %v3771, %v3778
        %v3780 = vrot.slane %v3757, 4
        %v3781 = vsel %vm394, %v3780, %v3747
        %v3782 = vrot.slane %v3747, 4
        %v3783 = vsel %vm394, %v3757, %v3782
        %v3785 = vunpack.c.l.s4 1983009808
        %v3786 = vunpack.c.0.s8 %v3785
        %v3787 = vperm.slane %v3781, %v3786
        %v3789 = vunpack.c.l.s4 1983009808
        %v3790 = vunpack.c.0.s8 %v3789
        %v3791 = vperm.slane %v3783, %v3790
        %v3792 = vrot.slane %v3787, 4
        %v3793 = vsel %vm394, %v3792, %v3775
        %v3794 = vrot.slane %v3775, 4
        %v3795 = vsel %vm394, %v3787, %v3794
        %v3797 = vunpack.c.l.s4 1934713408
        %v3798 = vunpack.c.0.s8 %v3797
        %v3799 = vperm.slane %v3793, %v3798
        %v3801 = vunpack.c.l.s4 1934713408
        %v3802 = vunpack.c.0.s8 %v3801
        %v3803 = vperm.slane %v3795, %v3802
        %v3804 = vrot.slane %v3791, 4
        %v3805 = vsel %vm394, %v3804, %v3779
        %v3806 = vrot.slane %v3779, 4
        %v3807 = vsel %vm394, %v3791, %v3806
        %v3809 = vunpack.c.l.s4 1934713408
        %v3810 = vunpack.c.0.s8 %v3809
        %v3811 = vperm.slane %v3805, %v3810
        %v3813 = vunpack.c.l.s4 1934713408
        %v3814 = vunpack.c.0.s8 %v3813
        %v3815 = vperm.slane %v3807, %v3814
        %v3816 = vrot.slane %v3799, 4
        %v3817 = vsel %vm394, 0.0, %v3816
        %v3818 = vrot.slane %v3803, 4
        %v3819 = vsel %vm394, 0.0, %v3818
        %v3820 = vrot.slane %v3811, 4
        %v3821 = vsel %vm394, 0.0, %v3820
        %v3822 = vrot.slane %v3815, 4
        %v3823 = vsel %vm394, 0.0, %v3822
        %v3824 = vrot.slane %v3754, 4
        %v3825 = vsel %vm394, %v3824, %v3744
        %v3826 = vrot.slane %v3744, 4
        %v3827 = vsel %vm394, %v3754, %v3826
        %v3829 = vunpack.c.l.s4 1983009808
        %v3830 = vunpack.c.0.s8 %v3829
        %v3831 = vperm.slane %v3825, %v3830
        %v3833 = vunpack.c.l.s4 1983009808
        %v3834 = vunpack.c.0.s8 %v3833
        %v3835 = vperm.slane %v3827, %v3834
        %v3836 = vrot.slane %v3759, 4
        %v3837 = vsel %vm394, %v3836, %v3749
        %v3838 = vrot.slane %v3749, 4
        %v3839 = vsel %vm394, %v3759, %v3838
        %v3841 = vunpack.c.l.s4 1983009808
        %v3842 = vunpack.c.0.s8 %v3841
        %v3843 = vperm.slane %v3837, %v3842
        %v3845 = vunpack.c.l.s4 1983009808
        %v3846 = vunpack.c.0.s8 %v3845
        %v3847 = vperm.slane %v3839, %v3846
        %v3848 = vrot.slane %v3843, 4
        %v3849 = vsel %vm394, %v3848, %v3831
        %v3850 = vrot.slane %v3831, 4
        %v3851 = vsel %vm394, %v3843, %v3850
        %v3853 = vunpack.c.l.s4 1934713408
        %v3854 = vunpack.c.0.s8 %v3853
        %v3855 = vperm.slane %v3849, %v3854
        %v3857 = vunpack.c.l.s4 1934713408
        %v3858 = vunpack.c.0.s8 %v3857
        %v3859 = vperm.slane %v3851, %v3858
        %v3860 = vrot.slane %v3847, 4
        %v3861 = vsel %vm394, %v3860, %v3835
        %v3862 = vrot.slane %v3835, 4
        %v3863 = vsel %vm394, %v3847, %v3862
        %v3865 = vunpack.c.l.s4 1934713408
        %v3866 = vunpack.c.0.s8 %v3865
        %v3867 = vperm.slane %v3861, %v3866
        %v3869 = vunpack.c.l.s4 1934713408
        %v3870 = vunpack.c.0.s8 %v3869
        %v3871 = vperm.slane %v3863, %v3870
        %v3872 = vrot.slane %v3855, 4
        %v3873 = vsel %vm394, 0.0, %v3872
        %v3874 = vrot.slane %v3859, 4
        %v3875 = vsel %vm394, 0.0, %v3874
        %v3876 = vrot.slane %v3867, 4
        %v3877 = vsel %vm394, 0.0, %v3876
        %v3878 = vrot.slane %v3871, 4
        %v3879 = vsel %vm394, 0.0, %v3878
        %3881 = vrot.lane.b32.xlu0 %v3817, 16
        %v3882 = vpop.permute.xlu0 %3881
        %3885 = vrot.lane.b32.xlu0 %v3803, 32
        %v3886 = vpop.permute.xlu0 %3885
        %3889 = vrot.lane.b32.xlu0 %v3819, 48
        %v3890 = vpop.permute.xlu0 %3889
        %3893 = vrot.lane.b32.xlu0 %v3811, 64
        %v3894 = vpop.permute.xlu0 %3893
        %3897 = vrot.lane.b32.xlu0 %v3821, 80
        %v3898 = vpop.permute.xlu0 %3897
        %3901 = vrot.lane.b32.xlu0 %v3815, 96
        %v3902 = vpop.permute.xlu0 %3901
        %3905 = vrot.lane.b32.xlu0 %v3823, 112
        %v3906 = vpop.permute.xlu0 %3905
        %3909 = vrot.lane.b32.xlu0 %v3873, 16
        %v3910 = vpop.permute.xlu0 %3909
        %3913 = vrot.lane.b32.xlu0 %v3859, 32
        %v3914 = vpop.permute.xlu0 %3913
        %3917 = vrot.lane.b32.xlu0 %v3875, 48
        %v3918 = vpop.permute.xlu0 %3917
        %3921 = vrot.lane.b32.xlu0 %v3867, 64
        %v3922 = vpop.permute.xlu0 %3921
        %3925 = vrot.lane.b32.xlu0 %v3877, 80
        %v3926 = vpop.permute.xlu0 %3925
        %3929 = vrot.lane.b32.xlu0 %v3871, 96
        %v3930 = vpop.permute.xlu0 %3929
        %3933 = vrot.lane.b32.xlu0 %v3879, 112
        %v3934 = vpop.permute.xlu0 %3933
        %v3936 = vsel %vm562, %v3799, %v3882
        %v3937 = vsel %vm564, %v3936, %v3886
        %v3938 = vsel %vm566, %v3937, %v3890
        %v3939 = vsel %vm568, %v3938, %v3894
        %v3940 = vsel %vm570, %v3939, %v3898
        %v3941 = vsel %vm572, %v3940, %v3902
        %v3942 = vsel %vm574, %v3941, %v3906
        %v3943 = vsel %vm562, %v3855, %v3910
        %v3944 = vsel %vm564, %v3943, %v3914
        %v3945 = vsel %vm566, %v3944, %v3918
        %v3946 = vsel %vm568, %v3945, %v3922
        %v3947 = vsel %vm570, %v3946, %v3926
        %v3948 = vsel %vm572, %v3947, %v3930
        %v3949 = vsel %vm574, %v3948, %v3934
        %3950 = vrot.lane.b32.xlu0 %v3742, 127
        %v3951 = vpop.permute.xlu0 %3950
        %3952 = vrot.lane.b32.xlu0 %v3744, 127
        %v3953 = vpop.permute.xlu0 %3952
        %3954 = vrot.lane.b32.xlu0 %v3747, 127
        %v3955 = vpop.permute.xlu0 %3954
        %3956 = vrot.lane.b32.xlu0 %v3749, 127
        %v3957 = vpop.permute.xlu0 %3956
        %3958 = vrot.lane.b32.xlu0 %v3752, 127
        %v3959 = vpop.permute.xlu0 %3958
        %3960 = vrot.lane.b32.xlu0 %v3754, 127
        %v3961 = vpop.permute.xlu0 %3960
        %3962 = vrot.lane.b32.xlu0 %v3757, 127
        %v3963 = vpop.permute.xlu0 %3962
        %3964 = vrot.lane.b32.xlu0 %v3759, 127
        %v3965 = vpop.permute.xlu0 %3964
        %v3974 = vrot.slane %v3959, 4
        %v3975 = vsel %vm394, %v3974, %v3951
        %v3976 = vrot.slane %v3951, 4
        %v3977 = vsel %vm394, %v3959, %v3976
        %v3979 = vunpack.c.l.s4 1983009808
        %v3980 = vunpack.c.0.s8 %v3979
        %v3981 = vperm.slane %v3975, %v3980
        %v3983 = vunpack.c.l.s4 1983009808
        %v3984 = vunpack.c.0.s8 %v3983
        %v3985 = vperm.slane %v3977, %v3984
        %v3986 = vrot.slane %v3963, 4
        %v3987 = vsel %vm394, %v3986, %v3955
        %v3988 = vrot.slane %v3955, 4
        %v3989 = vsel %vm394, %v3963, %v3988
        %v3991 = vunpack.c.l.s4 1983009808
        %v3992 = vunpack.c.0.s8 %v3991
        %v3993 = vperm.slane %v3987, %v3992
        %v3995 = vunpack.c.l.s4 1983009808
        %v3996 = vunpack.c.0.s8 %v3995
        %v3997 = vperm.slane %v3989, %v3996
        %v3998 = vrot.slane %v3993, 4
        %v3999 = vsel %vm394, %v3998, %v3981
        %v4000 = vrot.slane %v3981, 4
        %v4001 = vsel %vm394, %v3993, %v4000
        %v4003 = vunpack.c.l.s4 1934713408
        %v4004 = vunpack.c.0.s8 %v4003
        %v4005 = vperm.slane %v3999, %v4004
        %v4007 = vunpack.c.l.s4 1934713408
        %v4008 = vunpack.c.0.s8 %v4007
        %v4009 = vperm.slane %v4001, %v4008
        %v4010 = vrot.slane %v3997, 4
        %v4011 = vsel %vm394, %v4010, %v3985
        %v4012 = vrot.slane %v3985, 4
        %v4013 = vsel %vm394, %v3997, %v4012
        %v4015 = vunpack.c.l.s4 1934713408
        %v4016 = vunpack.c.0.s8 %v4015
        %v4017 = vperm.slane %v4011, %v4016
        %v4019 = vunpack.c.l.s4 1934713408
        %v4020 = vunpack.c.0.s8 %v4019
        %v4021 = vperm.slane %v4013, %v4020
        %v4022 = vrot.slane %v4005, 4
        %v4023 = vsel %vm394, 0.0, %v4022
        %v4024 = vrot.slane %v4009, 4
        %v4025 = vsel %vm394, 0.0, %v4024
        %v4026 = vrot.slane %v4017, 4
        %v4027 = vsel %vm394, 0.0, %v4026
        %v4028 = vrot.slane %v4021, 4
        %v4029 = vsel %vm394, 0.0, %v4028
        %v4030 = vrot.slane %v3961, 4
        %v4031 = vsel %vm394, %v4030, %v3953
        %v4032 = vrot.slane %v3953, 4
        %v4033 = vsel %vm394, %v3961, %v4032
        %v4035 = vunpack.c.l.s4 1983009808
        %v4036 = vunpack.c.0.s8 %v4035
        %v4037 = vperm.slane %v4031, %v4036
        %v4039 = vunpack.c.l.s4 1983009808
        %v4040 = vunpack.c.0.s8 %v4039
        %v4041 = vperm.slane %v4033, %v4040
        %v4042 = vrot.slane %v3965, 4
        %v4043 = vsel %vm394, %v4042, %v3957
        %v4044 = vrot.slane %v3957, 4
        %v4045 = vsel %vm394, %v3965, %v4044
        %v4047 = vunpack.c.l.s4 1983009808
        %v4048 = vunpack.c.0.s8 %v4047
        %v4049 = vperm.slane %v4043, %v4048
        %v4051 = vunpack.c.l.s4 1983009808
        %v4052 = vunpack.c.0.s8 %v4051
        %v4053 = vperm.slane %v4045, %v4052
        %v4054 = vrot.slane %v4049, 4
        %v4055 = vsel %vm394, %v4054, %v4037
        %v4056 = vrot.slane %v4037, 4
        %v4057 = vsel %vm394, %v4049, %v4056
        %v4059 = vunpack.c.l.s4 1934713408
        %v4060 = vunpack.c.0.s8 %v4059
        %v4061 = vperm.slane %v4055, %v4060
        %v4063 = vunpack.c.l.s4 1934713408
        %v4064 = vunpack.c.0.s8 %v4063
        %v4065 = vperm.slane %v4057, %v4064
        %v4066 = vrot.slane %v4053, 4
        %v4067 = vsel %vm394, %v4066, %v4041
        %v4068 = vrot.slane %v4041, 4
        %v4069 = vsel %vm394, %v4053, %v4068
        %v4071 = vunpack.c.l.s4 1934713408
        %v4072 = vunpack.c.0.s8 %v4071
        %v4073 = vperm.slane %v4067, %v4072
        %v4075 = vunpack.c.l.s4 1934713408
        %v4076 = vunpack.c.0.s8 %v4075
        %v4077 = vperm.slane %v4069, %v4076
        %v4078 = vrot.slane %v4061, 4
        %v4079 = vsel %vm394, 0.0, %v4078
        %v4080 = vrot.slane %v4065, 4
        %v4081 = vsel %vm394, 0.0, %v4080
        %v4082 = vrot.slane %v4073, 4
        %v4083 = vsel %vm394, 0.0, %v4082
        %v4084 = vrot.slane %v4077, 4
        %v4085 = vsel %vm394, 0.0, %v4084
        %4087 = vrot.lane.b32.xlu0 %v4023, 16
        %v4088 = vpop.permute.xlu0 %4087
        %4091 = vrot.lane.b32.xlu0 %v4009, 32
        %v4092 = vpop.permute.xlu0 %4091
        %4095 = vrot.lane.b32.xlu0 %v4025, 48
        %v4096 = vpop.permute.xlu0 %4095
        %4099 = vrot.lane.b32.xlu0 %v4017, 64
        %v4100 = vpop.permute.xlu0 %4099
        %4103 = vrot.lane.b32.xlu0 %v4027, 80
        %v4104 = vpop.permute.xlu0 %4103
        %4107 = vrot.lane.b32.xlu0 %v4021, 96
        %v4108 = vpop.permute.xlu0 %4107
        %4111 = vrot.lane.b32.xlu0 %v4029, 112
        %v4112 = vpop.permute.xlu0 %4111
        %4115 = vrot.lane.b32.xlu0 %v4079, 16
        %v4116 = vpop.permute.xlu0 %4115
        %4119 = vrot.lane.b32.xlu0 %v4065, 32
        %v4120 = vpop.permute.xlu0 %4119
        %4123 = vrot.lane.b32.xlu0 %v4081, 48
        %v4124 = vpop.permute.xlu0 %4123
        %4127 = vrot.lane.b32.xlu0 %v4073, 64
        %v4128 = vpop.permute.xlu0 %4127
        %4131 = vrot.lane.b32.xlu0 %v4083, 80
        %v4132 = vpop.permute.xlu0 %4131
        %4135 = vrot.lane.b32.xlu0 %v4077, 96
        %v4136 = vpop.permute.xlu0 %4135
        %4139 = vrot.lane.b32.xlu0 %v4085, 112
        %v4140 = vpop.permute.xlu0 %4139
        %v4142 = vsel %vm562, %v4005, %v4088
        %v4143 = vsel %vm564, %v4142, %v4092
        %v4144 = vsel %vm566, %v4143, %v4096
        %v4145 = vsel %vm568, %v4144, %v4100
        %v4146 = vsel %vm570, %v4145, %v4104
        %v4147 = vsel %vm572, %v4146, %v4108
        %v4148 = vsel %vm574, %v4147, %v4112
        %v4149 = vsel %vm562, %v4061, %v4116
        %v4150 = vsel %vm564, %v4149, %v4120
        %v4151 = vsel %vm566, %v4150, %v4124
        %v4152 = vsel %vm568, %v4151, %v4128
        %v4153 = vsel %vm570, %v4152, %v4132
        %v4154 = vsel %vm572, %v4153, %v4136
        %v4155 = vsel %vm574, %v4154, %v4140
        %4156 = vrot.lane.b32.xlu0 %v3742, 126
        %v4157 = vpop.permute.xlu0 %4156
        %4158 = vrot.lane.b32.xlu0 %v3744, 126
        %v4159 = vpop.permute.xlu0 %4158
        %4160 = vrot.lane.b32.xlu0 %v3747, 126
        %v4161 = vpop.permute.xlu0 %4160
        %4162 = vrot.lane.b32.xlu0 %v3749, 126
        %v4163 = vpop.permute.xlu0 %4162
        %4164 = vrot.lane.b32.xlu0 %v3752, 126
        %v4165 = vpop.permute.xlu0 %4164
        %4166 = vrot.lane.b32.xlu0 %v3754, 126
        %v4167 = vpop.permute.xlu0 %4166
        %4168 = vrot.lane.b32.xlu0 %v3757, 126
        %v4169 = vpop.permute.xlu0 %4168
        %4170 = vrot.lane.b32.xlu0 %v3759, 126
        %v4171 = vpop.permute.xlu0 %4170
        %v4180 = vrot.slane %v4165, 4
        %v4181 = vsel %vm394, %v4180, %v4157
        %v4182 = vrot.slane %v4157, 4
        %v4183 = vsel %vm394, %v4165, %v4182
        %v4185 = vunpack.c.l.s4 1983009808
        %v4186 = vunpack.c.0.s8 %v4185
        %v4187 = vperm.slane %v4181, %v4186
        %v4189 = vunpack.c.l.s4 1983009808
        %v4190 = vunpack.c.0.s8 %v4189
        %v4191 = vperm.slane %v4183, %v4190
        %v4192 = vrot.slane %v4169, 4
        %v4193 = vsel %vm394, %v4192, %v4161
        %v4194 = vrot.slane %v4161, 4
        %v4195 = vsel %vm394, %v4169, %v4194
        %v4197 = vunpack.c.l.s4 1983009808
        %v4198 = vunpack.c.0.s8 %v4197
        %v4199 = vperm.slane %v4193, %v4198
        %v4201 = vunpack.c.l.s4 1983009808
        %v4202 = vunpack.c.0.s8 %v4201
        %v4203 = vperm.slane %v4195, %v4202
        %v4204 = vrot.slane %v4199, 4
        %v4205 = vsel %vm394, %v4204, %v4187
        %v4206 = vrot.slane %v4187, 4
        %v4207 = vsel %vm394, %v4199, %v4206
        %v4209 = vunpack.c.l.s4 1934713408
        %v4210 = vunpack.c.0.s8 %v4209
        %v4211 = vperm.slane %v4205, %v4210
        %v4213 = vunpack.c.l.s4 1934713408
        %v4214 = vunpack.c.0.s8 %v4213
        %v4215 = vperm.slane %v4207, %v4214
        %v4216 = vrot.slane %v4203, 4
        %v4217 = vsel %vm394, %v4216, %v4191
        %v4218 = vrot.slane %v4191, 4
        %v4219 = vsel %vm394, %v4203, %v4218
        %v4221 = vunpack.c.l.s4 1934713408
        %v4222 = vunpack.c.0.s8 %v4221
        %v4223 = vperm.slane %v4217, %v4222
        %v4225 = vunpack.c.l.s4 1934713408
        %v4226 = vunpack.c.0.s8 %v4225
        %v4227 = vperm.slane %v4219, %v4226
        %v4228 = vrot.slane %v4211, 4
        %v4229 = vsel %vm394, 0.0, %v4228
        %v4230 = vrot.slane %v4215, 4
        %v4231 = vsel %vm394, 0.0, %v4230
        %v4232 = vrot.slane %v4223, 4
        %v4233 = vsel %vm394, 0.0, %v4232
        %v4234 = vrot.slane %v4227, 4
        %v4235 = vsel %vm394, 0.0, %v4234
        %v4236 = vrot.slane %v4167, 4
        %v4237 = vsel %vm394, %v4236, %v4159
        %v4238 = vrot.slane %v4159, 4
        %v4239 = vsel %vm394, %v4167, %v4238
        %v4241 = vunpack.c.l.s4 1983009808
        %v4242 = vunpack.c.0.s8 %v4241
        %v4243 = vperm.slane %v4237, %v4242
        %v4245 = vunpack.c.l.s4 1983009808
        %v4246 = vunpack.c.0.s8 %v4245
        %v4247 = vperm.slane %v4239, %v4246
        %v4248 = vrot.slane %v4171, 4
        %v4249 = vsel %vm394, %v4248, %v4163
        %v4250 = vrot.slane %v4163, 4
        %v4251 = vsel %vm394, %v4171, %v4250
        %v4253 = vunpack.c.l.s4 1983009808
        %v4254 = vunpack.c.0.s8 %v4253
        %v4255 = vperm.slane %v4249, %v4254
        %v4257 = vunpack.c.l.s4 1983009808
        %v4258 = vunpack.c.0.s8 %v4257
        %v4259 = vperm.slane %v4251, %v4258
        %v4260 = vrot.slane %v4255, 4
        %v4261 = vsel %vm394, %v4260, %v4243
        %v4262 = vrot.slane %v4243, 4
        %v4263 = vsel %vm394, %v4255, %v4262
        %v4265 = vunpack.c.l.s4 1934713408
        %v4266 = vunpack.c.0.s8 %v4265
        %v4267 = vperm.slane %v4261, %v4266
        %v4269 = vunpack.c.l.s4 1934713408
        %v4270 = vunpack.c.0.s8 %v4269
        %v4271 = vperm.slane %v4263, %v4270
        %v4272 = vrot.slane %v4259, 4
        %v4273 = vsel %vm394, %v4272, %v4247
        %v4274 = vrot.slane %v4247, 4
        %v4275 = vsel %vm394, %v4259, %v4274
        %v4277 = vunpack.c.l.s4 1934713408
        %v4278 = vunpack.c.0.s8 %v4277
        %v4279 = vperm.slane %v4273, %v4278
        %v4281 = vunpack.c.l.s4 1934713408
        %v4282 = vunpack.c.0.s8 %v4281
        %v4283 = vperm.slane %v4275, %v4282
        %v4284 = vrot.slane %v4267, 4
        %v4285 = vsel %vm394, 0.0, %v4284
        %v4286 = vrot.slane %v4271, 4
        %v4287 = vsel %vm394, 0.0, %v4286
        %v4288 = vrot.slane %v4279, 4
        %v4289 = vsel %vm394, 0.0, %v4288
        %v4290 = vrot.slane %v4283, 4
        %v4291 = vsel %vm394, 0.0, %v4290
        %4293 = vrot.lane.b32.xlu0 %v4229, 16
        %v4294 = vpop.permute.xlu0 %4293
        %4297 = vrot.lane.b32.xlu0 %v4215, 32
        %v4298 = vpop.permute.xlu0 %4297
        %4301 = vrot.lane.b32.xlu0 %v4231, 48
        %v4302 = vpop.permute.xlu0 %4301
        %4305 = vrot.lane.b32.xlu0 %v4223, 64
        %v4306 = vpop.permute.xlu0 %4305
        %4309 = vrot.lane.b32.xlu0 %v4233, 80
        %v4310 = vpop.permute.xlu0 %4309
        %4313 = vrot.lane.b32.xlu0 %v4227, 96
        %v4314 = vpop.permute.xlu0 %4313
        %4317 = vrot.lane.b32.xlu0 %v4235, 112
        %v4318 = vpop.permute.xlu0 %4317
        %4321 = vrot.lane.b32.xlu0 %v4285, 16
        %v4322 = vpop.permute.xlu0 %4321
        %4325 = vrot.lane.b32.xlu0 %v4271, 32
        %v4326 = vpop.permute.xlu0 %4325
        %4329 = vrot.lane.b32.xlu0 %v4287, 48
        %v4330 = vpop.permute.xlu0 %4329
        %4333 = vrot.lane.b32.xlu0 %v4279, 64
        %v4334 = vpop.permute.xlu0 %4333
        %4337 = vrot.lane.b32.xlu0 %v4289, 80
        %v4338 = vpop.permute.xlu0 %4337
        %4341 = vrot.lane.b32.xlu0 %v4283, 96
        %v4342 = vpop.permute.xlu0 %4341
        %4345 = vrot.lane.b32.xlu0 %v4291, 112
        %v4346 = vpop.permute.xlu0 %4345
        %v4348 = vsel %vm562, %v4211, %v4294
        %v4349 = vsel %vm564, %v4348, %v4298
        %v4350 = vsel %vm566, %v4349, %v4302
        %v4351 = vsel %vm568, %v4350, %v4306
        %v4352 = vsel %vm570, %v4351, %v4310
        %v4353 = vsel %vm572, %v4352, %v4314
        %v4354 = vsel %vm574, %v4353, %v4318
        %v4355 = vsel %vm562, %v4267, %v4322
        %v4356 = vsel %vm564, %v4355, %v4326
        %v4357 = vsel %vm566, %v4356, %v4330
        %v4358 = vsel %vm568, %v4357, %v4334
        %v4359 = vsel %vm570, %v4358, %v4338
        %v4360 = vsel %vm572, %v4359, %v4342
        %v4361 = vsel %vm574, %v4360, %v4346
        %v4364 = vrot.slane %v2900, 4
        %v4365 = vrot.slane %v2907, 4
        %v4370 = vrot.slane %v3320, 4
        %v4371 = vrot.slane %v3327, 4
        %v4376 = vrot.slane %v3732, 4
        %v4377 = vrot.slane %v3739, 4
        %v4382 = vrot.slane %v4148, 4
        %v4383 = vrot.slane %v4155, 4
        %v4386 = vsel %vm2273, %v2690, %v4364
        %v4387 = vsel %vm2273, %v2697, %v4365
        %v4388 = vsel %vm2273, %v3106, %v4370
        %v4389 = vsel %vm2273, %v3113, %v4371
        %v4390 = vsel %vm2273, %v3526, %v4376
        %v4391 = vsel %vm2273, %v3533, %v4377
        %v4392 = vsel %vm2273, %v3942, %v4382
        %v4393 = vsel %vm2273, %v3949, %v4383
        %v4394 = vld [vmem:[%s1] sm:$0xf]
        %v4395 = vpack.c.bf16 %v4388, %v4386
        %v4396 = vpack.c.bf16 %v4389, %v4387
        %v4397 = vpack.c.bf16 %v4392, %v4390
        %v4398 = vpack.c.bf16 %v4393, %v4391
        %v4399 = vpack.c.bf16 %v4354, %v4354
        %v4400 = vpack.c.bf16 %v4361, %v4361
        %v4402 = vsel %vm2294, %v4394, 0
        %v4405 = vsel %vm2298, %v4399, 0
        %v4408 = vsel %vm2298, %v4400, 0
        %4410 = vmatpush.bf16.msra.mxu0 0
        %4411 = vmatpush.bf16.msra.mxu0 0
        %4412 = vmatpush.bf16.msra.mxu0 0
        %4413 = vmatpush.bf16.msra.mxu0 0
        %4414 = vmatpush.bf16.msra.mxu0 0
        %4415 = vmatpush.bf16.msra.mxu0 %v4405
        %4416 = vmatpush.bf16.msra.mxu0 %v4397
        %4417 = vmatpush.bf16.msra.mxu0 %v4395
        %4418 = vmatmul.bf16.gmra.mxu0 %v4402
        %v4419 = vpop.f32.mrf.mxu0
        %v4420 = vadd.f32 %v2292, %v4419
        %v4421 = vpop.f32.mrf.mxu0
        %4422 = vdwg.mxu0
        %4423 = vmatpush.bf16.msra.mxu0 0
        %4424 = vmatpush.bf16.msra.mxu0 0
        %4425 = vmatpush.bf16.msra.mxu0 0
        %4426 = vmatpush.bf16.msra.mxu0 0
        %4427 = vmatpush.bf16.msra.mxu0 0
        %4428 = vmatpush.bf16.msra.mxu0 %v4408
        %4429 = vmatpush.bf16.msra.mxu0 %v4398
        %4430 = vmatpush.bf16.msra.mxu0 %v4396
        %4431 = vmatmul.bf16.gmra.mxu0 %v4402
        %v4432 = vpop.f32.mrf.mxu0
        %v4433 = vadd.f32 %v2292, %v4432
        %v4434 = vpop.f32.mrf.mxu0
        %4435 = vdwg.mxu0
        %s4436 = sadd.s32 %s2331, 1
        %s4437 = smul.u32 %s4436, 2
        %s4438 = smul.addr %s4437, 8
        %s4439 = scalar_lea.vmem [#allocation2], %s4438
        %4440 = vst [vmem:[%s4439] sm:$0xff] %v4420
        %4441 = vst [vmem:[%s4439 + $0x8] sm:$0xff] %v4433
        %v4442 = vadd.f32 %v4420, %v4433
        %4443 = vadd.xlane.f32.xlu0 %v4442
        %v4444 = vpop.xlane.xlu0 %4443
        %v4445 = vadd.f32 %v2340, %v4444
        %v4446 = vmul.f32 %v4420, %v4420
        %v4447 = vmul.f32 %v4433, %v4433
        %v4448 = vadd.f32 %v4446, %v4447
        %4449 = vadd.xlane.f32.xlu0 %v4448
        %v4450 = vpop.xlane.xlu0 %4449
        %v4451 = vadd.f32 %v2346, %v4450
        %v4452 = vld [vmem:[#allocation3] sm:$0xff]
        %v4453 = vsel %vm318, %v4445, %v4451
        %v4454 = vadd.f32 %v4452, %v4453
        %vm4455 = vcmask 15360
        %4456 = vst.msk [vmem:[#allocation3] sm:$0xff] %vm4455, %v4454
        // Predicated region
        $region41: #{cbr2d_forward.1} parent=35 // pred_check
          %p4457 = pneg %p215
        $region42: #{cbr2d_forward.1} parent=35 // pred_check_branch
          %4459 = sbr.rel (%p4457) target = $region44
        $region43: #{cbr2d_forward.1} parent=35 // pred_region
          %v4460 = vld [vmem:[#allocation3] sm:$0xff]
          %v4461 = vrcp.pop 512.0
          %v4462 = vmul.f32 512.0, %v4461
          %v4463 = vsub.f32 1.0, %v4462
          %v4464 = vmul.f32 %v4461, %v4463
          %v4465 = vadd.f32 %v4461, %v4464
          %vm4466 = vweird.f32 %v4461
          %v4467 = vsel %vm4466, %v4461, %v4465
          %v4468 = vmul.f32 %v4460, %v4467
          %v4469 = vmul.f32 %v4468, %v4468
          %4471 = vrot.lane.b32.xlu0 %v4469, 1
          %v4472 = vpop.permute.xlu0 %4471
          %v4474 = vsub.f32 %v4468, %v4472
          %v4475 = vmax.f32 %v4474, 0.0
          %v4476 = vadd.f32 %v4475, 1e-05
          %v4477 = vrsqrt.pop %v4476
          %v4478 = vmul.f32 %v4477, %v4476
          %v4479 = vmul.f32 %v4478, %v4477
          %v4480 = vmul.f32 0.5, %v4479
          %v4481 = vsub.f32 1.5, %v4480
          %v4482 = vmul.f32 %v4477, %v4481
          %vm4483 = vweird.f32 %v4476
          %vm4484 = vweird.f32 %v4477
          %vm4485 = vmor %vm4483, %vm4484
          %v4486 = vsel %vm4485, %v4477, %v4482
          %v4487 = vld [vmem:[%s2] sm:$0xff]
          %4489 = vrot.lane.b32.xlu0 %v4486, 127
          %v4490 = vpop.permute.xlu0 %4489
          %v4492 = vmul.f32 %v4487, %v4490
          %v4493 = vmul.f32 %v4468, %v4492
          %4495 = vrot.lane.b32.xlu0 %v4493, 1
          %v4496 = vpop.permute.xlu0 %4495
          %v4498 = vsub.f32 %v4487, %v4496
          %v4499 = vsel %vm318, %v4492, %v4498
          %4500 = vst.msk [vmem:[#allocation3] sm:$0xff] %vm4455, %v4499
        $region44: #{cbr2d_forward.1} parent=35 // pred_fallthru
          _
      $region36: #{cbr2d_forward.1} parent=31 // pred_fallthru
        _
      %p4501 = scmp.eq.s32.totalorder %s18, 1
      // Predicated region
      $region45: #{cbr2d_forward.1} parent=31 // pred_check
        %p4502 = pneg %p4501
      $region46: #{cbr2d_forward.1} parent=31 // pred_check_branch
        %4504 = sbr.rel (%p4502) target = $region48
      $region47: #{cbr2d_forward.1} parent=31 // pred_region
        %v4505 = vld [vmem:[#allocation3] sm:$0xff]
        %s4506 = smul.u32 %s19, 2
        %s4507 = smul.u32 %s4506, 2
        %s4508 = smul.addr %s4507, 8
        %s4509 = scalar_lea.vmem [#allocation2], %s4508
        %v4510 = vld [vmem:[%s4509] sm:$0xff]
        %v4511 = vld [vmem:[%s4509 + $0x8] sm:$0xff]
        %4513 = vset.pattern.permute.xlu0 0
        %4514 = vperm.xlu0 %4513, %v4505
        %v4515 = vpop.permute.xlu0 %4514
        %v4517 = vmul.f32 %v4510, %v4515
        %v4518 = vmul.f32 %v4511, %v4515
        %4519 = vset.pattern.permute.xlu0 1
        %4520 = vperm.xlu0 %4519, %v4505
        %v4521 = vpop.permute.xlu0 %4520
        %v4523 = vadd.f32 %v4517, %v4521
        %v4524 = vadd.f32 %v4518, %v4521
        %v4525 = vmax.f32 %v4523, 0.0
        %v4526 = vmax.f32 %v4524, 0.0
        %4527 = vst [vmem:[%s207] sm:$0xff] %v4525
        %4528 = vst [vmem:[%s207 + $0x8] sm:$0xff] %v4526
        %s4529 = sadd.s32 %s4506, 1
        %s4530 = smul.u32 %s4529, 2
        %s4531 = smul.addr %s4530, 8
        %s4532 = scalar_lea.vmem [#allocation2], %s4531
        %v4533 = vld [vmem:[%s4532] sm:$0xff]
        %v4534 = vld [vmem:[%s4532 + $0x8] sm:$0xff]
        %v4535 = vmul.f32 %v4533, %v4515
        %v4536 = vmul.f32 %v4534, %v4515
        %v4537 = vadd.f32 %v4535, %v4521
        %v4538 = vadd.f32 %v4536, %v4521
        %v4539 = vmax.f32 %v4537, 0.0
        %v4540 = vmax.f32 %v4538, 0.0
        %s4541 = scalar_lea.vmem %s207, 16
        %4542 = vst [vmem:[%s4541] sm:$0xff] %v4539
        %4543 = vst [vmem:[%s4541 + $0x8] sm:$0xff] %v4540
      $region48: #{cbr2d_forward.1} parent=31 // pred_fallthru
        _
      %s4544 = smul.u32 %s19, %s18
      %s4545 = smul.u32 2, %s4544
      %p4546 = scmp.lt.s32.totalorder %s4545, 1
      %s4547 = scalar_select %p4546, %s4545, 1
      %s4548 = smul.addr %s4547, 2
      %s4549 = smul.addr %s4548, 8
      %s4550 = scalar_lea.vmem %s3, %s4549
      // Predicated region
      $region49: #{cbr2d_forward.1} parent=31 // pred_check
        %p4551 = pneg %p118
      $region50: #{cbr2d_forward.1} parent=31 // pred_check_branch
        %4553 = sbr.rel (%p4551) target = $region52
      $region51: #{cbr2d_forward.1} parent=31 // pred_region
        %s4554 = smul.u32 %s19, %s18
        %s4555 = smul.u32 2, %s4554
      $region52: #{cbr2d_forward.1} parent=31 // pred_fallthru
        _
    $region32: #{cbr2d_forward.1} parent=5 // pred_fallthru
      _
    %p4556 = scmp.le.s32.totalorder 2, %s9
    // Predicated region
    $region53: #{cbr2d_forward.1} parent=5 // pred_check
      %p4557 = pneg %p4556
    $region54: #{cbr2d_forward.1} parent=5 // pred_check_branch
      %4559 = sbr.rel (%p4557) target = $region56
    $region55: #{cbr2d_forward.1} parent=5 // pred_region
      %s4560 = ssub.s32 %s9, 2
      // Predicated region
      $region57: #{cbr2d_forward.1} parent=55 // pred_check
        %p4561 = pneg %p124
      $region58: #{cbr2d_forward.1} parent=55 // pred_check_branch
        %4563 = sbr.rel (%p4561) target = $region60
      $region59: #{cbr2d_forward.1} parent=55 // pred_region
        %s4564 = smul.u32 %s21, %s20
        %s4565 = smul.u32 2, %s4564
        %p4566 = scmp.lt.s32.totalorder %s4565, 1
        %s4567 = scalar_select %p4566, %s4565, 1
        %s4568 = smul.addr %s4567, 2
        %s4569 = smul.addr %s4568, 8
        %s4570 = scalar_lea.vmem %s3, %s4569
      $region60: #{cbr2d_forward.1} parent=55 // pred_fallthru
        _
    $region56: #{cbr2d_forward.1} parent=5 // pred_fallthru
      _
  $region6: #{cbr2d_forward.1} parent=0 // loop_footer
    %s13 = sadd.s32 1, %s9
  $region7: #{cbr2d_forward.1} parent=0 // loop_footer_branch
    %8 = sbr.rel target = $region3
  $region8: #{cbr2d_forward.1} parent=0 // loop_exit
    _

</llo_original>
